<compile_context>
chip_gen: v6e
topology: v6e:2x2x1
jax: 0.10.0
libtpu: 0.0.40
codegen_flags: <defaults>
</compile_context>

<pallas_src>
import numpy as np
import jax
import jax.numpy as jnp
from jax.experimental import pallas as pl
from jax.experimental.pallas import tpu as pltpu

PAD = 0

# "config" values (small, synthetic)
TOKEN_SIZE = 32        # token_size (== LSTM hidden size per direction)
HIDDEN_SIZE = 64       # hidden_size (decoder init state size)
NUM_LAYERS = 2
NUM_DIRECTIONS = 2     # bidirectional=True


# ---------------------------------------------------------------------------
# Fused encoder kernel
# ---------------------------------------------------------------------------

def _encoder_kernel(batch_s_ref, batch_e_ref, batch_n_ref, index_n_ref, bag_ref,
                    emb_sub_ref, emb_node_ref,
                    wx0_ref, wh0_ref, wx1_ref, wh1_ref, b_ref,
                    out_w_ref, out_b_ref,
                    o_enc_ref, o_hid_ref,
                    x1_buf):
    """Fused: embedding gathers + terminal sums + 2-layer bi-LSTM + concat +
    Linear + unsort + per-bag means.

    batch_s_ref : (BK, Ls)      i32  start-terminal subtoken ids
    batch_e_ref : (BK, Ls)      i32  end-terminal subtoken ids
    batch_n_ref : (T*BK, 1)     i32  node ids, time-major flattened
    index_n_ref : (1, BK)       i32  sort permutation (we invert it in-kernel)
    bag_ref     : (B, BK)       f32  static per-bag averaging matrix
    emb_sub_ref : (n_sub, D)    f32  subtoken embedding table (row PAD = 0)
    emb_node_ref: (n_node, D)   f32  node embedding table (row PAD = 0)
    wx0_ref     : (D,  2*4H)    bf16 layer-0 [fwd|bwd] input weights (pre-scaled)
    wh0_ref     : (2, H, 4H)    bf16 layer-0 recurrent weights per dir (pre-scaled)
    wx1_ref     : (2H, 2*4H)    bf16 layer-1 [fwd|bwd] input weights (pre-scaled)
    wh1_ref     : (2, H, 4H)    bf16 layer-1 recurrent weights per dir (pre-scaled)
    b_ref       : (4, 4H)       f32  biases [l0f,l0b,l1f,l1b] (pre-scaled)
    out_w_ref   : (4D, hidden)  bf16 final Linear weight (pre-transposed)
    out_b_ref   : (1, hidden)   f32  final Linear bias
    o_enc_ref   : (BK, hidden)  f32  unsorted encode_SNE (per-path)
    o_hid_ref   : (B, hidden)   f32  per-example bag means (decoder init)
    x1_buf      : (T*BK, 2H)    f32  scratch: layer-0 outputs (fwd | bwd)
    """
    BK, Ls = batch_s_ref.shape
    TBK = batch_n_ref.shape[0]
    n_sub, D = emb_sub_ref.shape
    n_node = emb_node_ref.shape[0]
    H = D
    G = 4 * H
    T = TBK // BK
    f32, bf16 = jnp.float32, jnp.bfloat16

    # --- gate activation constants, built ONCE (no per-step broadcasts) -----
    # sigmoid(z) = 0.5*tanh(z/2)+0.5 ; the /2 is folded into W & b at init,
    # so here:  act = tanh(gates) * act_mul + act_add   (one EUP pass).
    lane = jax.lax.broadcasted_iota(jnp.int32, (BK, G), 1)
    is_tanh = (lane >= 2 * H) & (lane < 3 * H)          # g gate lanes
    act_mul = jnp.where(is_tanh, 1.0, 0.5).astype(f32)  # (BK, G) constant vregs
    act_add = jnp.where(is_tanh, 0.0, 0.5).astype(f32)

    # --- layer-0 input projection for ALL steps & both dirs (one-hot gather
    #     of node embeddings fused with the batched X @ W_x matmul) ----------
    node_iota = jax.lax.broadcasted_iota(jnp.int32, (TBK, n_node), 1)
    onehot_n = (batch_n_ref[...] == node_iota).astype(f32)                  # (T*BK, n_node)
    emb_n = jnp.dot(onehot_n, emb_node_ref[...], preferred_element_type=f32)  # (T*BK, D)
    gx0 = jnp.dot(emb_n.astype(bf16), wx0_ref[...], preferred_element_type=f32)  # (T*BK, 2G)
    gx0_f = gx0[:, :G] + b_ref[0:1, :]
    gx0_b = gx0[:, G:] + b_ref[1:2, :]

    def cell(gx, h, c, wh):
        # only the recurrent matmul (K=H) stays on the serial chain
        gates = gx + jnp.dot(h.astype(bf16), wh, preferred_element_type=f32)  # (BK, G)
        act = jnp.tanh(gates) * act_mul + act_add
        i_g = act[:, 0 * H:1 * H]
        f_g = act[:, 1 * H:2 * H]
        g_g = act[:, 2 * H:3 * H]
        o_g = act[:, 3 * H:4 * H]
        c_new = f_g * c + i_g * g_g
        h_new = o_g * jnp.tanh(c_new)
        return h_new, c_new

    def run_dir(gx_all, wh, reverse, store_col):
        h = jnp.zeros((BK, H), f32)
        c = jnp.zeros((BK, H), f32)
        ts = range(T - 1, -1, -1) if reverse else range(T)
        for t in ts:                              # fully unrolled (T small & static)
            h, c = cell(gx_all[t * BK:(t + 1) * BK, :], h, c, wh)
            if store_col is not None:             # stash layer-0 outputs (off critical path)
                x1_buf[t * BK:(t + 1) * BK, store_col:store_col + H] = h
        return h

    # --- layer 0 (independent fwd/bwd chains; scheduler may interleave) -----
    run_dir(gx0_f, wh0_ref[0], False, 0)
    run_dir(gx0_b, wh0_ref[1], True, H)

    # --- layer 1 (rnn_dropout = identity in eval) ---------------------------
    gx1 = jnp.dot(x1_buf[...].astype(bf16), wx1_ref[...], preferred_element_type=f32)  # (T*BK, 2G)
    gx1_f = gx1[:, :G] + b_ref[2:3, :]
    gx1_b = gx1[:, G:] + b_ref[3:4, :]
    h1f = run_dir(gx1_f, wh1_ref[0], False, None)
    h1b = run_dir(gx1_b, wh1_ref[1], True, None)

    # --- terminal subtoken sums via one-hot counts (padding row of table = 0)
    sub_iota = jax.lax.broadcasted_iota(jnp.int32, (BK, n_sub), 1)
    cnt_s = jnp.zeros((BK, n_sub), jnp.int32)
    cnt_e = jnp.zeros((BK, n_sub), jnp.int32)
    for l in range(Ls):
        cnt_s = cnt_s + (batch_s_ref[:, l:l + 1] == sub_iota).astype(jnp.int32)
        cnt_e = cnt_e + (batch_e_ref[:, l:l + 1] == sub_iota).astype(jnp.int32)
    encode_S = jnp.dot(cnt_s.astype(f32), emb_sub_ref[...], preferred_element_type=f32)
    encode_E = jnp.dot(cnt_e.astype(f32), emb_sub_ref[...], preferred_element_type=f32)

    # --- concat (lane-dense 4D = 128 lanes) + output Linear ------------------
    enc = jnp.concatenate([h1f, h1b, encode_S, encode_E], axis=1)           # (BK, 4D)
    enc = jnp.dot(enc.astype(bf16), out_w_ref[...],
                  preferred_element_type=f32) + out_b_ref[...]              # (BK, hidden)

    # --- unsort: out[index_N[j]] = enc[j]  via permutation one-hot matmul ----
    row_iota = jax.lax.broadcasted_iota(jnp.int32, (BK, BK), 0)
    perm = (index_n_ref[...] == row_iota).astype(f32)                       # (BK, BK)
    enc_unsorted = jnp.dot(perm, enc, preferred_element_type=f32)
    o_enc_ref[...] = enc_unsorted

    # --- per-bag means (static averaging matrix) ------------------------------
    o_hid_ref[...] = jnp.dot(bag_ref[...], enc_unsorted, preferred_element_type=f32)


def encoder_core(params, batch_S, batch_E, batch_N_flat, index_N_2d, bag):
    BK, Ls = batch_S.shape
    TBK = batch_N_flat.shape[0]
    T = TBK // BK
    n_sub, D = params['emb_subtoken'].shape
    n_node = params['emb_node'].shape[0]
    H, G = D, 4 * D
    hidden = params['out_w_t'].shape[1]
    B = bag.shape[0]

    args = (batch_S, batch_E, batch_N_flat, index_N_2d, bag,
            params['emb_subtoken'], params['emb_node'],
            params['wx0'], params['wh0'], params['wx1'], params['wh1'],
            params['bias'], params['out_w_t'], params['out_b'])

    # Rough cost hint for XLA's scheduler (kernel is latency-bound anyway).
    steps = 2 * 2 * T
    flops = (2 * TBK * n_node * D              # node one-hot gather
             + 2 * TBK * D * 2 * G             # layer-0 x projection
             + 2 * TBK * (2 * D) * 2 * G       # layer-1 x projection
             + steps * 2 * BK * H * G          # recurrent matmuls
             + 2 * 2 * BK * n_sub * D          # subtoken sums
             + 2 * BK * 4 * D * hidden         # output Linear
             + 2 * BK * BK * hidden            # unsort
             + 2 * B * BK * hidden)            # bag means
    transcendentals = steps * (BK * G + BK * H)
    bytes_accessed = (sum(int(np.prod(a.shape)) * a.dtype.itemsize for a in args)
                      + (BK + B) * hidden * 4)

    vmem = pltpu.MemorySpace.VMEM
    return pl.pallas_call(
        _encoder_kernel,
        out_shape=(jax.ShapeDtypeStruct((BK, hidden), jnp.float32),
                   jax.ShapeDtypeStruct((B, hidden), jnp.float32)),
        in_specs=[pl.BlockSpec(memory_space=vmem)] * len(args),
        out_specs=(pl.BlockSpec(memory_space=vmem),
                   pl.BlockSpec(memory_space=vmem)),
        scratch_shapes=[pltpu.VMEM((TBK, 2 * D), jnp.float32)],
        cost_estimate=pl.CostEstimate(flops=flops,
                                      transcendentals=transcendentals,
                                      bytes_accessed=bytes_accessed),
    )(*args)


# ---------------------------------------------------------------------------
# Parameters (deterministic, synthetic)
# ---------------------------------------------------------------------------

def init_params(key, n_subtoken, n_node, token_size, hidden_size,
                num_layers, num_directions):
    keys = iter(jax.random.split(key, 64))
    p = {}
    emb_s = jax.random.normal(next(keys), (n_subtoken, token_size), jnp.float32) * 0.1
    p['emb_subtoken'] = emb_s.at[PAD].set(0.0)           # padding_idx=PAD
    emb_n = jax.random.normal(next(keys), (n_node, token_size), jnp.float32) * 0.1
    p['emb_node'] = emb_n.at[PAD].set(0.0)

    H = token_size
    G = 4 * H
    # sigmoid(z) = 0.5*tanh(z/2)+0.5 -> fold the /2 of the sigmoid (i/f/o) gate
    # columns into the weights & biases; the g (tanh) columns stay unscaled.
    scale = jnp.full((G,), 0.5, jnp.float32).at[2 * H:3 * H].set(1.0)

    wx_cats, wh_stacks, biases = [], [], []
    for layer in range(num_layers):
        in_dim = token_size if layer == 0 else token_size * num_directions
        wx_dirs, wh_dirs = [], []
        for _ in range(num_directions):
            w_ih = jax.random.normal(next(keys), (G, in_dim), jnp.float32) * 0.1
            w_hh = jax.random.normal(next(keys), (G, H), jnp.float32) * 0.1
            b_ih = jax.random.normal(next(keys), (G,), jnp.float32) * 0.1
            b_hh = jax.random.normal(next(keys), (G,), jnp.float32) * 0.1
            wx_dirs.append(w_ih.T * scale[None, :])       # (in_dim, G)
            wh_dirs.append(w_hh.T * scale[None, :])       # (H, G)
            biases.append((b_ih + b_hh) * scale)          # (G,)
        wx_cats.append(jnp.concatenate(wx_dirs, axis=1).astype(jnp.bfloat16))  # (in_dim, 2G)
        wh_stacks.append(jnp.stack(wh_dirs).astype(jnp.bfloat16))              # (2, H, G)
    p['wx0'], p['wx1'] = wx_cats
    p['wh0'], p['wh1'] = wh_stacks
    p['bias'] = jnp.stack(biases)                         # (4, G) f32, [l0f,l0b,l1f,l1b]

    out_w = jax.random.normal(next(keys), (hidden_size, 4 * token_size), jnp.float32) * 0.1
    out_b = jax.random.normal(next(keys), (hidden_size,), jnp.float32) * 0.05
    p['out_w_t'] = out_w.T.astype(jnp.bfloat16)           # (4D, hidden)
    p['out_b'] = out_b.reshape(1, hidden_size)
    return p


# ---------------------------------------------------------------------------
# Encoder forward
# ---------------------------------------------------------------------------

def encoder_forward(params, batch_S, batch_N, batch_E, lengths_k, index_N):
    """
    batch_S : (BK, Ls) int32   start-terminal subtokens per AST path
    batch_N : (T, BK)  int32   nonterminal node symbols per AST path (time-major)
    batch_E : (BK, Ls) int32   end-terminal subtokens per AST path
    lengths_k : static python list, number of paths per example
    index_N : (BK,) permutation used for length sorting (inverted in-kernel)
    """
    T, BK = batch_N.shape
    batch_N_flat = batch_N.reshape(T * BK, 1)             # time-major flatten (layout no-op)
    index_N_2d = index_N.reshape(1, BK)

    # static per-bag averaging matrix (lengths_k is a Python list)
    B = len(lengths_k)
    bag = np.zeros((B, BK), np.float32)
    off = 0
    for e, lk in enumerate(lengths_k):
        bag[e, off:off + lk] = 1.0 / lk
        off += lk
    bag = jnp.asarray(bag)

    # TODO(synk): pack_padded_sequence with per-path lengths_N is not modeled;
    #             all node paths are treated as full length T.
    # Dropout layers are identity (eval mode).
    enc_unsorted, hidden0 = encoder_core(params, batch_S, batch_E,
                                         batch_N_flat, index_N_2d, bag)

    splits = np.cumsum(np.asarray(lengths_k))[:-1].tolist()
    output_bag = jnp.split(enc_unsorted, splits, axis=0)
    hidden_0 = hidden0[None]                               # (1, B, hidden)
    return output_bag, hidden_0


# ---------------------------------------------------------------------------
# Main
# ---------------------------------------------------------------------------

if __name__ == "__main__":
    key = jax.random.PRNGKey(0)
    kp, k1, k2, k3 = jax.random.split(key, 4)

    B = 2
    lengths_k = [3, 5]          # paths per example
    BK = sum(lengths_k)         # 8
    Ls = 8                      # subtoken path length
    T = 8                       # node path length (seq_len)
    n_subtoken, n_node = 20, 16

    params = init_params(kp, n_subtoken, n_node, TOKEN_SIZE, HIDDEN_SIZE,
                         NUM_LAYERS, NUM_DIRECTIONS)

    batch_S = jax.random.randint(k1, (BK, Ls), 0, n_subtoken, dtype=jnp.int32)
    batch_E = jax.random.randint(k2, (BK, Ls), 0, n_subtoken, dtype=jnp.int32)
    batch_N = jax.random.randint(k3, (T, BK), 1, n_node, dtype=jnp.int32)
    index_N = jnp.array(np.random.RandomState(0).permutation(BK), dtype=jnp.int32)

    output_bag, hidden_0 = encoder_forward(params, batch_S, batch_N, batch_E,
                                           lengths_k, index_N)
    jax.block_until_ready(hidden_0)
    for ob in output_bag:
        jax.block_until_ready(ob)

    assert hidden_0.shape == (1, B, HIDDEN_SIZE)
    assert tuple(ob.shape for ob in output_bag) == ((3, HIDDEN_SIZE), (5, HIDDEN_SIZE))
    print("KERNEL_OK")
</pallas_src>

<mosaic_0001>
module attributes {stable_mosaic.version = 11 : i64} {
  func.func @_encoder_kernel(%arg0: memref<8x8xi32, #tpu.memory_space<vmem>>, %arg1: memref<8x8xi32, #tpu.memory_space<vmem>>, %arg2: memref<64x1xi32, #tpu.memory_space<vmem>>, %arg3: memref<1x8xi32, #tpu.memory_space<vmem>>, %arg4: memref<2x8xf32, #tpu.memory_space<vmem>>, %arg5: memref<20x32xf32, #tpu.memory_space<vmem>>, %arg6: memref<16x32xf32, #tpu.memory_space<vmem>>, %arg7: memref<32x256xbf16, #tpu.memory_space<vmem>>, %arg8: memref<2x32x128xbf16, #tpu.memory_space<vmem>>, %arg9: memref<64x256xbf16, #tpu.memory_space<vmem>>, %arg10: memref<2x32x128xbf16, #tpu.memory_space<vmem>>, %arg11: memref<4x128xf32, #tpu.memory_space<vmem>>, %arg12: memref<128x64xbf16, #tpu.memory_space<vmem>>, %arg13: memref<1x64xf32, #tpu.memory_space<vmem>>, %arg14: memref<8x64xf32, #tpu.memory_space<vmem>>, %arg15: memref<2x64xf32, #tpu.memory_space<vmem>>, %arg16: memref<64x64xf32, #tpu.memory_space<vmem>>) attributes {dimension_semantics = [], scalar_prefetch = 0 : i64, scratch_operands = 1 : i64, tpu.core_type = #tpu.core_type<tc>} {
    %0 = tpu.iota {dimensions = array<i32: 1>} : vector<8x128xi32>
    %c64_i32 = arith.constant 64 : i32
    %1 = vector.broadcast %c64_i32 : i32 to vector<8x128xi32>
    %2 = arith.cmpi sge, %0, %1 : vector<8x128xi32>
    %c96_i32 = arith.constant 96 : i32
    %3 = vector.broadcast %c96_i32 : i32 to vector<8x128xi32>
    %4 = arith.cmpi slt, %0, %3 : vector<8x128xi32>
    %5 = arith.andi %2, %4 : vector<8x128xi1>
    %cst = arith.constant 1.000000e+00 : f32
    %cst_0 = arith.constant 5.000000e-01 : f32
    %6 = vector.broadcast %cst : f32 to vector<8x128xf32>
    %7 = vector.broadcast %cst_0 : f32 to vector<8x128xf32>
    %8 = arith.select %5, %6, %7 : vector<8x128xi1>, vector<8x128xf32>
    %cst_1 = arith.constant 0.000000e+00 : f32
    %cst_2 = arith.constant 5.000000e-01 : f32
    %9 = vector.broadcast %cst_1 : f32 to vector<8x128xf32>
    %10 = vector.broadcast %cst_2 : f32 to vector<8x128xf32>
    %11 = arith.select %5, %9, %10 : vector<8x128xi1>, vector<8x128xf32>
    %12 = tpu.iota {dimensions = array<i32: 1>} : vector<64x16xi32>
    %c0 = arith.constant 0 : index
    %c0_3 = arith.constant 0 : index
    %13 = vector.load %arg2[%c0, %c0_3] : memref<64x1xi32, #tpu.memory_space<vmem>>, vector<64x1xi32>
    %14 = vector.broadcast %13 : vector<64x1xi32> to vector<64x16xi32>
    %15 = arith.cmpi eq, %14, %12 : vector<64x16xi32>
    %16 = arith.extui %15 : vector<64x16xi1> to vector<64x16xi32>
    %17 = arith.sitofp %16 : vector<64x16xi32> to vector<64x16xf32>
    %c0_4 = arith.constant 0 : index
    %c0_5 = arith.constant 0 : index
    %18 = vector.load %arg6[%c0_4, %c0_5] : memref<16x32xf32, #tpu.memory_space<vmem>>, vector<16x32xf32>
    %cst_6 = arith.constant dense<0.000000e+00> : vector<64x32xf32>
    %19 = tpu.matmul %17, %18, %cst_6 {dimension_numbers = #tpu.dot_dimension_numbers<[1], [0], [0], [1], [0, 0, 1, 1], [], []>} : vector<64x16xf32>, vector<16x32xf32>, vector<64x32xf32> -> vector<64x32xf32>
    %20 = arith.truncf %19 : vector<64x32xf32> to vector<64x32xbf16>
    %c0_7 = arith.constant 0 : index
    %c0_8 = arith.constant 0 : index
    %21 = vector.load %arg7[%c0_7, %c0_8] : memref<32x256xbf16, #tpu.memory_space<vmem>>, vector<32x256xbf16>
    %cst_9 = arith.constant dense<0.000000e+00> : vector<64x256xf32>
    %22 = tpu.matmul %20, %21, %cst_9 {dimension_numbers = #tpu.dot_dimension_numbers<[1], [0], [0], [1], [0, 0, 1, 1], [], []>} : vector<64x32xbf16>, vector<32x256xbf16>, vector<64x256xf32> -> vector<64x256xf32>
    %23 = vector.extract_strided_slice %22 {offsets = [0, 0], sizes = [64, 128], strides = [1, 1]} : vector<64x256xf32> to vector<64x128xf32>
    %c0_10 = arith.constant 0 : index
    %c0_11 = arith.constant 0 : index
    %24 = vector.load %arg11[%c0_10, %c0_11] : memref<4x128xf32, #tpu.memory_space<vmem>>, vector<1x128xf32>
    %25 = vector.broadcast %24 : vector<1x128xf32> to vector<64x128xf32>
    %26 = arith.addf %23, %25 : vector<64x128xf32>
    %27 = vector.extract_strided_slice %22 {offsets = [0, 128], sizes = [64, 128], strides = [1, 1]} : vector<64x256xf32> to vector<64x128xf32>
    %c1 = arith.constant 1 : index
    %c0_12 = arith.constant 0 : index
    %28 = vector.load %arg11[%c1, %c0_12] : memref<4x128xf32, #tpu.memory_space<vmem>>, vector<1x128xf32>
    %29 = vector.broadcast %28 : vector<1x128xf32> to vector<64x128xf32>
    %30 = arith.addf %27, %29 : vector<64x128xf32>
    %c0_13 = arith.constant 0 : index
    %c0_14 = arith.constant 0 : index
    %c0_15 = arith.constant 0 : index
    %31 = vector.load %arg8[%c0_13, %c0_14, %c0_15] : memref<2x32x128xbf16, #tpu.memory_space<vmem>>, vector<1x32x128xbf16>
    %32 = vector.shape_cast %31 : vector<1x32x128xbf16> to vector<32x128xbf16>
    %cst_16 = arith.constant 0.000000e+00 : f32
    %33 = vector.broadcast %cst_16 : f32 to vector<8x32xf32>
    %cst_17 = arith.constant 0.000000e+00 : f32
    %34 = vector.broadcast %cst_17 : f32 to vector<8x32xf32>
    %35 = vector.extract_strided_slice %26 {offsets = [0, 0], sizes = [8, 128], strides = [1, 1]} : vector<64x128xf32> to vector<8x128xf32>
    %36 = arith.truncf %33 : vector<8x32xf32> to vector<8x32xbf16>
    %cst_18 = arith.constant dense<0.000000e+00> : vector<8x128xf32>
    %37 = tpu.matmul %36, %32, %cst_18 {dimension_numbers = #tpu.dot_dimension_numbers<[1], [0], [0], [1], [0, 0, 1, 1], [], []>} : vector<8x32xbf16>, vector<32x128xbf16>, vector<8x128xf32> -> vector<8x128xf32>
    %38 = arith.addf %35, %37 : vector<8x128xf32>
    %39 = math.tanh %38 : vector<8x128xf32>
    %40 = arith.mulf %39, %8 : vector<8x128xf32>
    %41 = arith.addf %40, %11 : vector<8x128xf32>
    %42 = vector.extract_strided_slice %41 {offsets = [0, 0], sizes = [8, 32], strides = [1, 1]} : vector<8x128xf32> to vector<8x32xf32>
    %43 = vector.extract_strided_slice %41 {offsets = [0, 32], sizes = [8, 32], strides = [1, 1]} : vector<8x128xf32> to vector<8x32xf32>
    %44 = vector.extract_strided_slice %41 {offsets = [0, 64], sizes = [8, 32], strides = [1, 1]} : vector<8x128xf32> to vector<8x32xf32>
    %45 = vector.extract_strided_slice %41 {offsets = [0, 96], sizes = [8, 32], strides = [1, 1]} : vector<8x128xf32> to vector<8x32xf32>
    %46 = arith.mulf %43, %34 : vector<8x32xf32>
    %47 = arith.mulf %42, %44 : vector<8x32xf32>
    %48 = arith.addf %46, %47 : vector<8x32xf32>
    %49 = math.tanh %48 : vector<8x32xf32>
    %50 = arith.mulf %45, %49 : vector<8x32xf32>
    %c0_19 = arith.constant 0 : index
    %c0_20 = arith.constant 0 : index
    %51 = vector.load %arg16[%c0_19, %c0_20] : memref<64x64xf32, #tpu.memory_space<vmem>>, vector<8x32xf32>
    tpu.vector_store %arg16[%c0_19, %c0_20], %50 {strides = array<i32>} : memref<64x64xf32, #tpu.memory_space<vmem>>, vector<8x32xf32>,
    %52 = vector.extract_strided_slice %26 {offsets = [8, 0], sizes = [8, 128], strides = [1, 1]} : vector<64x128xf32> to vector<8x128xf32>
    %53 = arith.truncf %50 : vector<8x32xf32> to vector<8x32xbf16>
    %cst_21 = arith.constant dense<0.000000e+00> : vector<8x128xf32>
    %54 = tpu.matmul %53, %32, %cst_21 {dimension_numbers = #tpu.dot_dimension_numbers<[1], [0], [0], [1], [0, 0, 1, 1], [], []>} : vector<8x32xbf16>, vector<32x128xbf16>, vector<8x128xf32> -> vector<8x128xf32>
    %55 = arith.addf %52, %54 : vector<8x128xf32>
    %56 = math.tanh %55 : vector<8x128xf32>
    %57 = arith.mulf %56, %8 : vector<8x128xf32>
    %58 = arith.addf %57, %11 : vector<8x128xf32>
    %59 = vector.extract_strided_slice %58 {offsets = [0, 0], sizes = [8, 32], strides = [1, 1]} : vector<8x128xf32> to vector<8x32xf32>
    %60 = vector.extract_strided_slice %58 {offsets = [0, 32], sizes = [8, 32], strides = [1, 1]} : vector<8x128xf32> to vector<8x32xf32>
    %61 = vector.extract_strided_slice %58 {offsets = [0, 64], sizes = [8, 32], strides = [1, 1]} : vector<8x128xf32> to vector<8x32xf32>
    %62 = vector.extract_strided_slice %58 {offsets = [0, 96], sizes = [8, 32], strides = [1, 1]} : vector<8x128xf32> to vector<8x32xf32>
    %63 = arith.mulf %60, %48 : vector<8x32xf32>
    %64 = arith.mulf %59, %61 : vector<8x32xf32>
    %65 = arith.addf %63, %64 : vector<8x32xf32>
    %66 = math.tanh %65 : vector<8x32xf32>
    %67 = arith.mulf %62, %66 : vector<8x32xf32>
    %c8 = arith.constant 8 : index
    %c0_22 = arith.constant 0 : index
    %68 = vector.load %arg16[%c8, %c0_22] : memref<64x64xf32, #tpu.memory_space<vmem>>, vector<8x32xf32>
    tpu.vector_store %arg16[%c8, %c0_22], %67 {strides = array<i32>} : memref<64x64xf32, #tpu.memory_space<vmem>>, vector<8x32xf32>,
    %69 = vector.extract_strided_slice %26 {offsets = [16, 0], sizes = [8, 128], strides = [1, 1]} : vector<64x128xf32> to vector<8x128xf32>
    %70 = arith.truncf %67 : vector<8x32xf32> to vector<8x32xbf16>
    %cst_23 = arith.constant dense<0.000000e+00> : vector<8x128xf32>
    %71 = tpu.matmul %70, %32, %cst_23 {dimension_numbers = #tpu.dot_dimension_numbers<[1], [0], [0], [1], [0, 0, 1, 1], [], []>} : vector<8x32xbf16>, vector<32x128xbf16>, vector<8x128xf32> -> vector<8x128xf32>
    %72 = arith.addf %69, %71 : vector<8x128xf32>
    %73 = math.tanh %72 : vector<8x128xf32>
    %74 = arith.mulf %73, %8 : vector<8x128xf32>
    %75 = arith.addf %74, %11 : vector<8x128xf32>
    %76 = vector.extract_strided_slice %75 {offsets = [0, 0], sizes = [8, 32], strides = [1, 1]} : vector<8x128xf32> to vector<8x32xf32>
    %77 = vector.extract_strided_slice %75 {offsets = [0, 32], sizes = [8, 32], strides = [1, 1]} : vector<8x128xf32> to vector<8x32xf32>
    %78 = vector.extract_strided_slice %75 {offsets = [0, 64], sizes = [8, 32], strides = [1, 1]} : vector<8x128xf32> to vector<8x32xf32>
    %79 = vector.extract_strided_slice %75 {offsets = [0, 96], sizes = [8, 32], strides = [1, 1]} : vector<8x128xf32> to vector<8x32xf32>
    %80 = arith.mulf %77, %65 : vector<8x32xf32>
    %81 = arith.mulf %76, %78 : vector<8x32xf32>
    %82 = arith.addf %80, %81 : vector<8x32xf32>
    %83 = math.tanh %82 : vector<8x32xf32>
    %84 = arith.mulf %79, %83 : vector<8x32xf32>
    %c16 = arith.constant 16 : index
    %c0_24 = arith.constant 0 : index
    %85 = vector.load %arg16[%c16, %c0_24] : memref<64x64xf32, #tpu.memory_space<vmem>>, vector<8x32xf32>
    tpu.vector_store %arg16[%c16, %c0_24], %84 {strides = array<i32>} : memref<64x64xf32, #tpu.memory_space<vmem>>, vector<8x32xf32>,
    %86 = vector.extract_strided_slice %26 {offsets = [24, 0], sizes = [8, 128], strides = [1, 1]} : vector<64x128xf32> to vector<8x128xf32>
    %87 = arith.truncf %84 : vector<8x32xf32> to vector<8x32xbf16>
    %cst_25 = arith.constant dense<0.000000e+00> : vector<8x128xf32>
    %88 = tpu.matmul %87, %32, %cst_25 {dimension_numbers = #tpu.dot_dimension_numbers<[1], [0], [0], [1], [0, 0, 1, 1], [], []>} : vector<8x32xbf16>, vector<32x128xbf16>, vector<8x128xf32> -> vector<8x128xf32>
    %89 = arith.addf %86, %88 : vector<8x128xf32>
    %90 = math.tanh %89 : vector<8x128xf32>
    %91 = arith.mulf %90, %8 : vector<8x128xf32>
    %92 = arith.addf %91, %11 : vector<8x128xf32>
    %93 = vector.extract_strided_slice %92 {offsets = [0, 0], sizes = [8, 32], strides = [1, 1]} : vector<8x128xf32> to vector<8x32xf32>
    %94 = vector.extract_strided_slice %92 {offsets = [0, 32], sizes = [8, 32], strides = [1, 1]} : vector<8x128xf32> to vector<8x32xf32>
    %95 = vector.extract_strided_slice %92 {offsets = [0, 64], sizes = [8, 32], strides = [1, 1]} : vector<8x128xf32> to vector<8x32xf32>
    %96 = vector.extract_strided_slice %92 {offsets = [0, 96], sizes = [8, 32], strides = [1, 1]} : vector<8x128xf32> to vector<8x32xf32>
    %97 = arith.mulf %94, %82 : vector<8x32xf32>
    %98 = arith.mulf %93, %95 : vector<8x32xf32>
    %99 = arith.addf %97, %98 : vector<8x32xf32>
    %100 = math.tanh %99 : vector<8x32xf32>
    %101 = arith.mulf %96, %100 : vector<8x32xf32>
    %c24 = arith.constant 24 : index
    %c0_26 = arith.constant 0 : index
    %102 = vector.load %arg16[%c24, %c0_26] : memref<64x64xf32, #tpu.memory_space<vmem>>, vector<8x32xf32>
    tpu.vector_store %arg16[%c24, %c0_26], %101 {strides = array<i32>} : memref<64x64xf32, #tpu.memory_space<vmem>>, vector<8x32xf32>,
    %103 = vector.extract_strided_slice %26 {offsets = [32, 0], sizes = [8, 128], strides = [1, 1]} : vector<64x128xf32> to vector<8x128xf32>
    %104 = arith.truncf %101 : vector<8x32xf32> to vector<8x32xbf16>
    %cst_27 = arith.constant dense<0.000000e+00> : vector<8x128xf32>
    %105 = tpu.matmul %104, %32, %cst_27 {dimension_numbers = #tpu.dot_dimension_numbers<[1], [0], [0], [1], [0, 0, 1, 1], [], []>} : vector<8x32xbf16>, vector<32x128xbf16>, vector<8x128xf32> -> vector<8x128xf32>
    %106 = arith.addf %103, %105 : vector<8x128xf32>
    %107 = math.tanh %106 : vector<8x128xf32>
    %108 = arith.mulf %107, %8 : vector<8x128xf32>
    %109 = arith.addf %108, %11 : vector<8x128xf32>
    %110 = vector.extract_strided_slice %109 {offsets = [0, 0], sizes = [8, 32], strides = [1, 1]} : vector<8x128xf32> to vector<8x32xf32>
    %111 = vector.extract_strided_slice %109 {offsets = [0, 32], sizes = [8, 32], strides = [1, 1]} : vector<8x128xf32> to vector<8x32xf32>
    %112 = vector.extract_strided_slice %109 {offsets = [0, 64], sizes = [8, 32], strides = [1, 1]} : vector<8x128xf32> to vector<8x32xf32>
    %113 = vector.extract_strided_slice %109 {offsets = [0, 96], sizes = [8, 32], strides = [1, 1]} : vector<8x128xf32> to vector<8x32xf32>
    %114 = arith.mulf %111, %99 : vector<8x32xf32>
    %115 = arith.mulf %110, %112 : vector<8x32xf32>
    %116 = arith.addf %114, %115 : vector<8x32xf32>
    %117 = math.tanh %116 : vector<8x32xf32>
    %118 = arith.mulf %113, %117 : vector<8x32xf32>
    %c32 = arith.constant 32 : index
    %c0_28 = arith.constant 0 : index
    %119 = vector.load %arg16[%c32, %c0_28] : memref<64x64xf32, #tpu.memory_space<vmem>>, vector<8x32xf32>
    tpu.vector_store %arg16[%c32, %c0_28], %118 {strides = array<i32>} : memref<64x64xf32, #tpu.memory_space<vmem>>, vector<8x32xf32>,
    %120 = vector.extract_strided_slice %26 {offsets = [40, 0], sizes = [8, 128], strides = [1, 1]} : vector<64x128xf32> to vector<8x128xf32>
    %121 = arith.truncf %118 : vector<8x32xf32> to vector<8x32xbf16>
    %cst_29 = arith.constant dense<0.000000e+00> : vector<8x128xf32>
    %122 = tpu.matmul %121, %32, %cst_29 {dimension_numbers = #tpu.dot_dimension_numbers<[1], [0], [0], [1], [0, 0, 1, 1], [], []>} : vector<8x32xbf16>, vector<32x128xbf16>, vector<8x128xf32> -> vector<8x128xf32>
    %123 = arith.addf %120, %122 : vector<8x128xf32>
    %124 = math.tanh %123 : vector<8x128xf32>
    %125 = arith.mulf %124, %8 : vector<8x128xf32>
    %126 = arith.addf %125, %11 : vector<8x128xf32>
    %127 = vector.extract_strided_slice %126 {offsets = [0, 0], sizes = [8, 32], strides = [1, 1]} : vector<8x128xf32> to vector<8x32xf32>
    %128 = vector.extract_strided_slice %126 {offsets = [0, 32], sizes = [8, 32], strides = [1, 1]} : vector<8x128xf32> to vector<8x32xf32>
    %129 = vector.extract_strided_slice %126 {offsets = [0, 64], sizes = [8, 32], strides = [1, 1]} : vector<8x128xf32> to vector<8x32xf32>
    %130 = vector.extract_strided_slice %126 {offsets = [0, 96], sizes = [8, 32], strides = [1, 1]} : vector<8x128xf32> to vector<8x32xf32>
    %131 = arith.mulf %128, %116 : vector<8x32xf32>
    %132 = arith.mulf %127, %129 : vector<8x32xf32>
    %133 = arith.addf %131, %132 : vector<8x32xf32>
    %134 = math.tanh %133 : vector<8x32xf32>
    %135 = arith.mulf %130, %134 : vector<8x32xf32>
    %c40 = arith.constant 40 : index
    %c0_30 = arith.constant 0 : index
    %136 = vector.load %arg16[%c40, %c0_30] : memref<64x64xf32, #tpu.memory_space<vmem>>, vector<8x32xf32>
    tpu.vector_store %arg16[%c40, %c0_30], %135 {strides = array<i32>} : memref<64x64xf32, #tpu.memory_space<vmem>>, vector<8x32xf32>,
    %137 = vector.extract_strided_slice %26 {offsets = [48, 0], sizes = [8, 128], strides = [1, 1]} : vector<64x128xf32> to vector<8x128xf32>
    %138 = arith.truncf %135 : vector<8x32xf32> to vector<8x32xbf16>
    %cst_31 = arith.constant dense<0.000000e+00> : vector<8x128xf32>
    %139 = tpu.matmul %138, %32, %cst_31 {dimension_numbers = #tpu.dot_dimension_numbers<[1], [0], [0], [1], [0, 0, 1, 1], [], []>} : vector<8x32xbf16>, vector<32x128xbf16>, vector<8x128xf32> -> vector<8x128xf32>
    %140 = arith.addf %137, %139 : vector<8x128xf32>
    %141 = math.tanh %140 : vector<8x128xf32>
    %142 = arith.mulf %141, %8 : vector<8x128xf32>
    %143 = arith.addf %142, %11 : vector<8x128xf32>
    %144 = vector.extract_strided_slice %143 {offsets = [0, 0], sizes = [8, 32], strides = [1, 1]} : vector<8x128xf32> to vector<8x32xf32>
    %145 = vector.extract_strided_slice %143 {offsets = [0, 32], sizes = [8, 32], strides = [1, 1]} : vector<8x128xf32> to vector<8x32xf32>
    %146 = vector.extract_strided_slice %143 {offsets = [0, 64], sizes = [8, 32], strides = [1, 1]} : vector<8x128xf32> to vector<8x32xf32>
    %147 = vector.extract_strided_slice %143 {offsets = [0, 96], sizes = [8, 32], strides = [1, 1]} : vector<8x128xf32> to vector<8x32xf32>
    %148 = arith.mulf %145, %133 : vector<8x32xf32>
    %149 = arith.mulf %144, %146 : vector<8x32xf32>
    %150 = arith.addf %148, %149 : vector<8x32xf32>
    %151 = math.tanh %150 : vector<8x32xf32>
    %152 = arith.mulf %147, %151 : vector<8x32xf32>
    %c48 = arith.constant 48 : index
    %c0_32 = arith.constant 0 : index
    %153 = vector.load %arg16[%c48, %c0_32] : memref<64x64xf32, #tpu.memory_space<vmem>>, vector<8x32xf32>
    tpu.vector_store %arg16[%c48, %c0_32], %152 {strides = array<i32>} : memref<64x64xf32, #tpu.memory_space<vmem>>, vector<8x32xf32>,
    %154 = vector.extract_strided_slice %26 {offsets = [56, 0], sizes = [8, 128], strides = [1, 1]} : vector<64x128xf32> to vector<8x128xf32>
    %155 = arith.truncf %152 : vector<8x32xf32> to vector<8x32xbf16>
    %cst_33 = arith.constant dense<0.000000e+00> : vector<8x128xf32>
    %156 = tpu.matmul %155, %32, %cst_33 {dimension_numbers = #tpu.dot_dimension_numbers<[1], [0], [0], [1], [0, 0, 1, 1], [], []>} : vector<8x32xbf16>, vector<32x128xbf16>, vector<8x128xf32> -> vector<8x128xf32>
    %157 = arith.addf %154, %156 : vector<8x128xf32>
    %158 = math.tanh %157 : vector<8x128xf32>
    %159 = arith.mulf %158, %8 : vector<8x128xf32>
    %160 = arith.addf %159, %11 : vector<8x128xf32>
    %161 = vector.extract_strided_slice %160 {offsets = [0, 0], sizes = [8, 32], strides = [1, 1]} : vector<8x128xf32> to vector<8x32xf32>
    %162 = vector.extract_strided_slice %160 {offsets = [0, 32], sizes = [8, 32], strides = [1, 1]} : vector<8x128xf32> to vector<8x32xf32>
    %163 = vector.extract_strided_slice %160 {offsets = [0, 64], sizes = [8, 32], strides = [1, 1]} : vector<8x128xf32> to vector<8x32xf32>
    %164 = vector.extract_strided_slice %160 {offsets = [0, 96], sizes = [8, 32], strides = [1, 1]} : vector<8x128xf32> to vector<8x32xf32>
    %165 = arith.mulf %162, %150 : vector<8x32xf32>
    %166 = arith.mulf %161, %163 : vector<8x32xf32>
    %167 = arith.addf %165, %166 : vector<8x32xf32>
    %168 = math.tanh %167 : vector<8x32xf32>
    %169 = arith.mulf %164, %168 : vector<8x32xf32>
    %c56 = arith.constant 56 : index
    %c0_34 = arith.constant 0 : index
    %170 = vector.load %arg16[%c56, %c0_34] : memref<64x64xf32, #tpu.memory_space<vmem>>, vector<8x32xf32>
    tpu.vector_store %arg16[%c56, %c0_34], %169 {strides = array<i32>} : memref<64x64xf32, #tpu.memory_space<vmem>>, vector<8x32xf32>,
    %c1_35 = arith.constant 1 : index
    %c0_36 = arith.constant 0 : index
    %c0_37 = arith.constant 0 : index
    %171 = vector.load %arg8[%c1_35, %c0_36, %c0_37] : memref<2x32x128xbf16, #tpu.memory_space<vmem>>, vector<1x32x128xbf16>
    %172 = vector.shape_cast %171 : vector<1x32x128xbf16> to vector<32x128xbf16>
    %cst_38 = arith.constant 0.000000e+00 : f32
    %173 = vector.broadcast %cst_38 : f32 to vector<8x32xf32>
    %cst_39 = arith.constant 0.000000e+00 : f32
    %174 = vector.broadcast %cst_39 : f32 to vector<8x32xf32>
    %175 = vector.extract_strided_slice %30 {offsets = [56, 0], sizes = [8, 128], strides = [1, 1]} : vector<64x128xf32> to vector<8x128xf32>
    %176 = arith.truncf %173 : vector<8x32xf32> to vector<8x32xbf16>
    %cst_40 = arith.constant dense<0.000000e+00> : vector<8x128xf32>
    %177 = tpu.matmul %176, %172, %cst_40 {dimension_numbers = #tpu.dot_dimension_numbers<[1], [0], [0], [1], [0, 0, 1, 1], [], []>} : vector<8x32xbf16>, vector<32x128xbf16>, vector<8x128xf32> -> vector<8x128xf32>
    %178 = arith.addf %175, %177 : vector<8x128xf32>
    %179 = math.tanh %178 : vector<8x128xf32>
    %180 = arith.mulf %179, %8 : vector<8x128xf32>
    %181 = arith.addf %180, %11 : vector<8x128xf32>
    %182 = vector.extract_strided_slice %181 {offsets = [0, 0], sizes = [8, 32], strides = [1, 1]} : vector<8x128xf32> to vector<8x32xf32>
    %183 = vector.extract_strided_slice %181 {offsets = [0, 32], sizes = [8, 32], strides = [1, 1]} : vector<8x128xf32> to vector<8x32xf32>
    %184 = vector.extract_strided_slice %181 {offsets = [0, 64], sizes = [8, 32], strides = [1, 1]} : vector<8x128xf32> to vector<8x32xf32>
    %185 = vector.extract_strided_slice %181 {offsets = [0, 96], sizes = [8, 32], strides = [1, 1]} : vector<8x128xf32> to vector<8x32xf32>
    %186 = arith.mulf %183, %174 : vector<8x32xf32>
    %187 = arith.mulf %182, %184 : vector<8x32xf32>
    %188 = arith.addf %186, %187 : vector<8x32xf32>
    %189 = math.tanh %188 : vector<8x32xf32>
    %190 = arith.mulf %185, %189 : vector<8x32xf32>
    %c56_41 = arith.constant 56 : index
    %c32_42 = arith.constant 32 : index
    %191 = vector.load %arg16[%c56_41, %c32_42] : memref<64x64xf32, #tpu.memory_space<vmem>>, vector<8x32xf32>
    tpu.vector_store %arg16[%c56_41, %c32_42], %190 {strides = array<i32>} : memref<64x64xf32, #tpu.memory_space<vmem>>, vector<8x32xf32>,
    %192 = vector.extract_strided_slice %30 {offsets = [48, 0], sizes = [8, 128], strides = [1, 1]} : vector<64x128xf32> to vector<8x128xf32>
    %193 = arith.truncf %190 : vector<8x32xf32> to vector<8x32xbf16>
    %cst_43 = arith.constant dense<0.000000e+00> : vector<8x128xf32>
    %194 = tpu.matmul %193, %172, %cst_43 {dimension_numbers = #tpu.dot_dimension_numbers<[1], [0], [0], [1], [0, 0, 1, 1], [], []>} : vector<8x32xbf16>, vector<32x128xbf16>, vector<8x128xf32> -> vector<8x128xf32>
    %195 = arith.addf %192, %194 : vector<8x128xf32>
    %196 = math.tanh %195 : vector<8x128xf32>
    %197 = arith.mulf %196, %8 : vector<8x128xf32>
    %198 = arith.addf %197, %11 : vector<8x128xf32>
    %199 = vector.extract_strided_slice %198 {offsets = [0, 0], sizes = [8, 32], strides = [1, 1]} : vector<8x128xf32> to vector<8x32xf32>
    %200 = vector.extract_strided_slice %198 {offsets = [0, 32], sizes = [8, 32], strides = [1, 1]} : vector<8x128xf32> to vector<8x32xf32>
    %201 = vector.extract_strided_slice %198 {offsets = [0, 64], sizes = [8, 32], strides = [1, 1]} : vector<8x128xf32> to vector<8x32xf32>
    %202 = vector.extract_strided_slice %198 {offsets = [0, 96], sizes = [8, 32], strides = [1, 1]} : vector<8x128xf32> to vector<8x32xf32>
    %203 = arith.mulf %200, %188 : vector<8x32xf32>
    %204 = arith.mulf %199, %201 : vector<8x32xf32>
    %205 = arith.addf %203, %204 : vector<8x32xf32>
    %206 = math.tanh %205 : vector<8x32xf32>
    %207 = arith.mulf %202, %206 : vector<8x32xf32>
    %c48_44 = arith.constant 48 : index
    %c32_45 = arith.constant 32 : index
    %208 = vector.load %arg16[%c48_44, %c32_45] : memref<64x64xf32, #tpu.memory_space<vmem>>, vector<8x32xf32>
    tpu.vector_store %arg16[%c48_44, %c32_45], %207 {strides = array<i32>} : memref<64x64xf32, #tpu.memory_space<vmem>>, vector<8x32xf32>,
    %209 = vector.extract_strided_slice %30 {offsets = [40, 0], sizes = [8, 128], strides = [1, 1]} : vector<64x128xf32> to vector<8x128xf32>
    %210 = arith.truncf %207 : vector<8x32xf32> to vector<8x32xbf16>
    %cst_46 = arith.constant dense<0.000000e+00> : vector<8x128xf32>
    %211 = tpu.matmul %210, %172, %cst_46 {dimension_numbers = #tpu.dot_dimension_numbers<[1], [0], [0], [1], [0, 0, 1, 1], [], []>} : vector<8x32xbf16>, vector<32x128xbf16>, vector<8x128xf32> -> vector<8x128xf32>
    %212 = arith.addf %209, %211 : vector<8x128xf32>
    %213 = math.tanh %212 : vector<8x128xf32>
    %214 = arith.mulf %213, %8 : vector<8x128xf32>
    %215 = arith.addf %214, %11 : vector<8x128xf32>
    %216 = vector.extract_strided_slice %215 {offsets = [0, 0], sizes = [8, 32], strides = [1, 1]} : vector<8x128xf32> to vector<8x32xf32>
    %217 = vector.extract_strided_slice %215 {offsets = [0, 32], sizes = [8, 32], strides = [1, 1]} : vector<8x128xf32> to vector<8x32xf32>
    %218 = vector.extract_strided_slice %215 {offsets = [0, 64], sizes = [8, 32], strides = [1, 1]} : vector<8x128xf32> to vector<8x32xf32>
    %219 = vector.extract_strided_slice %215 {offsets = [0, 96], sizes = [8, 32], strides = [1, 1]} : vector<8x128xf32> to vector<8x32xf32>
    %220 = arith.mulf %217, %205 : vector<8x32xf32>
    %221 = arith.mulf %216, %218 : vector<8x32xf32>
    %222 = arith.addf %220, %221 : vector<8x32xf32>
    %223 = math.tanh %222 : vector<8x32xf32>
    %224 = arith.mulf %219, %223 : vector<8x32xf32>
    %c40_47 = arith.constant 40 : index
    %c32_48 = arith.constant 32 : index
    %225 = vector.load %arg16[%c40_47, %c32_48] : memref<64x64xf32, #tpu.memory_space<vmem>>, vector<8x32xf32>
    tpu.vector_store %arg16[%c40_47, %c32_48], %224 {strides = array<i32>} : memref<64x64xf32, #tpu.memory_space<vmem>>, vector<8x32xf32>,
    %226 = vector.extract_strided_slice %30 {offsets = [32, 0], sizes = [8, 128], strides = [1, 1]} : vector<64x128xf32> to vector<8x128xf32>
    %227 = arith.truncf %224 : vector<8x32xf32> to vector<8x32xbf16>
    %cst_49 = arith.constant dense<0.000000e+00> : vector<8x128xf32>
    %228 = tpu.matmul %227, %172, %cst_49 {dimension_numbers = #tpu.dot_dimension_numbers<[1], [0], [0], [1], [0, 0, 1, 1], [], []>} : vector<8x32xbf16>, vector<32x128xbf16>, vector<8x128xf32> -> vector<8x128xf32>
    %229 = arith.addf %226, %228 : vector<8x128xf32>
    %230 = math.tanh %229 : vector<8x128xf32>
    %231 = arith.mulf %230, %8 : vector<8x128xf32>
    %232 = arith.addf %231, %11 : vector<8x128xf32>
    %233 = vector.extract_strided_slice %232 {offsets = [0, 0], sizes = [8, 32], strides = [1, 1]} : vector<8x128xf32> to vector<8x32xf32>
    %234 = vector.extract_strided_slice %232 {offsets = [0, 32], sizes = [8, 32], strides = [1, 1]} : vector<8x128xf32> to vector<8x32xf32>
    %235 = vector.extract_strided_slice %232 {offsets = [0, 64], sizes = [8, 32], strides = [1, 1]} : vector<8x128xf32> to vector<8x32xf32>
    %236 = vector.extract_strided_slice %232 {offsets = [0, 96], sizes = [8, 32], strides = [1, 1]} : vector<8x128xf32> to vector<8x32xf32>
    %237 = arith.mulf %234, %222 : vector<8x32xf32>
    %238 = arith.mulf %233, %235 : vector<8x32xf32>
    %239 = arith.addf %237, %238 : vector<8x32xf32>
    %240 = math.tanh %239 : vector<8x32xf32>
    %241 = arith.mulf %236, %240 : vector<8x32xf32>
    %c32_50 = arith.constant 32 : index
    %c32_51 = arith.constant 32 : index
    %242 = vector.load %arg16[%c32_50, %c32_51] : memref<64x64xf32, #tpu.memory_space<vmem>>, vector<8x32xf32>
    tpu.vector_store %arg16[%c32_50, %c32_51], %241 {strides = array<i32>} : memref<64x64xf32, #tpu.memory_space<vmem>>, vector<8x32xf32>,
    %243 = vector.extract_strided_slice %30 {offsets = [24, 0], sizes = [8, 128], strides = [1, 1]} : vector<64x128xf32> to vector<8x128xf32>
    %244 = arith.truncf %241 : vector<8x32xf32> to vector<8x32xbf16>
    %cst_52 = arith.constant dense<0.000000e+00> : vector<8x128xf32>
    %245 = tpu.matmul %244, %172, %cst_52 {dimension_numbers = #tpu.dot_dimension_numbers<[1], [0], [0], [1], [0, 0, 1, 1], [], []>} : vector<8x32xbf16>, vector<32x128xbf16>, vector<8x128xf32> -> vector<8x128xf32>
    %246 = arith.addf %243, %245 : vector<8x128xf32>
    %247 = math.tanh %246 : vector<8x128xf32>
    %248 = arith.mulf %247, %8 : vector<8x128xf32>
    %249 = arith.addf %248, %11 : vector<8x128xf32>
    %250 = vector.extract_strided_slice %249 {offsets = [0, 0], sizes = [8, 32], strides = [1, 1]} : vector<8x128xf32> to vector<8x32xf32>
    %251 = vector.extract_strided_slice %249 {offsets = [0, 32], sizes = [8, 32], strides = [1, 1]} : vector<8x128xf32> to vector<8x32xf32>
    %252 = vector.extract_strided_slice %249 {offsets = [0, 64], sizes = [8, 32], strides = [1, 1]} : vector<8x128xf32> to vector<8x32xf32>
    %253 = vector.extract_strided_slice %249 {offsets = [0, 96], sizes = [8, 32], strides = [1, 1]} : vector<8x128xf32> to vector<8x32xf32>
    %254 = arith.mulf %251, %239 : vector<8x32xf32>
    %255 = arith.mulf %250, %252 : vector<8x32xf32>
    %256 = arith.addf %254, %255 : vector<8x32xf32>
    %257 = math.tanh %256 : vector<8x32xf32>
    %258 = arith.mulf %253, %257 : vector<8x32xf32>
    %c24_53 = arith.constant 24 : index
    %c32_54 = arith.constant 32 : index
    %259 = vector.load %arg16[%c24_53, %c32_54] : memref<64x64xf32, #tpu.memory_space<vmem>>, vector<8x32xf32>
    tpu.vector_store %arg16[%c24_53, %c32_54], %258 {strides = array<i32>} : memref<64x64xf32, #tpu.memory_space<vmem>>, vector<8x32xf32>,
    %260 = vector.extract_strided_slice %30 {offsets = [16, 0], sizes = [8, 128], strides = [1, 1]} : vector<64x128xf32> to vector<8x128xf32>
    %261 = arith.truncf %258 : vector<8x32xf32> to vector<8x32xbf16>
    %cst_55 = arith.constant dense<0.000000e+00> : vector<8x128xf32>
    %262 = tpu.matmul %261, %172, %cst_55 {dimension_numbers = #tpu.dot_dimension_numbers<[1], [0], [0], [1], [0, 0, 1, 1], [], []>} : vector<8x32xbf16>, vector<32x128xbf16>, vector<8x128xf32> -> vector<8x128xf32>
    %263 = arith.addf %260, %262 : vector<8x128xf32>
    %264 = math.tanh %263 : vector<8x128xf32>
    %265 = arith.mulf %264, %8 : vector<8x128xf32>
    %266 = arith.addf %265, %11 : vector<8x128xf32>
    %267 = vector.extract_strided_slice %266 {offsets = [0, 0], sizes = [8, 32], strides = [1, 1]} : vector<8x128xf32> to vector<8x32xf32>
    %268 = vector.extract_strided_slice %266 {offsets = [0, 32], sizes = [8, 32], strides = [1, 1]} : vector<8x128xf32> to vector<8x32xf32>
    %269 = vector.extract_strided_slice %266 {offsets = [0, 64], sizes = [8, 32], strides = [1, 1]} : vector<8x128xf32> to vector<8x32xf32>
    %270 = vector.extract_strided_slice %266 {offsets = [0, 96], sizes = [8, 32], strides = [1, 1]} : vector<8x128xf32> to vector<8x32xf32>
    %271 = arith.mulf %268, %256 : vector<8x32xf32>
    %272 = arith.mulf %267, %269 : vector<8x32xf32>
    %273 = arith.addf %271, %272 : vector<8x32xf32>
    %274 = math.tanh %273 : vector<8x32xf32>
    %275 = arith.mulf %270, %274 : vector<8x32xf32>
    %c16_56 = arith.constant 16 : index
    %c32_57 = arith.constant 32 : index
    %276 = vector.load %arg16[%c16_56, %c32_57] : memref<64x64xf32, #tpu.memory_space<vmem>>, vector<8x32xf32>
    tpu.vector_store %arg16[%c16_56, %c32_57], %275 {strides = array<i32>} : memref<64x64xf32, #tpu.memory_space<vmem>>, vector<8x32xf32>,
    %277 = vector.extract_strided_slice %30 {offsets = [8, 0], sizes = [8, 128], strides = [1, 1]} : vector<64x128xf32> to vector<8x128xf32>
    %278 = arith.truncf %275 : vector<8x32xf32> to vector<8x32xbf16>
    %cst_58 = arith.constant dense<0.000000e+00> : vector<8x128xf32>
    %279 = tpu.matmul %278, %172, %cst_58 {dimension_numbers = #tpu.dot_dimension_numbers<[1], [0], [0], [1], [0, 0, 1, 1], [], []>} : vector<8x32xbf16>, vector<32x128xbf16>, vector<8x128xf32> -> vector<8x128xf32>
    %280 = arith.addf %277, %279 : vector<8x128xf32>
    %281 = math.tanh %280 : vector<8x128xf32>
    %282 = arith.mulf %281, %8 : vector<8x128xf32>
    %283 = arith.addf %282, %11 : vector<8x128xf32>
    %284 = vector.extract_strided_slice %283 {offsets = [0, 0], sizes = [8, 32], strides = [1, 1]} : vector<8x128xf32> to vector<8x32xf32>
    %285 = vector.extract_strided_slice %283 {offsets = [0, 32], sizes = [8, 32], strides = [1, 1]} : vector<8x128xf32> to vector<8x32xf32>
    %286 = vector.extract_strided_slice %283 {offsets = [0, 64], sizes = [8, 32], strides = [1, 1]} : vector<8x128xf32> to vector<8x32xf32>
    %287 = vector.extract_strided_slice %283 {offsets = [0, 96], sizes = [8, 32], strides = [1, 1]} : vector<8x128xf32> to vector<8x32xf32>
    %288 = arith.mulf %285, %273 : vector<8x32xf32>
    %289 = arith.mulf %284, %286 : vector<8x32xf32>
    %290 = arith.addf %288, %289 : vector<8x32xf32>
    %291 = math.tanh %290 : vector<8x32xf32>
    %292 = arith.mulf %287, %291 : vector<8x32xf32>
    %c8_59 = arith.constant 8 : index
    %c32_60 = arith.constant 32 : index
    %293 = vector.load %arg16[%c8_59, %c32_60] : memref<64x64xf32, #tpu.memory_space<vmem>>, vector<8x32xf32>
    tpu.vector_store %arg16[%c8_59, %c32_60], %292 {strides = array<i32>} : memref<64x64xf32, #tpu.memory_space<vmem>>, vector<8x32xf32>,
    %294 = vector.extract_strided_slice %30 {offsets = [0, 0], sizes = [8, 128], strides = [1, 1]} : vector<64x128xf32> to vector<8x128xf32>
    %295 = arith.truncf %292 : vector<8x32xf32> to vector<8x32xbf16>
    %cst_61 = arith.constant dense<0.000000e+00> : vector<8x128xf32>
    %296 = tpu.matmul %295, %172, %cst_61 {dimension_numbers = #tpu.dot_dimension_numbers<[1], [0], [0], [1], [0, 0, 1, 1], [], []>} : vector<8x32xbf16>, vector<32x128xbf16>, vector<8x128xf32> -> vector<8x128xf32>
    %297 = arith.addf %294, %296 : vector<8x128xf32>
    %298 = math.tanh %297 : vector<8x128xf32>
    %299 = arith.mulf %298, %8 : vector<8x128xf32>
    %300 = arith.addf %299, %11 : vector<8x128xf32>
    %301 = vector.extract_strided_slice %300 {offsets = [0, 0], sizes = [8, 32], strides = [1, 1]} : vector<8x128xf32> to vector<8x32xf32>
    %302 = vector.extract_strided_slice %300 {offsets = [0, 32], sizes = [8, 32], strides = [1, 1]} : vector<8x128xf32> to vector<8x32xf32>
    %303 = vector.extract_strided_slice %300 {offsets = [0, 64], sizes = [8, 32], strides = [1, 1]} : vector<8x128xf32> to vector<8x32xf32>
    %304 = vector.extract_strided_slice %300 {offsets = [0, 96], sizes = [8, 32], strides = [1, 1]} : vector<8x128xf32> to vector<8x32xf32>
    %305 = arith.mulf %302, %290 : vector<8x32xf32>
    %306 = arith.mulf %301, %303 : vector<8x32xf32>
    %307 = arith.addf %305, %306 : vector<8x32xf32>
    %308 = math.tanh %307 : vector<8x32xf32>
    %309 = arith.mulf %304, %308 : vector<8x32xf32>
    %c0_62 = arith.constant 0 : index
    %c32_63 = arith.constant 32 : index
    %310 = vector.load %arg16[%c0_62, %c32_63] : memref<64x64xf32, #tpu.memory_space<vmem>>, vector<8x32xf32>
    tpu.vector_store %arg16[%c0_62, %c32_63], %309 {strides = array<i32>} : memref<64x64xf32, #tpu.memory_space<vmem>>, vector<8x32xf32>,
    %c0_64 = arith.constant 0 : index
    %c0_65 = arith.constant 0 : index
    %311 = vector.load %arg16[%c0_64, %c0_65] : memref<64x64xf32, #tpu.memory_space<vmem>>, vector<64x64xf32>
    %312 = arith.truncf %311 : vector<64x64xf32> to vector<64x64xbf16>
    %c0_66 = arith.constant 0 : index
    %c0_67 = arith.constant 0 : index
    %313 = vector.load %arg9[%c0_66, %c0_67] : memref<64x256xbf16, #tpu.memory_space<vmem>>, vector<64x256xbf16>
    %cst_68 = arith.constant dense<0.000000e+00> : vector<64x256xf32>
    %314 = tpu.matmul %312, %313, %cst_68 {dimension_numbers = #tpu.dot_dimension_numbers<[1], [0], [0], [1], [0, 0, 1, 1], [], []>} : vector<64x64xbf16>, vector<64x256xbf16>, vector<64x256xf32> -> vector<64x256xf32>
    %315 = vector.extract_strided_slice %314 {offsets = [0, 0], sizes = [64, 128], strides = [1, 1]} : vector<64x256xf32> to vector<64x128xf32>
    %c2 = arith.constant 2 : index
    %c0_69 = arith.constant 0 : index
    %316 = vector.load %arg11[%c2, %c0_69] : memref<4x128xf32, #tpu.memory_space<vmem>>, vector<1x128xf32>
    %317 = vector.broadcast %316 : vector<1x128xf32> to vector<64x128xf32>
    %318 = arith.addf %315, %317 : vector<64x128xf32>
    %319 = vector.extract_strided_slice %314 {offsets = [0, 128], sizes = [64, 128], strides = [1, 1]} : vector<64x256xf32> to vector<64x128xf32>
    %c3 = arith.constant 3 : index
    %c0_70 = arith.constant 0 : index
    %320 = vector.load %arg11[%c3, %c0_70] : memref<4x128xf32, #tpu.memory_space<vmem>>, vector<1x128xf32>
    %321 = vector.broadcast %320 : vector<1x128xf32> to vector<64x128xf32>
    %322 = arith.addf %319, %321 : vector<64x128xf32>
    %c0_71 = arith.constant 0 : index
    %c0_72 = arith.constant 0 : index
    %c0_73 = arith.constant 0 : index
    %323 = vector.load %arg10[%c0_71, %c0_72, %c0_73] : memref<2x32x128xbf16, #tpu.memory_space<vmem>>, vector<1x32x128xbf16>
    %324 = vector.shape_cast %323 : vector<1x32x128xbf16> to vector<32x128xbf16>
    %cst_74 = arith.constant 0.000000e+00 : f32
    %325 = vector.broadcast %cst_74 : f32 to vector<8x32xf32>
    %cst_75 = arith.constant 0.000000e+00 : f32
    %326 = vector.broadcast %cst_75 : f32 to vector<8x32xf32>
    %327 = vector.extract_strided_slice %318 {offsets = [0, 0], sizes = [8, 128], strides = [1, 1]} : vector<64x128xf32> to vector<8x128xf32>
    %328 = arith.truncf %325 : vector<8x32xf32> to vector<8x32xbf16>
    %cst_76 = arith.constant dense<0.000000e+00> : vector<8x128xf32>
    %329 = tpu.matmul %328, %324, %cst_76 {dimension_numbers = #tpu.dot_dimension_numbers<[1], [0], [0], [1], [0, 0, 1, 1], [], []>} : vector<8x32xbf16>, vector<32x128xbf16>, vector<8x128xf32> -> vector<8x128xf32>
    %330 = arith.addf %327, %329 : vector<8x128xf32>
    %331 = math.tanh %330 : vector<8x128xf32>
    %332 = arith.mulf %331, %8 : vector<8x128xf32>
    %333 = arith.addf %332, %11 : vector<8x128xf32>
    %334 = vector.extract_strided_slice %333 {offsets = [0, 0], sizes = [8, 32], strides = [1, 1]} : vector<8x128xf32> to vector<8x32xf32>
    %335 = vector.extract_strided_slice %333 {offsets = [0, 32], sizes = [8, 32], strides = [1, 1]} : vector<8x128xf32> to vector<8x32xf32>
    %336 = vector.extract_strided_slice %333 {offsets = [0, 64], sizes = [8, 32], strides = [1, 1]} : vector<8x128xf32> to vector<8x32xf32>
    %337 = vector.extract_strided_slice %333 {offsets = [0, 96], sizes = [8, 32], strides = [1, 1]} : vector<8x128xf32> to vector<8x32xf32>
    %338 = arith.mulf %335, %326 : vector<8x32xf32>
    %339 = arith.mulf %334, %336 : vector<8x32xf32>
    %340 = arith.addf %338, %339 : vector<8x32xf32>
    %341 = math.tanh %340 : vector<8x32xf32>
    %342 = arith.mulf %337, %341 : vector<8x32xf32>
    %343 = vector.extract_strided_slice %318 {offsets = [8, 0], sizes = [8, 128], strides = [1, 1]} : vector<64x128xf32> to vector<8x128xf32>
    %344 = arith.truncf %342 : vector<8x32xf32> to vector<8x32xbf16>
    %cst_77 = arith.constant dense<0.000000e+00> : vector<8x128xf32>
    %345 = tpu.matmul %344, %324, %cst_77 {dimension_numbers = #tpu.dot_dimension_numbers<[1], [0], [0], [1], [0, 0, 1, 1], [], []>} : vector<8x32xbf16>, vector<32x128xbf16>, vector<8x128xf32> -> vector<8x128xf32>
    %346 = arith.addf %343, %345 : vector<8x128xf32>
    %347 = math.tanh %346 : vector<8x128xf32>
    %348 = arith.mulf %347, %8 : vector<8x128xf32>
    %349 = arith.addf %348, %11 : vector<8x128xf32>
    %350 = vector.extract_strided_slice %349 {offsets = [0, 0], sizes = [8, 32], strides = [1, 1]} : vector<8x128xf32> to vector<8x32xf32>
    %351 = vector.extract_strided_slice %349 {offsets = [0, 32], sizes = [8, 32], strides = [1, 1]} : vector<8x128xf32> to vector<8x32xf32>
    %352 = vector.extract_strided_slice %349 {offsets = [0, 64], sizes = [8, 32], strides = [1, 1]} : vector<8x128xf32> to vector<8x32xf32>
    %353 = vector.extract_strided_slice %349 {offsets = [0, 96], sizes = [8, 32], strides = [1, 1]} : vector<8x128xf32> to vector<8x32xf32>
    %354 = arith.mulf %351, %340 : vector<8x32xf32>
    %355 = arith.mulf %350, %352 : vector<8x32xf32>
    %356 = arith.addf %354, %355 : vector<8x32xf32>
    %357 = math.tanh %356 : vector<8x32xf32>
    %358 = arith.mulf %353, %357 : vector<8x32xf32>
    %359 = vector.extract_strided_slice %318 {offsets = [16, 0], sizes = [8, 128], strides = [1, 1]} : vector<64x128xf32> to vector<8x128xf32>
    %360 = arith.truncf %358 : vector<8x32xf32> to vector<8x32xbf16>
    %cst_78 = arith.constant dense<0.000000e+00> : vector<8x128xf32>
    %361 = tpu.matmul %360, %324, %cst_78 {dimension_numbers = #tpu.dot_dimension_numbers<[1], [0], [0], [1], [0, 0, 1, 1], [], []>} : vector<8x32xbf16>, vector<32x128xbf16>, vector<8x128xf32> -> vector<8x128xf32>
    %362 = arith.addf %359, %361 : vector<8x128xf32>
    %363 = math.tanh %362 : vector<8x128xf32>
    %364 = arith.mulf %363, %8 : vector<8x128xf32>
    %365 = arith.addf %364, %11 : vector<8x128xf32>
    %366 = vector.extract_strided_slice %365 {offsets = [0, 0], sizes = [8, 32], strides = [1, 1]} : vector<8x128xf32> to vector<8x32xf32>
    %367 = vector.extract_strided_slice %365 {offsets = [0, 32], sizes = [8, 32], strides = [1, 1]} : vector<8x128xf32> to vector<8x32xf32>
    %368 = vector.extract_strided_slice %365 {offsets = [0, 64], sizes = [8, 32], strides = [1, 1]} : vector<8x128xf32> to vector<8x32xf32>
    %369 = vector.extract_strided_slice %365 {offsets = [0, 96], sizes = [8, 32], strides = [1, 1]} : vector<8x128xf32> to vector<8x32xf32>
    %370 = arith.mulf %367, %356 : vector<8x32xf32>
    %371 = arith.mulf %366, %368 : vector<8x32xf32>
    %372 = arith.addf %370, %371 : vector<8x32xf32>
    %373 = math.tanh %372 : vector<8x32xf32>
    %374 = arith.mulf %369, %373 : vector<8x32xf32>
    %375 = vector.extract_strided_slice %318 {offsets = [24, 0], sizes = [8, 128], strides = [1, 1]} : vector<64x128xf32> to vector<8x128xf32>
    %376 = arith.truncf %374 : vector<8x32xf32> to vector<8x32xbf16>
    %cst_79 = arith.constant dense<0.000000e+00> : vector<8x128xf32>
    %377 = tpu.matmul %376, %324, %cst_79 {dimension_numbers = #tpu.dot_dimension_numbers<[1], [0], [0], [1], [0, 0, 1, 1], [], []>} : vector<8x32xbf16>, vector<32x128xbf16>, vector<8x128xf32> -> vector<8x128xf32>
    %378 = arith.addf %375, %377 : vector<8x128xf32>
    %379 = math.tanh %378 : vector<8x128xf32>
    %380 = arith.mulf %379, %8 : vector<8x128xf32>
    %381 = arith.addf %380, %11 : vector<8x128xf32>
    %382 = vector.extract_strided_slice %381 {offsets = [0, 0], sizes = [8, 32], strides = [1, 1]} : vector<8x128xf32> to vector<8x32xf32>
    %383 = vector.extract_strided_slice %381 {offsets = [0, 32], sizes = [8, 32], strides = [1, 1]} : vector<8x128xf32> to vector<8x32xf32>
    %384 = vector.extract_strided_slice %381 {offsets = [0, 64], sizes = [8, 32], strides = [1, 1]} : vector<8x128xf32> to vector<8x32xf32>
    %385 = vector.extract_strided_slice %381 {offsets = [0, 96], sizes = [8, 32], strides = [1, 1]} : vector<8x128xf32> to vector<8x32xf32>
    %386 = arith.mulf %383, %372 : vector<8x32xf32>
    %387 = arith.mulf %382, %384 : vector<8x32xf32>
    %388 = arith.addf %386, %387 : vector<8x32xf32>
    %389 = math.tanh %388 : vector<8x32xf32>
    %390 = arith.mulf %385, %389 : vector<8x32xf32>
    %391 = vector.extract_strided_slice %318 {offsets = [32, 0], sizes = [8, 128], strides = [1, 1]} : vector<64x128xf32> to vector<8x128xf32>
    %392 = arith.truncf %390 : vector<8x32xf32> to vector<8x32xbf16>
    %cst_80 = arith.constant dense<0.000000e+00> : vector<8x128xf32>
    %393 = tpu.matmul %392, %324, %cst_80 {dimension_numbers = #tpu.dot_dimension_numbers<[1], [0], [0], [1], [0, 0, 1, 1], [], []>} : vector<8x32xbf16>, vector<32x128xbf16>, vector<8x128xf32> -> vector<8x128xf32>
    %394 = arith.addf %391, %393 : vector<8x128xf32>
    %395 = math.tanh %394 : vector<8x128xf32>
    %396 = arith.mulf %395, %8 : vector<8x128xf32>
    %397 = arith.addf %396, %11 : vector<8x128xf32>
    %398 = vector.extract_strided_slice %397 {offsets = [0, 0], sizes = [8, 32], strides = [1, 1]} : vector<8x128xf32> to vector<8x32xf32>
    %399 = vector.extract_strided_slice %397 {offsets = [0, 32], sizes = [8, 32], strides = [1, 1]} : vector<8x128xf32> to vector<8x32xf32>
    %400 = vector.extract_strided_slice %397 {offsets = [0, 64], sizes = [8, 32], strides = [1, 1]} : vector<8x128xf32> to vector<8x32xf32>
    %401 = vector.extract_strided_slice %397 {offsets = [0, 96], sizes = [8, 32], strides = [1, 1]} : vector<8x128xf32> to vector<8x32xf32>
    %402 = arith.mulf %399, %388 : vector<8x32xf32>
    %403 = arith.mulf %398, %400 : vector<8x32xf32>
    %404 = arith.addf %402, %403 : vector<8x32xf32>
    %405 = math.tanh %404 : vector<8x32xf32>
    %406 = arith.mulf %401, %405 : vector<8x32xf32>
    %407 = vector.extract_strided_slice %318 {offsets = [40, 0], sizes = [8, 128], strides = [1, 1]} : vector<64x128xf32> to vector<8x128xf32>
    %408 = arith.truncf %406 : vector<8x32xf32> to vector<8x32xbf16>
    %cst_81 = arith.constant dense<0.000000e+00> : vector<8x128xf32>
    %409 = tpu.matmul %408, %324, %cst_81 {dimension_numbers = #tpu.dot_dimension_numbers<[1], [0], [0], [1], [0, 0, 1, 1], [], []>} : vector<8x32xbf16>, vector<32x128xbf16>, vector<8x128xf32> -> vector<8x128xf32>
    %410 = arith.addf %407, %409 : vector<8x128xf32>
    %411 = math.tanh %410 : vector<8x128xf32>
    %412 = arith.mulf %411, %8 : vector<8x128xf32>
    %413 = arith.addf %412, %11 : vector<8x128xf32>
    %414 = vector.extract_strided_slice %413 {offsets = [0, 0], sizes = [8, 32], strides = [1, 1]} : vector<8x128xf32> to vector<8x32xf32>
    %415 = vector.extract_strided_slice %413 {offsets = [0, 32], sizes = [8, 32], strides = [1, 1]} : vector<8x128xf32> to vector<8x32xf32>
    %416 = vector.extract_strided_slice %413 {offsets = [0, 64], sizes = [8, 32], strides = [1, 1]} : vector<8x128xf32> to vector<8x32xf32>
    %417 = vector.extract_strided_slice %413 {offsets = [0, 96], sizes = [8, 32], strides = [1, 1]} : vector<8x128xf32> to vector<8x32xf32>
    %418 = arith.mulf %415, %404 : vector<8x32xf32>
    %419 = arith.mulf %414, %416 : vector<8x32xf32>
    %420 = arith.addf %418, %419 : vector<8x32xf32>
    %421 = math.tanh %420 : vector<8x32xf32>
    %422 = arith.mulf %417, %421 : vector<8x32xf32>
    %423 = vector.extract_strided_slice %318 {offsets = [48, 0], sizes = [8, 128], strides = [1, 1]} : vector<64x128xf32> to vector<8x128xf32>
    %424 = arith.truncf %422 : vector<8x32xf32> to vector<8x32xbf16>
    %cst_82 = arith.constant dense<0.000000e+00> : vector<8x128xf32>
    %425 = tpu.matmul %424, %324, %cst_82 {dimension_numbers = #tpu.dot_dimension_numbers<[1], [0], [0], [1], [0, 0, 1, 1], [], []>} : vector<8x32xbf16>, vector<32x128xbf16>, vector<8x128xf32> -> vector<8x128xf32>
    %426 = arith.addf %423, %425 : vector<8x128xf32>
    %427 = math.tanh %426 : vector<8x128xf32>
    %428 = arith.mulf %427, %8 : vector<8x128xf32>
    %429 = arith.addf %428, %11 : vector<8x128xf32>
    %430 = vector.extract_strided_slice %429 {offsets = [0, 0], sizes = [8, 32], strides = [1, 1]} : vector<8x128xf32> to vector<8x32xf32>
    %431 = vector.extract_strided_slice %429 {offsets = [0, 32], sizes = [8, 32], strides = [1, 1]} : vector<8x128xf32> to vector<8x32xf32>
    %432 = vector.extract_strided_slice %429 {offsets = [0, 64], sizes = [8, 32], strides = [1, 1]} : vector<8x128xf32> to vector<8x32xf32>
    %433 = vector.extract_strided_slice %429 {offsets = [0, 96], sizes = [8, 32], strides = [1, 1]} : vector<8x128xf32> to vector<8x32xf32>
    %434 = arith.mulf %431, %420 : vector<8x32xf32>
    %435 = arith.mulf %430, %432 : vector<8x32xf32>
    %436 = arith.addf %434, %435 : vector<8x32xf32>
    %437 = math.tanh %436 : vector<8x32xf32>
    %438 = arith.mulf %433, %437 : vector<8x32xf32>
    %439 = vector.extract_strided_slice %318 {offsets = [56, 0], sizes = [8, 128], strides = [1, 1]} : vector<64x128xf32> to vector<8x128xf32>
    %440 = arith.truncf %438 : vector<8x32xf32> to vector<8x32xbf16>
    %cst_83 = arith.constant dense<0.000000e+00> : vector<8x128xf32>
    %441 = tpu.matmul %440, %324, %cst_83 {dimension_numbers = #tpu.dot_dimension_numbers<[1], [0], [0], [1], [0, 0, 1, 1], [], []>} : vector<8x32xbf16>, vector<32x128xbf16>, vector<8x128xf32> -> vector<8x128xf32>
    %442 = arith.addf %439, %441 : vector<8x128xf32>
    %443 = math.tanh %442 : vector<8x128xf32>
    %444 = arith.mulf %443, %8 : vector<8x128xf32>
    %445 = arith.addf %444, %11 : vector<8x128xf32>
    %446 = vector.extract_strided_slice %445 {offsets = [0, 0], sizes = [8, 32], strides = [1, 1]} : vector<8x128xf32> to vector<8x32xf32>
    %447 = vector.extract_strided_slice %445 {offsets = [0, 32], sizes = [8, 32], strides = [1, 1]} : vector<8x128xf32> to vector<8x32xf32>
    %448 = vector.extract_strided_slice %445 {offsets = [0, 64], sizes = [8, 32], strides = [1, 1]} : vector<8x128xf32> to vector<8x32xf32>
    %449 = vector.extract_strided_slice %445 {offsets = [0, 96], sizes = [8, 32], strides = [1, 1]} : vector<8x128xf32> to vector<8x32xf32>
    %450 = arith.mulf %447, %436 : vector<8x32xf32>
    %451 = arith.mulf %446, %448 : vector<8x32xf32>
    %452 = arith.addf %450, %451 : vector<8x32xf32>
    %453 = math.tanh %452 : vector<8x32xf32>
    %454 = arith.mulf %449, %453 : vector<8x32xf32>
    %c1_84 = arith.constant 1 : index
    %c0_85 = arith.constant 0 : index
    %c0_86 = arith.constant 0 : index
    %455 = vector.load %arg10[%c1_84, %c0_85, %c0_86] : memref<2x32x128xbf16, #tpu.memory_space<vmem>>, vector<1x32x128xbf16>
    %456 = vector.shape_cast %455 : vector<1x32x128xbf16> to vector<32x128xbf16>
    %cst_87 = arith.constant 0.000000e+00 : f32
    %457 = vector.broadcast %cst_87 : f32 to vector<8x32xf32>
    %cst_88 = arith.constant 0.000000e+00 : f32
    %458 = vector.broadcast %cst_88 : f32 to vector<8x32xf32>
    %459 = vector.extract_strided_slice %322 {offsets = [56, 0], sizes = [8, 128], strides = [1, 1]} : vector<64x128xf32> to vector<8x128xf32>
    %460 = arith.truncf %457 : vector<8x32xf32> to vector<8x32xbf16>
    %cst_89 = arith.constant dense<0.000000e+00> : vector<8x128xf32>
    %461 = tpu.matmul %460, %456, %cst_89 {dimension_numbers = #tpu.dot_dimension_numbers<[1], [0], [0], [1], [0, 0, 1, 1], [], []>} : vector<8x32xbf16>, vector<32x128xbf16>, vector<8x128xf32> -> vector<8x128xf32>
    %462 = arith.addf %459, %461 : vector<8x128xf32>
    %463 = math.tanh %462 : vector<8x128xf32>
    %464 = arith.mulf %463, %8 : vector<8x128xf32>
    %465 = arith.addf %464, %11 : vector<8x128xf32>
    %466 = vector.extract_strided_slice %465 {offsets = [0, 0], sizes = [8, 32], strides = [1, 1]} : vector<8x128xf32> to vector<8x32xf32>
    %467 = vector.extract_strided_slice %465 {offsets = [0, 32], sizes = [8, 32], strides = [1, 1]} : vector<8x128xf32> to vector<8x32xf32>
    %468 = vector.extract_strided_slice %465 {offsets = [0, 64], sizes = [8, 32], strides = [1, 1]} : vector<8x128xf32> to vector<8x32xf32>
    %469 = vector.extract_strided_slice %465 {offsets = [0, 96], sizes = [8, 32], strides = [1, 1]} : vector<8x128xf32> to vector<8x32xf32>
    %470 = arith.mulf %467, %458 : vector<8x32xf32>
    %471 = arith.mulf %466, %468 : vector<8x32xf32>
    %472 = arith.addf %470, %471 : vector<8x32xf32>
    %473 = math.tanh %472 : vector<8x32xf32>
    %474 = arith.mulf %469, %473 : vector<8x32xf32>
    %475 = vector.extract_strided_slice %322 {offsets = [48, 0], sizes = [8, 128], strides = [1, 1]} : vector<64x128xf32> to vector<8x128xf32>
    %476 = arith.truncf %474 : vector<8x32xf32> to vector<8x32xbf16>
    %cst_90 = arith.constant dense<0.000000e+00> : vector<8x128xf32>
    %477 = tpu.matmul %476, %456, %cst_90 {dimension_numbers = #tpu.dot_dimension_numbers<[1], [0], [0], [1], [0, 0, 1, 1], [], []>} : vector<8x32xbf16>, vector<32x128xbf16>, vector<8x128xf32> -> vector<8x128xf32>
    %478 = arith.addf %475, %477 : vector<8x128xf32>
    %479 = math.tanh %478 : vector<8x128xf32>
    %480 = arith.mulf %479, %8 : vector<8x128xf32>
    %481 = arith.addf %480, %11 : vector<8x128xf32>
    %482 = vector.extract_strided_slice %481 {offsets = [0, 0], sizes = [8, 32], strides = [1, 1]} : vector<8x128xf32> to vector<8x32xf32>
    %483 = vector.extract_strided_slice %481 {offsets = [0, 32], sizes = [8, 32], strides = [1, 1]} : vector<8x128xf32> to vector<8x32xf32>
    %484 = vector.extract_strided_slice %481 {offsets = [0, 64], sizes = [8, 32], strides = [1, 1]} : vector<8x128xf32> to vector<8x32xf32>
    %485 = vector.extract_strided_slice %481 {offsets = [0, 96], sizes = [8, 32], strides = [1, 1]} : vector<8x128xf32> to vector<8x32xf32>
    %486 = arith.mulf %483, %472 : vector<8x32xf32>
    %487 = arith.mulf %482, %484 : vector<8x32xf32>
    %488 = arith.addf %486, %487 : vector<8x32xf32>
    %489 = math.tanh %488 : vector<8x32xf32>
    %490 = arith.mulf %485, %489 : vector<8x32xf32>
    %491 = vector.extract_strided_slice %322 {offsets = [40, 0], sizes = [8, 128], strides = [1, 1]} : vector<64x128xf32> to vector<8x128xf32>
    %492 = arith.truncf %490 : vector<8x32xf32> to vector<8x32xbf16>
    %cst_91 = arith.constant dense<0.000000e+00> : vector<8x128xf32>
    %493 = tpu.matmul %492, %456, %cst_91 {dimension_numbers = #tpu.dot_dimension_numbers<[1], [0], [0], [1], [0, 0, 1, 1], [], []>} : vector<8x32xbf16>, vector<32x128xbf16>, vector<8x128xf32> -> vector<8x128xf32>
    %494 = arith.addf %491, %493 : vector<8x128xf32>
    %495 = math.tanh %494 : vector<8x128xf32>
    %496 = arith.mulf %495, %8 : vector<8x128xf32>
    %497 = arith.addf %496, %11 : vector<8x128xf32>
    %498 = vector.extract_strided_slice %497 {offsets = [0, 0], sizes = [8, 32], strides = [1, 1]} : vector<8x128xf32> to vector<8x32xf32>
    %499 = vector.extract_strided_slice %497 {offsets = [0, 32], sizes = [8, 32], strides = [1, 1]} : vector<8x128xf32> to vector<8x32xf32>
    %500 = vector.extract_strided_slice %497 {offsets = [0, 64], sizes = [8, 32], strides = [1, 1]} : vector<8x128xf32> to vector<8x32xf32>
    %501 = vector.extract_strided_slice %497 {offsets = [0, 96], sizes = [8, 32], strides = [1, 1]} : vector<8x128xf32> to vector<8x32xf32>
    %502 = arith.mulf %499, %488 : vector<8x32xf32>
    %503 = arith.mulf %498, %500 : vector<8x32xf32>
    %504 = arith.addf %502, %503 : vector<8x32xf32>
    %505 = math.tanh %504 : vector<8x32xf32>
    %506 = arith.mulf %501, %505 : vector<8x32xf32>
    %507 = vector.extract_strided_slice %322 {offsets = [32, 0], sizes = [8, 128], strides = [1, 1]} : vector<64x128xf32> to vector<8x128xf32>
    %508 = arith.truncf %506 : vector<8x32xf32> to vector<8x32xbf16>
    %cst_92 = arith.constant dense<0.000000e+00> : vector<8x128xf32>
    %509 = tpu.matmul %508, %456, %cst_92 {dimension_numbers = #tpu.dot_dimension_numbers<[1], [0], [0], [1], [0, 0, 1, 1], [], []>} : vector<8x32xbf16>, vector<32x128xbf16>, vector<8x128xf32> -> vector<8x128xf32>
    %510 = arith.addf %507, %509 : vector<8x128xf32>
    %511 = math.tanh %510 : vector<8x128xf32>
    %512 = arith.mulf %511, %8 : vector<8x128xf32>
    %513 = arith.addf %512, %11 : vector<8x128xf32>
    %514 = vector.extract_strided_slice %513 {offsets = [0, 0], sizes = [8, 32], strides = [1, 1]} : vector<8x128xf32> to vector<8x32xf32>
    %515 = vector.extract_strided_slice %513 {offsets = [0, 32], sizes = [8, 32], strides = [1, 1]} : vector<8x128xf32> to vector<8x32xf32>
    %516 = vector.extract_strided_slice %513 {offsets = [0, 64], sizes = [8, 32], strides = [1, 1]} : vector<8x128xf32> to vector<8x32xf32>
    %517 = vector.extract_strided_slice %513 {offsets = [0, 96], sizes = [8, 32], strides = [1, 1]} : vector<8x128xf32> to vector<8x32xf32>
    %518 = arith.mulf %515, %504 : vector<8x32xf32>
    %519 = arith.mulf %514, %516 : vector<8x32xf32>
    %520 = arith.addf %518, %519 : vector<8x32xf32>
    %521 = math.tanh %520 : vector<8x32xf32>
    %522 = arith.mulf %517, %521 : vector<8x32xf32>
    %523 = vector.extract_strided_slice %322 {offsets = [24, 0], sizes = [8, 128], strides = [1, 1]} : vector<64x128xf32> to vector<8x128xf32>
    %524 = arith.truncf %522 : vector<8x32xf32> to vector<8x32xbf16>
    %cst_93 = arith.constant dense<0.000000e+00> : vector<8x128xf32>
    %525 = tpu.matmul %524, %456, %cst_93 {dimension_numbers = #tpu.dot_dimension_numbers<[1], [0], [0], [1], [0, 0, 1, 1], [], []>} : vector<8x32xbf16>, vector<32x128xbf16>, vector<8x128xf32> -> vector<8x128xf32>
    %526 = arith.addf %523, %525 : vector<8x128xf32>
    %527 = math.tanh %526 : vector<8x128xf32>
    %528 = arith.mulf %527, %8 : vector<8x128xf32>
    %529 = arith.addf %528, %11 : vector<8x128xf32>
    %530 = vector.extract_strided_slice %529 {offsets = [0, 0], sizes = [8, 32], strides = [1, 1]} : vector<8x128xf32> to vector<8x32xf32>
    %531 = vector.extract_strided_slice %529 {offsets = [0, 32], sizes = [8, 32], strides = [1, 1]} : vector<8x128xf32> to vector<8x32xf32>
    %532 = vector.extract_strided_slice %529 {offsets = [0, 64], sizes = [8, 32], strides = [1, 1]} : vector<8x128xf32> to vector<8x32xf32>
    %533 = vector.extract_strided_slice %529 {offsets = [0, 96], sizes = [8, 32], strides = [1, 1]} : vector<8x128xf32> to vector<8x32xf32>
    %534 = arith.mulf %531, %520 : vector<8x32xf32>
    %535 = arith.mulf %530, %532 : vector<8x32xf32>
    %536 = arith.addf %534, %535 : vector<8x32xf32>
    %537 = math.tanh %536 : vector<8x32xf32>
    %538 = arith.mulf %533, %537 : vector<8x32xf32>
    %539 = vector.extract_strided_slice %322 {offsets = [16, 0], sizes = [8, 128], strides = [1, 1]} : vector<64x128xf32> to vector<8x128xf32>
    %540 = arith.truncf %538 : vector<8x32xf32> to vector<8x32xbf16>
    %cst_94 = arith.constant dense<0.000000e+00> : vector<8x128xf32>
    %541 = tpu.matmul %540, %456, %cst_94 {dimension_numbers = #tpu.dot_dimension_numbers<[1], [0], [0], [1], [0, 0, 1, 1], [], []>} : vector<8x32xbf16>, vector<32x128xbf16>, vector<8x128xf32> -> vector<8x128xf32>
    %542 = arith.addf %539, %541 : vector<8x128xf32>
    %543 = math.tanh %542 : vector<8x128xf32>
    %544 = arith.mulf %543, %8 : vector<8x128xf32>
    %545 = arith.addf %544, %11 : vector<8x128xf32>
    %546 = vector.extract_strided_slice %545 {offsets = [0, 0], sizes = [8, 32], strides = [1, 1]} : vector<8x128xf32> to vector<8x32xf32>
    %547 = vector.extract_strided_slice %545 {offsets = [0, 32], sizes = [8, 32], strides = [1, 1]} : vector<8x128xf32> to vector<8x32xf32>
    %548 = vector.extract_strided_slice %545 {offsets = [0, 64], sizes = [8, 32], strides = [1, 1]} : vector<8x128xf32> to vector<8x32xf32>
    %549 = vector.extract_strided_slice %545 {offsets = [0, 96], sizes = [8, 32], strides = [1, 1]} : vector<8x128xf32> to vector<8x32xf32>
    %550 = arith.mulf %547, %536 : vector<8x32xf32>
    %551 = arith.mulf %546, %548 : vector<8x32xf32>
    %552 = arith.addf %550, %551 : vector<8x32xf32>
    %553 = math.tanh %552 : vector<8x32xf32>
    %554 = arith.mulf %549, %553 : vector<8x32xf32>
    %555 = vector.extract_strided_slice %322 {offsets = [8, 0], sizes = [8, 128], strides = [1, 1]} : vector<64x128xf32> to vector<8x128xf32>
    %556 = arith.truncf %554 : vector<8x32xf32> to vector<8x32xbf16>
    %cst_95 = arith.constant dense<0.000000e+00> : vector<8x128xf32>
    %557 = tpu.matmul %556, %456, %cst_95 {dimension_numbers = #tpu.dot_dimension_numbers<[1], [0], [0], [1], [0, 0, 1, 1], [], []>} : vector<8x32xbf16>, vector<32x128xbf16>, vector<8x128xf32> -> vector<8x128xf32>
    %558 = arith.addf %555, %557 : vector<8x128xf32>
    %559 = math.tanh %558 : vector<8x128xf32>
    %560 = arith.mulf %559, %8 : vector<8x128xf32>
    %561 = arith.addf %560, %11 : vector<8x128xf32>
    %562 = vector.extract_strided_slice %561 {offsets = [0, 0], sizes = [8, 32], strides = [1, 1]} : vector<8x128xf32> to vector<8x32xf32>
    %563 = vector.extract_strided_slice %561 {offsets = [0, 32], sizes = [8, 32], strides = [1, 1]} : vector<8x128xf32> to vector<8x32xf32>
    %564 = vector.extract_strided_slice %561 {offsets = [0, 64], sizes = [8, 32], strides = [1, 1]} : vector<8x128xf32> to vector<8x32xf32>
    %565 = vector.extract_strided_slice %561 {offsets = [0, 96], sizes = [8, 32], strides = [1, 1]} : vector<8x128xf32> to vector<8x32xf32>
    %566 = arith.mulf %563, %552 : vector<8x32xf32>
    %567 = arith.mulf %562, %564 : vector<8x32xf32>
    %568 = arith.addf %566, %567 : vector<8x32xf32>
    %569 = math.tanh %568 : vector<8x32xf32>
    %570 = arith.mulf %565, %569 : vector<8x32xf32>
    %571 = vector.extract_strided_slice %322 {offsets = [0, 0], sizes = [8, 128], strides = [1, 1]} : vector<64x128xf32> to vector<8x128xf32>
    %572 = arith.truncf %570 : vector<8x32xf32> to vector<8x32xbf16>
    %cst_96 = arith.constant dense<0.000000e+00> : vector<8x128xf32>
    %573 = tpu.matmul %572, %456, %cst_96 {dimension_numbers = #tpu.dot_dimension_numbers<[1], [0], [0], [1], [0, 0, 1, 1], [], []>} : vector<8x32xbf16>, vector<32x128xbf16>, vector<8x128xf32> -> vector<8x128xf32>
    %574 = arith.addf %571, %573 : vector<8x128xf32>
    %575 = math.tanh %574 : vector<8x128xf32>
    %576 = arith.mulf %575, %8 : vector<8x128xf32>
    %577 = arith.addf %576, %11 : vector<8x128xf32>
    %578 = vector.extract_strided_slice %577 {offsets = [0, 0], sizes = [8, 32], strides = [1, 1]} : vector<8x128xf32> to vector<8x32xf32>
    %579 = vector.extract_strided_slice %577 {offsets = [0, 32], sizes = [8, 32], strides = [1, 1]} : vector<8x128xf32> to vector<8x32xf32>
    %580 = vector.extract_strided_slice %577 {offsets = [0, 64], sizes = [8, 32], strides = [1, 1]} : vector<8x128xf32> to vector<8x32xf32>
    %581 = vector.extract_strided_slice %577 {offsets = [0, 96], sizes = [8, 32], strides = [1, 1]} : vector<8x128xf32> to vector<8x32xf32>
    %582 = arith.mulf %579, %568 : vector<8x32xf32>
    %583 = arith.mulf %578, %580 : vector<8x32xf32>
    %584 = arith.addf %582, %583 : vector<8x32xf32>
    %585 = math.tanh %584 : vector<8x32xf32>
    %586 = arith.mulf %581, %585 : vector<8x32xf32>
    %587 = tpu.iota {dimensions = array<i32: 1>} : vector<8x20xi32>
    %c0_i32 = arith.constant 0 : i32
    %588 = vector.broadcast %c0_i32 : i32 to vector<8x20xi32>
    %c0_i32_97 = arith.constant 0 : i32
    %589 = vector.broadcast %c0_i32_97 : i32 to vector<8x20xi32>
    %c0_98 = arith.constant 0 : index
    %c0_99 = arith.constant 0 : index
    %590 = vector.load %arg0[%c0_98, %c0_99] : memref<8x8xi32, #tpu.memory_space<vmem>>, vector<8x1xi32>
    %591 = vector.broadcast %590 : vector<8x1xi32> to vector<8x20xi32>
    %592 = arith.cmpi eq, %591, %587 : vector<8x20xi32>
    %593 = arith.extui %592 : vector<8x20xi1> to vector<8x20xi32>
    %594 = arith.addi %588, %593 : vector<8x20xi32>
    %c0_100 = arith.constant 0 : index
    %c0_101 = arith.constant 0 : index
    %595 = vector.load %arg1[%c0_100, %c0_101] : memref<8x8xi32, #tpu.memory_space<vmem>>, vector<8x1xi32>
    %596 = vector.broadcast %595 : vector<8x1xi32> to vector<8x20xi32>
    %597 = arith.cmpi eq, %596, %587 : vector<8x20xi32>
    %598 = arith.extui %597 : vector<8x20xi1> to vector<8x20xi32>
    %599 = arith.addi %589, %598 : vector<8x20xi32>
    %c0_102 = arith.constant 0 : index
    %c1_103 = arith.constant 1 : index
    %600 = vector.load %arg0[%c0_102, %c1_103] : memref<8x8xi32, #tpu.memory_space<vmem>>, vector<8x1xi32>
    %601 = vector.broadcast %600 : vector<8x1xi32> to vector<8x20xi32>
    %602 = arith.cmpi eq, %601, %587 : vector<8x20xi32>
    %603 = arith.extui %602 : vector<8x20xi1> to vector<8x20xi32>
    %604 = arith.addi %594, %603 : vector<8x20xi32>
    %c0_104 = arith.constant 0 : index
    %c1_105 = arith.constant 1 : index
    %605 = vector.load %arg1[%c0_104, %c1_105] : memref<8x8xi32, #tpu.memory_space<vmem>>, vector<8x1xi32>
    %606 = vector.broadcast %605 : vector<8x1xi32> to vector<8x20xi32>
    %607 = arith.cmpi eq, %606, %587 : vector<8x20xi32>
    %608 = arith.extui %607 : vector<8x20xi1> to vector<8x20xi32>
    %609 = arith.addi %599, %608 : vector<8x20xi32>
    %c0_106 = arith.constant 0 : index
    %c2_107 = arith.constant 2 : index
    %610 = vector.load %arg0[%c0_106, %c2_107] : memref<8x8xi32, #tpu.memory_space<vmem>>, vector<8x1xi32>
    %611 = vector.broadcast %610 : vector<8x1xi32> to vector<8x20xi32>
    %612 = arith.cmpi eq, %611, %587 : vector<8x20xi32>
    %613 = arith.extui %612 : vector<8x20xi1> to vector<8x20xi32>
    %614 = arith.addi %604, %613 : vector<8x20xi32>
    %c0_108 = arith.constant 0 : index
    %c2_109 = arith.constant 2 : index
    %615 = vector.load %arg1[%c0_108, %c2_109] : memref<8x8xi32, #tpu.memory_space<vmem>>, vector<8x1xi32>
    %616 = vector.broadcast %615 : vector<8x1xi32> to vector<8x20xi32>
    %617 = arith.cmpi eq, %616, %587 : vector<8x20xi32>
    %618 = arith.extui %617 : vector<8x20xi1> to vector<8x20xi32>
    %619 = arith.addi %609, %618 : vector<8x20xi32>
    %c0_110 = arith.constant 0 : index
    %c3_111 = arith.constant 3 : index
    %620 = vector.load %arg0[%c0_110, %c3_111] : memref<8x8xi32, #tpu.memory_space<vmem>>, vector<8x1xi32>
    %621 = vector.broadcast %620 : vector<8x1xi32> to vector<8x20xi32>
    %622 = arith.cmpi eq, %621, %587 : vector<8x20xi32>
    %623 = arith.extui %622 : vector<8x20xi1> to vector<8x20xi32>
    %624 = arith.addi %614, %623 : vector<8x20xi32>
    %c0_112 = arith.constant 0 : index
    %c3_113 = arith.constant 3 : index
    %625 = vector.load %arg1[%c0_112, %c3_113] : memref<8x8xi32, #tpu.memory_space<vmem>>, vector<8x1xi32>
    %626 = vector.broadcast %625 : vector<8x1xi32> to vector<8x20xi32>
    %627 = arith.cmpi eq, %626, %587 : vector<8x20xi32>
    %628 = arith.extui %627 : vector<8x20xi1> to vector<8x20xi32>
    %629 = arith.addi %619, %628 : vector<8x20xi32>
    %c0_114 = arith.constant 0 : index
    %c4 = arith.constant 4 : index
    %630 = vector.load %arg0[%c0_114, %c4] : memref<8x8xi32, #tpu.memory_space<vmem>>, vector<8x1xi32>
    %631 = vector.broadcast %630 : vector<8x1xi32> to vector<8x20xi32>
    %632 = arith.cmpi eq, %631, %587 : vector<8x20xi32>
    %633 = arith.extui %632 : vector<8x20xi1> to vector<8x20xi32>
    %634 = arith.addi %624, %633 : vector<8x20xi32>
    %c0_115 = arith.constant 0 : index
    %c4_116 = arith.constant 4 : index
    %635 = vector.load %arg1[%c0_115, %c4_116] : memref<8x8xi32, #tpu.memory_space<vmem>>, vector<8x1xi32>
    %636 = vector.broadcast %635 : vector<8x1xi32> to vector<8x20xi32>
    %637 = arith.cmpi eq, %636, %587 : vector<8x20xi32>
    %638 = arith.extui %637 : vector<8x20xi1> to vector<8x20xi32>
    %639 = arith.addi %629, %638 : vector<8x20xi32>
    %c0_117 = arith.constant 0 : index
    %c5 = arith.constant 5 : index
    %640 = vector.load %arg0[%c0_117, %c5] : memref<8x8xi32, #tpu.memory_space<vmem>>, vector<8x1xi32>
    %641 = vector.broadcast %640 : vector<8x1xi32> to vector<8x20xi32>
    %642 = arith.cmpi eq, %641, %587 : vector<8x20xi32>
    %643 = arith.extui %642 : vector<8x20xi1> to vector<8x20xi32>
    %644 = arith.addi %634, %643 : vector<8x20xi32>
    %c0_118 = arith.constant 0 : index
    %c5_119 = arith.constant 5 : index
    %645 = vector.load %arg1[%c0_118, %c5_119] : memref<8x8xi32, #tpu.memory_space<vmem>>, vector<8x1xi32>
    %646 = vector.broadcast %645 : vector<8x1xi32> to vector<8x20xi32>
    %647 = arith.cmpi eq, %646, %587 : vector<8x20xi32>
    %648 = arith.extui %647 : vector<8x20xi1> to vector<8x20xi32>
    %649 = arith.addi %639, %648 : vector<8x20xi32>
    %c0_120 = arith.constant 0 : index
    %c6 = arith.constant 6 : index
    %650 = vector.load %arg0[%c0_120, %c6] : memref<8x8xi32, #tpu.memory_space<vmem>>, vector<8x1xi32>
    %651 = vector.broadcast %650 : vector<8x1xi32> to vector<8x20xi32>
    %652 = arith.cmpi eq, %651, %587 : vector<8x20xi32>
    %653 = arith.extui %652 : vector<8x20xi1> to vector<8x20xi32>
    %654 = arith.addi %644, %653 : vector<8x20xi32>
    %c0_121 = arith.constant 0 : index
    %c6_122 = arith.constant 6 : index
    %655 = vector.load %arg1[%c0_121, %c6_122] : memref<8x8xi32, #tpu.memory_space<vmem>>, vector<8x1xi32>
    %656 = vector.broadcast %655 : vector<8x1xi32> to vector<8x20xi32>
    %657 = arith.cmpi eq, %656, %587 : vector<8x20xi32>
    %658 = arith.extui %657 : vector<8x20xi1> to vector<8x20xi32>
    %659 = arith.addi %649, %658 : vector<8x20xi32>
    %c0_123 = arith.constant 0 : index
    %c7 = arith.constant 7 : index
    %660 = vector.load %arg0[%c0_123, %c7] : memref<8x8xi32, #tpu.memory_space<vmem>>, vector<8x1xi32>
    %661 = vector.broadcast %660 : vector<8x1xi32> to vector<8x20xi32>
    %662 = arith.cmpi eq, %661, %587 : vector<8x20xi32>
    %663 = arith.extui %662 : vector<8x20xi1> to vector<8x20xi32>
    %664 = arith.addi %654, %663 : vector<8x20xi32>
    %c0_124 = arith.constant 0 : index
    %c7_125 = arith.constant 7 : index
    %665 = vector.load %arg1[%c0_124, %c7_125] : memref<8x8xi32, #tpu.memory_space<vmem>>, vector<8x1xi32>
    %666 = vector.broadcast %665 : vector<8x1xi32> to vector<8x20xi32>
    %667 = arith.cmpi eq, %666, %587 : vector<8x20xi32>
    %668 = arith.extui %667 : vector<8x20xi1> to vector<8x20xi32>
    %669 = arith.addi %659, %668 : vector<8x20xi32>
    %670 = arith.sitofp %664 : vector<8x20xi32> to vector<8x20xf32>
    %c0_126 = arith.constant 0 : index
    %c0_127 = arith.constant 0 : index
    %671 = vector.load %arg5[%c0_126, %c0_127] : memref<20x32xf32, #tpu.memory_space<vmem>>, vector<20x32xf32>
    %cst_128 = arith.constant dense<0.000000e+00> : vector<8x32xf32>
    %672 = tpu.matmul %670, %671, %cst_128 {dimension_numbers = #tpu.dot_dimension_numbers<[1], [0], [0], [1], [0, 0, 1, 1], [], []>} : vector<8x20xf32>, vector<20x32xf32>, vector<8x32xf32> -> vector<8x32xf32>
    %673 = arith.sitofp %669 : vector<8x20xi32> to vector<8x20xf32>
    %c0_129 = arith.constant 0 : index
    %c0_130 = arith.constant 0 : index
    %674 = vector.load %arg5[%c0_129, %c0_130] : memref<20x32xf32, #tpu.memory_space<vmem>>, vector<20x32xf32>
    %cst_131 = arith.constant dense<0.000000e+00> : vector<8x32xf32>
    %675 = tpu.matmul %673, %674, %cst_131 {dimension_numbers = #tpu.dot_dimension_numbers<[1], [0], [0], [1], [0, 0, 1, 1], [], []>} : vector<8x20xf32>, vector<20x32xf32>, vector<8x32xf32> -> vector<8x32xf32>
    %676 = tpu.concatenate %454, %586, %672, %675 in 1 : vector<8x32xf32>, vector<8x32xf32>, vector<8x32xf32>, vector<8x32xf32> -> vector<8x128xf32>
    %677 = arith.truncf %676 : vector<8x128xf32> to vector<8x128xbf16>
    %c0_132 = arith.constant 0 : index
    %c0_133 = arith.constant 0 : index
    %678 = vector.load %arg12[%c0_132, %c0_133] : memref<128x64xbf16, #tpu.memory_space<vmem>>, vector<128x64xbf16>
    %cst_134 = arith.constant dense<0.000000e+00> : vector<8x64xf32>
    %679 = tpu.matmul %677, %678, %cst_134 {dimension_numbers = #tpu.dot_dimension_numbers<[1], [0], [0], [1], [0, 0, 1, 1], [], []>} : vector<8x128xbf16>, vector<128x64xbf16>, vector<8x64xf32> -> vector<8x64xf32>
    %c0_135 = arith.constant 0 : index
    %c0_136 = arith.constant 0 : index
    %680 = vector.load %arg13[%c0_135, %c0_136] : memref<1x64xf32, #tpu.memory_space<vmem>>, vector<1x64xf32>
    %681 = vector.broadcast %680 : vector<1x64xf32> to vector<8x64xf32>
    %682 = arith.addf %679, %681 : vector<8x64xf32>
    %683 = tpu.iota {dimensions = array<i32: 0>} : vector<8x8xi32>
    %c0_137 = arith.constant 0 : index
    %c0_138 = arith.constant 0 : index
    %684 = vector.load %arg3[%c0_137, %c0_138] : memref<1x8xi32, #tpu.memory_space<vmem>>, vector<1x8xi32>
    %685 = vector.broadcast %684 : vector<1x8xi32> to vector<8x8xi32>
    %686 = arith.cmpi eq, %685, %683 : vector<8x8xi32>
    %687 = arith.extui %686 : vector<8x8xi1> to vector<8x8xi32>
    %688 = arith.sitofp %687 : vector<8x8xi32> to vector<8x8xf32>
    %cst_139 = arith.constant dense<0.000000e+00> : vector<8x64xf32>
    %689 = tpu.matmul %688, %682, %cst_139 {dimension_numbers = #tpu.dot_dimension_numbers<[1], [0], [0], [1], [0, 0, 1, 1], [], []>} : vector<8x8xf32>, vector<8x64xf32>, vector<8x64xf32> -> vector<8x64xf32>
    %c0_140 = arith.constant 0 : index
    %c0_141 = arith.constant 0 : index
    %690 = vector.load %arg14[%c0_140, %c0_141] : memref<8x64xf32, #tpu.memory_space<vmem>>, vector<8x64xf32>
    tpu.vector_store %arg14[%c0_140, %c0_141], %689 {strides = array<i32>} : memref<8x64xf32, #tpu.memory_space<vmem>>, vector<8x64xf32>,
    %c0_142 = arith.constant 0 : index
    %c0_143 = arith.constant 0 : index
    %691 = vector.load %arg4[%c0_142, %c0_143] : memref<2x8xf32, #tpu.memory_space<vmem>>, vector<2x8xf32>
    %cst_144 = arith.constant dense<0.000000e+00> : vector<2x64xf32>
    %692 = tpu.matmul %691, %689, %cst_144 {dimension_numbers = #tpu.dot_dimension_numbers<[1], [0], [0], [1], [0, 0, 1, 1], [], []>} : vector<2x8xf32>, vector<8x64xf32>, vector<2x64xf32> -> vector<2x64xf32>
    %c0_145 = arith.constant 0 : index
    %c0_146 = arith.constant 0 : index
    %693 = vector.load %arg15[%c0_145, %c0_146] : memref<2x64xf32, #tpu.memory_space<vmem>>, vector<2x64xf32>
    tpu.vector_store %arg15[%c0_145, %c0_146], %692 {strides = array<i32>} : memref<2x64xf32, #tpu.memory_space<vmem>>, vector<2x64xf32>,
    return
  }
}

</mosaic_0001>

<llo_original>
// kernel: tpu_custom_call.1
$region0: #{tpu_custom_call.1}
  #allocation0 [shape = 'u32[]', space=smem, size = 0x4, offset = 0x4, fixed_abs, tag = 'smem constant byte address 0x4 - core index']
  #allocation1 [shape = 'u32[144,128]{1,0:T(1,128)}', space=vmem, size = 0x12000, scoped, tag = 'internal scratch']
  #allocation2 [shape = 'f32[64,64]{1,0:T(8,128)}', space=vmem, size = 0x8000, scoped, tag = 'scratch operand']
  %s0 = inlined_call_operand.hbm [shape: s32[8,8], index: 0, kind: input, shape index: {}]
  %s1 = inlined_call_operand.hbm [shape: s32[8,8], index: 1, kind: input, shape index: {}]
  %s2 = inlined_call_operand.vmem [shape: s32[64,1], index: 2, kind: input, shape index: {}]
  %s3 = inlined_call_operand.hbm [shape: s32[1,8], index: 3, kind: input, shape index: {}]
  %s4 = inlined_call_operand.vmem [shape: f32[2,8], index: 4, kind: input, shape index: {}]
  %s5 = inlined_call_operand.hbm [shape: f32[20,32], index: 5, kind: input, shape index: {}]
  %s6 = inlined_call_operand.hbm [shape: f32[16,32], index: 6, kind: input, shape index: {}]
  %s7 = inlined_call_operand.vmem [shape: bf16[32,256], index: 7, kind: input, shape index: {}]
  %s8 = inlined_call_operand.vmem [shape: bf16[2,32,128], index: 8, kind: input, shape index: {}]
  %s9 = inlined_call_operand.vmem [shape: bf16[64,256], index: 9, kind: input, shape index: {}]
  %s10 = inlined_call_operand.hbm [shape: bf16[2,32,128], index: 10, kind: input, shape index: {}]
  %s11 = inlined_call_operand.vmem [shape: f32[4,128], index: 11, kind: input, shape index: {}]
  %s12 = inlined_call_operand.vmem [shape: bf16[128,64], index: 12, kind: input, shape index: {}]
  %s13 = inlined_call_operand.vmem [shape: f32[1,64], index: 13, kind: input, shape index: {}]
  %s14 = inlined_call_operand.hbm [shape: f32[8,64], index: 14, kind: output, shape index: {0}]
  %s15 = inlined_call_operand.hbm [shape: f32[2,64], index: 15, kind: output, shape index: {1}]
  %16 = xla_tuple %s14, %s15
  %s17 = sld [smem:[#allocation0]]
  $region98: #{tpu_custom_call.1} parent=0
    _
  %s19 = ssub.s32 1, %s17
  %s20 = scalar_select 0, %s19, %s17
  $region1: #{tpu_custom_call.1} parent=0
    #allocation3 [shape = 'u8[4096]{0}', space=vmem, size = 0x1000, scoped, tag = 'input window, operand 0, single buffered']
    #allocation4 [shape = 's32[1]{0}', space=sflag, size = 0x4, scoped, tag = 'scoped memory for tpu_custom_call.1']
    #allocation5 [shape = 's32[1]{0}', space=sflag, size = 0x4, scoped, tag = 'scoped memory for tpu_custom_call.1']
    #allocation6 [shape = 'u8[4096]{0}', space=vmem, size = 0x1000, scoped, tag = 'input window, operand 1, single buffered']
    #allocation7 [shape = 's32[1]{0}', space=sflag, size = 0x4, scoped, tag = 'scoped memory for tpu_custom_call.1']
    #allocation8 [shape = 'u8[512]{0}', space=vmem, size = 0x400, scoped, tag = 'input window, operand 3, single buffered']
    #allocation9 [shape = 'u8[12288]{0}', space=vmem, size = 0x3000, scoped, tag = 'input window, operand 5, single buffered']
    #allocation10 [shape = 's32[1]{0}', space=sflag, size = 0x4, scoped, tag = 'scoped memory for tpu_custom_call.1']
    #allocation11 [shape = 'u8[8192]{0}', space=vmem, size = 0x2000, scoped, tag = 'input window, operand 6, single buffered']
    #allocation12 [shape = 'u8[16384]{0}', space=vmem, size = 0x4000, scoped, tag = 'input window, operand 10, single buffered']
    #allocation13 [shape = 's32[1]{0}', space=sflag, size = 0x4, scoped, tag = 'scoped memory for tpu_custom_call.1']
    #allocation14 [shape = 'u8[4096]{0}', space=vmem, size = 0x1000, scoped, tag = 'output window, operand 0, single buffered']
    #allocation15 [shape = 'u8[1024]{0}', space=vmem, size = 0x400, scoped, tag = 'output window, operand 1, single buffered']
    #allocation16 [shape = 's32[1]{0}', space=sflag, size = 0x4, scoped, tag = 'scoped memory for tpu_custom_call.1']
    %21 = vsyncpa [#allocation4], 0
    %22 = vsyncpa [#allocation7], 0
    %23 = vsyncpa [#allocation10], 0
    %24 = vsyncpa [#allocation13], 0
    %25 = vsyncpa [#allocation5], 0
    %26 = vsyncpa [#allocation16], 0
    // Predicated region
    $region2: #{tpu_custom_call.1} parent=1 // pred_check
      _
    $region3: #{tpu_custom_call.1} parent=1 // pred_check_branch
      %28 = sbr.rel (0) target = $region5
    $region4: #{tpu_custom_call.1} parent=1 // pred_region
      %s30 = ssub.s32 128, 128
      %31 = vsyncadd [#allocation4], %s30
      %s33 = sshll.u32 [#allocation3], 4
      %s34 = int_to_ptr.vmem [resolvable:$true] %s33
      %36 = dma.hbm_to_vmem [thread:$0]  %s0, 128, %s34, [#allocation4]
    $region5: #{tpu_custom_call.1} parent=1 // pred_fallthru
      _
    // Predicated region
    $region6: #{tpu_custom_call.1} parent=1 // pred_check
      _
    $region7: #{tpu_custom_call.1} parent=1 // pred_check_branch
      %38 = sbr.rel (0) target = $region9
    $region8: #{tpu_custom_call.1} parent=1 // pred_region
      %s40 = ssub.s32 128, 128
      %41 = vsyncadd [#allocation7], %s40
      %s43 = sshll.u32 [#allocation6], 4
      %s44 = int_to_ptr.vmem [resolvable:$true] %s43
      %46 = dma.hbm_to_vmem [thread:$0]  %s1, 128, %s44, [#allocation7]
    $region9: #{tpu_custom_call.1} parent=1 // pred_fallthru
      _
    // Predicated region
    $region10: #{tpu_custom_call.1} parent=1 // pred_check
      _
    $region11: #{tpu_custom_call.1} parent=1 // pred_check_branch
      %48 = sbr.rel (0) target = $region13
    $region12: #{tpu_custom_call.1} parent=1 // pred_region
      _
    $region13: #{tpu_custom_call.1} parent=1 // pred_fallthru
      _
    // Predicated region
    $region14: #{tpu_custom_call.1} parent=1 // pred_check
      _
    $region15: #{tpu_custom_call.1} parent=1 // pred_check_branch
      %50 = sbr.rel (0) target = $region17
    $region16: #{tpu_custom_call.1} parent=1 // pred_region
      %s52 = ssub.s32 16, 16
      %53 = vsyncadd [#allocation7], %s52
      %s55 = sshll.u32 [#allocation8], 4
      %s56 = int_to_ptr.vmem [resolvable:$true] %s55
      %58 = dma.hbm_to_vmem [thread:$0]  %s3, 16, %s56, [#allocation7]
    $region17: #{tpu_custom_call.1} parent=1 // pred_fallthru
      _
    // Predicated region
    $region18: #{tpu_custom_call.1} parent=1 // pred_check
      _
    $region19: #{tpu_custom_call.1} parent=1 // pred_check_branch
      %60 = sbr.rel (0) target = $region21
    $region20: #{tpu_custom_call.1} parent=1 // pred_region
      _
    $region21: #{tpu_custom_call.1} parent=1 // pred_fallthru
      _
    // Predicated region
    $region22: #{tpu_custom_call.1} parent=1 // pred_check
      _
    $region23: #{tpu_custom_call.1} parent=1 // pred_check_branch
      %62 = sbr.rel (0) target = $region25
    $region24: #{tpu_custom_call.1} parent=1 // pred_region
      %s64 = ssub.s32 384, 384
      %65 = vsyncadd [#allocation10], %s64
      %s66 = sshll.u32 [#allocation9], 4
      %s67 = int_to_ptr.vmem [resolvable:$true] %s66
      %72 = dma.hbm_to_vmem [thread:$0]  %s5, 384, %s67, [#allocation10], 128, 128, 8
    $region25: #{tpu_custom_call.1} parent=1 // pred_fallthru
      _
    // Predicated region
    $region26: #{tpu_custom_call.1} parent=1 // pred_check
      _
    $region27: #{tpu_custom_call.1} parent=1 // pred_check_branch
      %74 = sbr.rel (0) target = $region29
    $region28: #{tpu_custom_call.1} parent=1 // pred_region
      %s76 = ssub.s32 256, 256
      %77 = vsyncadd [#allocation10], %s76
      %s78 = sshll.u32 [#allocation11], 4
      %s79 = int_to_ptr.vmem [resolvable:$true] %s78
      %84 = dma.hbm_to_vmem [thread:$0]  %s6, 256, %s79, [#allocation10], 128, 128, 8
    $region29: #{tpu_custom_call.1} parent=1 // pred_fallthru
      _
    // Predicated region
    $region30: #{tpu_custom_call.1} parent=1 // pred_check
      _
    $region31: #{tpu_custom_call.1} parent=1 // pred_check_branch
      %86 = sbr.rel (0) target = $region33
    $region32: #{tpu_custom_call.1} parent=1 // pred_region
      _
    $region33: #{tpu_custom_call.1} parent=1 // pred_fallthru
      _
    // Predicated region
    $region34: #{tpu_custom_call.1} parent=1 // pred_check
      _
    $region35: #{tpu_custom_call.1} parent=1 // pred_check_branch
      %88 = sbr.rel (0) target = $region37
    $region36: #{tpu_custom_call.1} parent=1 // pred_region
      _
    $region37: #{tpu_custom_call.1} parent=1 // pred_fallthru
      _
    // Predicated region
    $region38: #{tpu_custom_call.1} parent=1 // pred_check
      _
    $region39: #{tpu_custom_call.1} parent=1 // pred_check_branch
      %90 = sbr.rel (0) target = $region41
    $region40: #{tpu_custom_call.1} parent=1 // pred_region
      _
    $region41: #{tpu_custom_call.1} parent=1 // pred_fallthru
      _
    // Predicated region
    $region42: #{tpu_custom_call.1} parent=1 // pred_check
      _
    $region43: #{tpu_custom_call.1} parent=1 // pred_check_branch
      %92 = sbr.rel (0) target = $region45
    $region44: #{tpu_custom_call.1} parent=1 // pred_region
      %s94 = ssub.s32 512, 512
      %95 = vsyncadd [#allocation13], %s94
      %s96 = sshll.u32 [#allocation12], 4
      %s97 = int_to_ptr.vmem [resolvable:$true] %s96
      %102 = dma.hbm_to_vmem [thread:$0]  %s10, 512, %s97, [#allocation13], 64, 64, 4
    $region45: #{tpu_custom_call.1} parent=1 // pred_fallthru
      _
    // Predicated region
    $region46: #{tpu_custom_call.1} parent=1 // pred_check
      _
    $region47: #{tpu_custom_call.1} parent=1 // pred_check_branch
      %104 = sbr.rel (0) target = $region49
    $region48: #{tpu_custom_call.1} parent=1 // pred_region
      _
    $region49: #{tpu_custom_call.1} parent=1 // pred_fallthru
      _
    // Predicated region
    $region50: #{tpu_custom_call.1} parent=1 // pred_check
      _
    $region51: #{tpu_custom_call.1} parent=1 // pred_check_branch
      %106 = sbr.rel (0) target = $region53
    $region52: #{tpu_custom_call.1} parent=1 // pred_region
      _
    $region53: #{tpu_custom_call.1} parent=1 // pred_fallthru
      _
    // Predicated region
    $region54: #{tpu_custom_call.1} parent=1 // pred_check
      _
    $region55: #{tpu_custom_call.1} parent=1 // pred_check_branch
      %108 = sbr.rel (0) target = $region57
    $region56: #{tpu_custom_call.1} parent=1 // pred_region
      _
    $region57: #{tpu_custom_call.1} parent=1 // pred_fallthru
      _
    // Predicated region
    $region58: #{tpu_custom_call.1} parent=1 // pred_check
      _
    $region59: #{tpu_custom_call.1} parent=1 // pred_check_branch
      %110 = sbr.rel (0) target = $region61
    $region60: #{tpu_custom_call.1} parent=1 // pred_region
      %111 = dma.done [#allocation4], 128
    $region61: #{tpu_custom_call.1} parent=1 // pred_fallthru
      _
    // Predicated region
    $region62: #{tpu_custom_call.1} parent=1 // pred_check
      _
    $region63: #{tpu_custom_call.1} parent=1 // pred_check_branch
      %113 = sbr.rel (0) target = $region65
    $region64: #{tpu_custom_call.1} parent=1 // pred_region
      %114 = dma.done [#allocation7], 128
    $region65: #{tpu_custom_call.1} parent=1 // pred_fallthru
      _
    // Predicated region
    $region66: #{tpu_custom_call.1} parent=1 // pred_check
      _
    $region67: #{tpu_custom_call.1} parent=1 // pred_check_branch
      %116 = sbr.rel (0) target = $region69
    $region68: #{tpu_custom_call.1} parent=1 // pred_region
      %117 = dma.done [#allocation7], 16
    $region69: #{tpu_custom_call.1} parent=1 // pred_fallthru
      _
    // Predicated region
    $region70: #{tpu_custom_call.1} parent=1 // pred_check
      _
    $region71: #{tpu_custom_call.1} parent=1 // pred_check_branch
      %119 = sbr.rel (0) target = $region73
    $region72: #{tpu_custom_call.1} parent=1 // pred_region
      %120 = dma.done [#allocation10], 384
    $region73: #{tpu_custom_call.1} parent=1 // pred_fallthru
      _
    // Predicated region
    $region74: #{tpu_custom_call.1} parent=1 // pred_check
      _
    $region75: #{tpu_custom_call.1} parent=1 // pred_check_branch
      %122 = sbr.rel (0) target = $region77
    $region76: #{tpu_custom_call.1} parent=1 // pred_region
      %123 = dma.done [#allocation10], 256
    $region77: #{tpu_custom_call.1} parent=1 // pred_fallthru
      _
    // Predicated region
    $region78: #{tpu_custom_call.1} parent=1 // pred_check
      _
    $region79: #{tpu_custom_call.1} parent=1 // pred_check_branch
      %125 = sbr.rel (0) target = $region81
    $region80: #{tpu_custom_call.1} parent=1 // pred_region
      %126 = dma.done [#allocation13], 512
    $region81: #{tpu_custom_call.1} parent=1 // pred_fallthru
      _
    %v128 = vlaneseq
    %v129 = vand.u32 %v128, 127
    %vm130 = vcmp.ge.s32.totalorder %v129, 64
    %vm131 = vcmp.lt.s32.totalorder %v129, 96
    %vm132 = vmand %vm130, %vm131
    %v133 = vsel %vm132, 1.0, 0.5
    %v134 = vsel %vm132, 0.0, 0.5
    %v135 = vld [vmem:[%s2] sm:$0xff]
    %v136 = vld [vmem:[%s2 + $0x8] sm:$0xff]
    %v137 = vld [vmem:[%s2 + $0x10] sm:$0xff]
    %v138 = vld [vmem:[%s2 + $0x18] sm:$0xff]
    %v139 = vld [vmem:[%s2 + $0x20] sm:$0xff]
    %v140 = vld [vmem:[%s2 + $0x28] sm:$0xff]
    %v141 = vld [vmem:[%s2 + $0x30] sm:$0xff]
    %v142 = vld [vmem:[%s2 + $0x38] sm:$0xff]
    %143 = vset.pattern.permute.xlu0 0
    %144 = vperm.xlu0 %143, %v135
    %v145 = vpop.permute.xlu0 %144
    %146 = vset.pattern.permute.xlu0 0
    %147 = vperm.xlu0 %146, %v136
    %v148 = vpop.permute.xlu0 %147
    %149 = vset.pattern.permute.xlu0 0
    %150 = vperm.xlu0 %149, %v137
    %v151 = vpop.permute.xlu0 %150
    %152 = vset.pattern.permute.xlu0 0
    %153 = vperm.xlu0 %152, %v138
    %v154 = vpop.permute.xlu0 %153
    %155 = vset.pattern.permute.xlu0 0
    %156 = vperm.xlu0 %155, %v139
    %v157 = vpop.permute.xlu0 %156
    %158 = vset.pattern.permute.xlu0 0
    %159 = vperm.xlu0 %158, %v140
    %v160 = vpop.permute.xlu0 %159
    %161 = vset.pattern.permute.xlu0 0
    %162 = vperm.xlu0 %161, %v141
    %v163 = vpop.permute.xlu0 %162
    %164 = vset.pattern.permute.xlu0 0
    %165 = vperm.xlu0 %164, %v142
    %v166 = vpop.permute.xlu0 %165
    %vm167 = vcmp.eq.s32.totalorder %v145, %v129
    %vm168 = vcmp.eq.s32.totalorder %v148, %v129
    %vm169 = vcmp.eq.s32.totalorder %v151, %v129
    %vm170 = vcmp.eq.s32.totalorder %v154, %v129
    %vm171 = vcmp.eq.s32.totalorder %v157, %v129
    %vm172 = vcmp.eq.s32.totalorder %v160, %v129
    %vm173 = vcmp.eq.s32.totalorder %v163, %v129
    %vm174 = vcmp.eq.s32.totalorder %v166, %v129
    %v175 = vsel %vm167, 1, 0
    %v176 = vsel %vm168, 1, 0
    %v177 = vsel %vm169, 1, 0
    %v178 = vsel %vm170, 1, 0
    %v179 = vsel %vm171, 1, 0
    %v180 = vsel %vm172, 1, 0
    %v181 = vsel %vm173, 1, 0
    %v182 = vsel %vm174, 1, 0
    %v183 = vcvt.s32.f32 %v175
    %v184 = vcvt.s32.f32 %v176
    %v185 = vcvt.s32.f32 %v177
    %v186 = vcvt.s32.f32 %v178
    %v187 = vcvt.s32.f32 %v179
    %v188 = vcvt.s32.f32 %v180
    %v189 = vcvt.s32.f32 %v181
    %v190 = vcvt.s32.f32 %v182
    %v191 = vld [vmem:[#allocation11] sm:$0xff]
    %v192 = vld [vmem:[#allocation11 + $0x8] sm:$0xff]
    %vm193 = vcmask 130048
    %v195 = vsel %vm193, %v183, 0
    %v198 = vsel %vm193, %v184, 0
    %v201 = vsel %vm193, %v185, 0
    %v204 = vsel %vm193, %v186, 0
    %v207 = vsel %vm193, %v187, 0
    %v210 = vsel %vm193, %v188, 0
    %v213 = vsel %vm193, %v189, 0
    %v216 = vsel %vm193, %v190, 0
    %218 = vmatprep.subr.mxu0 0.0
    %219 = vmatpush1.msra.mxu0 0.0
    %220 = vmatprep.subr.mxu0 0.0
    %221 = vmatpush1.msra.mxu0 0.0
    %222 = vmatprep.subr.mxu0 0.0
    %223 = vmatpush1.msra.mxu0 0.0
    %224 = vmatprep.subr.mxu0 0.0
    %225 = vmatpush1.msra.mxu0 0.0
    %226 = vmatprep.subr.mxu0 0.0
    %227 = vmatpush1.msra.mxu0 0.0
    %228 = vmatprep.subr.mxu0 0.0
    %229 = vmatpush1.msra.mxu0 0.0
    %230 = vmatprep.subr.mxu0 0.0
    %231 = vmatpush1.msra.mxu0 0.0
    %232 = vmatprep.subr.mxu0 0.0
    %233 = vmatpush1.msra.mxu0 0.0
    %234 = vmatprep.subr.mxu0 0.0
    %235 = vmatpush1.msra.mxu0 0.0
    %236 = vmatprep.subr.mxu0 0.0
    %237 = vmatpush1.msra.mxu0 0.0
    %238 = vmatprep.subr.mxu0 0.0
    %239 = vmatpush1.msra.mxu0 0.0
    %240 = vmatprep.subr.mxu0 0.0
    %241 = vmatpush1.msra.mxu0 0.0
    %242 = vmatprep.subr.mxu0 0.0
    %243 = vmatpush1.msra.mxu0 0.0
    %244 = vmatprep.subr.mxu0 0.0
    %245 = vmatpush1.msra.mxu0 0.0
    %246 = vmatprep.subr.mxu0 0.0
    %247 = vmatpush1.msra.mxu0 %v192
    %248 = vmatprep.subr.mxu0 0.0
    %249 = vmatpush1.msra.mxu0 %v191
    %250 = vmatprep.subr.mxu0 0.0
    %251 = vmatpush2.msra.mxu0 0.0
    %252 = vmatprep.subr.mxu0 0.0
    %253 = vmatpush2.msra.mxu0 0.0
    %254 = vmatprep.subr.mxu0 0.0
    %255 = vmatpush2.msra.mxu0 0.0
    %256 = vmatprep.subr.mxu0 0.0
    %257 = vmatpush2.msra.mxu0 0.0
    %258 = vmatprep.subr.mxu0 0.0
    %259 = vmatpush2.msra.mxu0 0.0
    %260 = vmatprep.subr.mxu0 0.0
    %261 = vmatpush2.msra.mxu0 0.0
    %262 = vmatprep.subr.mxu0 0.0
    %263 = vmatpush2.msra.mxu0 0.0
    %264 = vmatprep.subr.mxu0 0.0
    %265 = vmatpush2.msra.mxu0 0.0
    %266 = vmatprep.subr.mxu0 0.0
    %267 = vmatpush2.msra.mxu0 0.0
    %268 = vmatprep.subr.mxu0 0.0
    %269 = vmatpush2.msra.mxu0 0.0
    %270 = vmatprep.subr.mxu0 0.0
    %271 = vmatpush2.msra.mxu0 0.0
    %272 = vmatprep.subr.mxu0 0.0
    %273 = vmatpush2.msra.mxu0 0.0
    %274 = vmatprep.subr.mxu0 0.0
    %275 = vmatpush2.msra.mxu0 0.0
    %276 = vmatprep.subr.mxu0 0.0
    %277 = vmatpush2.msra.mxu0 0.0
    %278 = vmatprep.subr.mxu0 0.0
    %279 = vmatpush2.msra.mxu0 0.0
    %280 = vmatprep.subr.mxu0 0.0
    %281 = vmatpush2.msra.mxu0 0.0
    %282 = vmatprep.mubr.f32.mxu0 0.0
    %283 = vmatmul.mubr.f32.gmra.mxu0 %v195
    %v284 = vpop.f32.mrf.mxu0
    %v285 = vadd.f32 0.0, %v284
    %v286 = vpop.f32.mrf.mxu0
    %287 = vmatprep.mubr.f32.mxu0 0.0
    %288 = vmatmul.mubr.f32.gmra.mxu0 %v198
    %v289 = vpop.f32.mrf.mxu0
    %v290 = vadd.f32 0.0, %v289
    %v291 = vpop.f32.mrf.mxu0
    %292 = vmatprep.mubr.f32.mxu0 0.0
    %293 = vmatmul.mubr.f32.gmra.mxu0 %v201
    %v294 = vpop.f32.mrf.mxu0
    %v295 = vadd.f32 0.0, %v294
    %v296 = vpop.f32.mrf.mxu0
    %297 = vmatprep.mubr.f32.mxu0 0.0
    %298 = vmatmul.mubr.f32.gmra.mxu0 %v204
    %v299 = vpop.f32.mrf.mxu0
    %v300 = vadd.f32 0.0, %v299
    %v301 = vpop.f32.mrf.mxu0
    %302 = vmatprep.mubr.f32.mxu0 0.0
    %303 = vmatmul.mubr.f32.gmra.mxu0 %v207
    %v304 = vpop.f32.mrf.mxu0
    %v305 = vadd.f32 0.0, %v304
    %v306 = vpop.f32.mrf.mxu0
    %307 = vmatprep.mubr.f32.mxu0 0.0
    %308 = vmatmul.mubr.f32.gmra.mxu0 %v210
    %v309 = vpop.f32.mrf.mxu0
    %v310 = vadd.f32 0.0, %v309
    %v311 = vpop.f32.mrf.mxu0
    %312 = vmatprep.mubr.f32.mxu0 0.0
    %313 = vmatmul.mubr.f32.gmra.mxu0 %v213
    %v314 = vpop.f32.mrf.mxu0
    %v315 = vadd.f32 0.0, %v314
    %v316 = vpop.f32.mrf.mxu0
    %317 = vmatprep.mubr.f32.mxu0 0.0
    %318 = vmatmul.mubr.f32.gmra.mxu0 %v216
    %v319 = vpop.f32.mrf.mxu0
    %v320 = vadd.f32 0.0, %v319
    %v321 = vpop.f32.mrf.mxu0
    %322 = vdwg.mxu0
    %v323 = vpack.c.bf16 %v290, %v285
    %v324 = vpack.c.bf16 %v300, %v295
    %v325 = vpack.c.bf16 %v310, %v305
    %v326 = vpack.c.bf16 %v320, %v315
    %v327 = vld [vmem:[%s7] sm:$0xff]
    %v328 = vld [vmem:[%s7 + $0x8] sm:$0xff]
    %v329 = vld [vmem:[%s7 + $0x10] sm:$0xff]
    %v330 = vld [vmem:[%s7 + $0x18] sm:$0xff]
    %v335 = vunpack.c.l.b16 %v327
    %v336 = vunpack.c.h.b16 %v327
    %v337 = vunpack.c.l.b16 %v328
    %v338 = vunpack.c.h.b16 %v328
    %v339 = vunpack.c.l.b16 %v329
    %v340 = vunpack.c.h.b16 %v329
    %v341 = vunpack.c.l.b16 %v330
    %v342 = vunpack.c.h.b16 %v330
    %v343 = vpack.c.b16 %v337, %v335
    %v344 = vpack.c.b16 %v338, %v336
    %v345 = vpack.c.b16 %v341, %v339
    %v346 = vpack.c.b16 %v342, %v340
    %vm351 = vcmask 261120
    %v353 = vsel %vm351, %v323, 0
    %v356 = vsel %vm351, %v324, 0
    %v359 = vsel %vm351, %v325, 0
    %v362 = vsel %vm351, %v326, 0
    %364 = vmatprep.subr.bf16.mxu0 0
    %365 = vmatpush1.bf16.msra.mxu0 0
    %366 = vmatprep.subr.bf16.mxu0 0
    %367 = vmatpush1.bf16.msra.mxu0 0
    %368 = vmatprep.subr.bf16.mxu0 0
    %369 = vmatpush1.bf16.msra.mxu0 0
    %370 = vmatprep.subr.bf16.mxu0 0
    %371 = vmatpush1.bf16.msra.mxu0 0
    %372 = vmatprep.subr.bf16.mxu0 0
    %373 = vmatpush1.bf16.msra.mxu0 0
    %374 = vmatprep.subr.bf16.mxu0 0
    %375 = vmatpush1.bf16.msra.mxu0 0
    %376 = vmatprep.subr.bf16.mxu0 %v346
    %377 = vmatpush1.bf16.msra.mxu0 %v345
    %378 = vmatprep.subr.bf16.mxu0 %v344
    %379 = vmatpush1.bf16.msra.mxu0 %v343
    %380 = vmatprep.subr.bf16.mxu0 0
    %381 = vmatpush2.bf16.msra.mxu0 0
    %382 = vmatprep.subr.bf16.mxu0 0
    %383 = vmatpush2.bf16.msra.mxu0 0
    %384 = vmatprep.subr.bf16.mxu0 0
    %385 = vmatpush2.bf16.msra.mxu0 0
    %386 = vmatprep.subr.bf16.mxu0 0
    %387 = vmatpush2.bf16.msra.mxu0 0
    %388 = vmatprep.subr.bf16.mxu0 0
    %389 = vmatpush2.bf16.msra.mxu0 0
    %390 = vmatprep.subr.bf16.mxu0 0
    %391 = vmatpush2.bf16.msra.mxu0 0
    %392 = vmatprep.subr.bf16.mxu0 0
    %393 = vmatpush2.bf16.msra.mxu0 0
    %394 = vmatprep.subr.bf16.mxu0 0
    %395 = vmatpush2.bf16.msra.mxu0 0
    %396 = vmatprep.mubr.bf16.mxu0 0
    %397 = vmatmul.mubr.bf16.gmra.mxu0 %v353
    %v398 = vpop.f32.mrf.mxu0
    %v399 = vadd.f32 0.0, %v398
    %v400 = vpop.f32.mrf.mxu0
    %v401 = vadd.f32 0.0, %v400
    %v402 = vpop.f32.mrf.mxu0
    %v403 = vadd.f32 0.0, %v402
    %v404 = vpop.f32.mrf.mxu0
    %v405 = vadd.f32 0.0, %v404
    %406 = vmatprep.mubr.bf16.mxu0 0
    %407 = vmatmul.mubr.bf16.gmra.mxu0 %v356
    %v408 = vpop.f32.mrf.mxu0
    %v409 = vadd.f32 0.0, %v408
    %v410 = vpop.f32.mrf.mxu0
    %v411 = vadd.f32 0.0, %v410
    %v412 = vpop.f32.mrf.mxu0
    %v413 = vadd.f32 0.0, %v412
    %v414 = vpop.f32.mrf.mxu0
    %v415 = vadd.f32 0.0, %v414
    %416 = vmatprep.mubr.bf16.mxu0 0
    %417 = vmatmul.mubr.bf16.gmra.mxu0 %v359
    %v418 = vpop.f32.mrf.mxu0
    %v419 = vadd.f32 0.0, %v418
    %v420 = vpop.f32.mrf.mxu0
    %v421 = vadd.f32 0.0, %v420
    %v422 = vpop.f32.mrf.mxu0
    %v423 = vadd.f32 0.0, %v422
    %v424 = vpop.f32.mrf.mxu0
    %v425 = vadd.f32 0.0, %v424
    %426 = vmatprep.mubr.bf16.mxu0 0
    %427 = vmatmul.mubr.bf16.gmra.mxu0 %v362
    %v428 = vpop.f32.mrf.mxu0
    %v429 = vadd.f32 0.0, %v428
    %v430 = vpop.f32.mrf.mxu0
    %v431 = vadd.f32 0.0, %v430
    %v432 = vpop.f32.mrf.mxu0
    %v433 = vadd.f32 0.0, %v432
    %v434 = vpop.f32.mrf.mxu0
    %v435 = vadd.f32 0.0, %v434
    %436 = vdwg.mxu0
    %v437 = vld [vmem:[%s11] sm:$0x1]
    %v438 = vlaneseq
    %v439 = vshrl.u32 %v438, 7
    %v440 = vsub.s32 0, %v439
    %v441 = vrot.slane %v437, %v440
    %v442 = vadd.f32 %v399, %v441
    %v443 = vadd.f32 %v403, %v441
    %v444 = vadd.f32 %v409, %v441
    %v445 = vadd.f32 %v413, %v441
    %v446 = vadd.f32 %v419, %v441
    %v447 = vadd.f32 %v423, %v441
    %v448 = vadd.f32 %v429, %v441
    %v449 = vadd.f32 %v433, %v441
    %v450 = vld [vmem:[%s11 + $0x1] sm:$0x1]
    %v451 = vlaneseq
    %v452 = vshrl.u32 %v451, 7
    %v453 = vsub.s32 0, %v452
    %v454 = vrot.slane %v450, %v453
    %v455 = vadd.f32 %v401, %v454
    %v456 = vadd.f32 %v405, %v454
    %v457 = vadd.f32 %v411, %v454
    %v458 = vadd.f32 %v415, %v454
    %v459 = vadd.f32 %v421, %v454
    %v460 = vadd.f32 %v425, %v454
    %v461 = vadd.f32 %v431, %v454
    %v462 = vadd.f32 %v435, %v454
    %v463 = vld [vmem:[%s8] sm:$0xf]
    %v464 = vld [vmem:[%s8 + $0x4] sm:$0xf]
    %v465 = vld [vmem:[%s8 + $0x8] sm:$0xf]
    %v466 = vld [vmem:[%s8 + $0xc] sm:$0xf]
    %v471 = vunpack.c.l.b16 %v463
    %v472 = vunpack.c.l.b16 %v464
    %v473 = vunpack.c.l.b16 %v465
    %v474 = vunpack.c.l.b16 %v466
    %v475 = vpack.c.b16 %v472, %v471
    %v476 = vpack.c.b16 %v474, %v473
    %v480 = vsel %vm351, 0, 0
    %482 = vmatprep.subr.bf16.mxu0 0
    %483 = vmatpush1.bf16.msra.mxu0 0
    %484 = vmatprep.subr.bf16.mxu0 0
    %485 = vmatpush1.bf16.msra.mxu0 0
    %486 = vmatprep.subr.bf16.mxu0 0
    %487 = vmatpush1.bf16.msra.mxu0 0
    %488 = vmatprep.subr.bf16.mxu0 0
    %489 = vmatpush1.bf16.msra.mxu0 0
    %490 = vmatprep.subr.bf16.mxu0 0
    %491 = vmatpush1.bf16.msra.mxu0 0
    %492 = vmatprep.subr.bf16.mxu0 0
    %493 = vmatpush1.bf16.msra.mxu0 0
    %494 = vmatprep.subr.bf16.mxu0 0
    %495 = vmatpush1.bf16.msra.mxu0 %v476
    %496 = vmatprep.subr.bf16.mxu0 0
    %497 = vmatpush1.bf16.msra.mxu0 %v475
    %498 = vmatprep.subr.bf16.mxu0 0
    %499 = vmatpush2.bf16.msra.mxu0 0
    %500 = vmatprep.subr.bf16.mxu0 0
    %501 = vmatpush2.bf16.msra.mxu0 0
    %502 = vmatprep.subr.bf16.mxu0 0
    %503 = vmatpush2.bf16.msra.mxu0 0
    %504 = vmatprep.subr.bf16.mxu0 0
    %505 = vmatpush2.bf16.msra.mxu0 0
    %506 = vmatprep.subr.bf16.mxu0 0
    %507 = vmatpush2.bf16.msra.mxu0 0
    %508 = vmatprep.subr.bf16.mxu0 0
    %509 = vmatpush2.bf16.msra.mxu0 0
    %510 = vmatprep.subr.bf16.mxu0 0
    %511 = vmatpush2.bf16.msra.mxu0 0
    %512 = vmatprep.subr.bf16.mxu0 0
    %513 = vmatpush2.bf16.msra.mxu0 0
    %514 = vmatprep.mubr.bf16.mxu0 0
    %515 = vmatmul.mubr.bf16.gmra.mxu0 %v480
    %v516 = vpop.f32.mrf.mxu0
    %v517 = vadd.f32 0.0, %v516
    %v518 = vpop.f32.mrf.mxu0
    %v519 = vpop.f32.mrf.mxu0
    %v520 = vpop.f32.mrf.mxu0
    %521 = vdwg.mxu0
    %v522 = vadd.f32 %v442, %v517
    %v523 = vtanh.pop %v522
    %v524 = vmul.f32 %v523, %v133
    %v525 = vadd.f32 %v524, %v134
    %v526 = vmul.f32 %v525, 0.0
    %528 = vrot.lane.b32.xlu0 %v525, 64
    %v529 = vpop.permute.xlu0 %528
    %v531 = vmul.f32 %v525, %v529
    %533 = vrot.lane.b32.xlu0 %v531, 32
    %v534 = vpop.permute.xlu0 %533
    %v536 = vadd.f32 %v526, %v534
    %v537 = vtanh.pop %v536
    %539 = vrot.lane.b32.xlu0 %v537, 64
    %v540 = vpop.permute.xlu0 %539
    %v542 = vmul.f32 %v525, %v540
    %544 = vrot.lane.b32.xlu0 %v542, 32
    %v545 = vpop.permute.xlu0 %544
    %547 = vst.msk [vmem:[#allocation2] sm:$0xff] %vm351, %v545
    %v548 = vpack.c.bf16 %v542, %v542
    %550 = vrot.lane.b32.xlu0 %v548, 32
    %v551 = vpop.permute.xlu0 %550
    %v553 = vsel %vm351, %v551, 0
    %555 = vmatprep.subr.bf16.mxu0 0
    %556 = vmatpush1.bf16.msra.mxu0 0
    %557 = vmatprep.subr.bf16.mxu0 0
    %558 = vmatpush1.bf16.msra.mxu0 0
    %559 = vmatprep.subr.bf16.mxu0 0
    %560 = vmatpush1.bf16.msra.mxu0 0
    %561 = vmatprep.subr.bf16.mxu0 0
    %562 = vmatpush1.bf16.msra.mxu0 0
    %563 = vmatprep.subr.bf16.mxu0 0
    %564 = vmatpush1.bf16.msra.mxu0 0
    %565 = vmatprep.subr.bf16.mxu0 0
    %566 = vmatpush1.bf16.msra.mxu0 0
    %567 = vmatprep.subr.bf16.mxu0 0
    %568 = vmatpush1.bf16.msra.mxu0 %v476
    %569 = vmatprep.subr.bf16.mxu0 0
    %570 = vmatpush1.bf16.msra.mxu0 %v475
    %571 = vmatprep.subr.bf16.mxu0 0
    %572 = vmatpush2.bf16.msra.mxu0 0
    %573 = vmatprep.subr.bf16.mxu0 0
    %574 = vmatpush2.bf16.msra.mxu0 0
    %575 = vmatprep.subr.bf16.mxu0 0
    %576 = vmatpush2.bf16.msra.mxu0 0
    %577 = vmatprep.subr.bf16.mxu0 0
    %578 = vmatpush2.bf16.msra.mxu0 0
    %579 = vmatprep.subr.bf16.mxu0 0
    %580 = vmatpush2.bf16.msra.mxu0 0
    %581 = vmatprep.subr.bf16.mxu0 0
    %582 = vmatpush2.bf16.msra.mxu0 0
    %583 = vmatprep.subr.bf16.mxu0 0
    %584 = vmatpush2.bf16.msra.mxu0 0
    %585 = vmatprep.subr.bf16.mxu0 0
    %586 = vmatpush2.bf16.msra.mxu0 0
    %587 = vmatprep.mubr.bf16.mxu0 0
    %588 = vmatmul.mubr.bf16.gmra.mxu0 %v553
    %v589 = vpop.f32.mrf.mxu0
    %v590 = vadd.f32 0.0, %v589
    %v591 = vpop.f32.mrf.mxu0
    %v592 = vpop.f32.mrf.mxu0
    %v593 = vpop.f32.mrf.mxu0
    %594 = vdwg.mxu0
    %v595 = vadd.f32 %v443, %v590
    %v596 = vtanh.pop %v595
    %v597 = vmul.f32 %v596, %v133
    %v598 = vadd.f32 %v597, %v134
    %v599 = vmul.f32 %v598, %v536
    %601 = vrot.lane.b32.xlu0 %v598, 64
    %v602 = vpop.permute.xlu0 %601
    %v604 = vmul.f32 %v598, %v602
    %606 = vrot.lane.b32.xlu0 %v604, 32
    %v607 = vpop.permute.xlu0 %606
    %v609 = vadd.f32 %v599, %v607
    %v610 = vtanh.pop %v609
    %612 = vrot.lane.b32.xlu0 %v610, 64
    %v613 = vpop.permute.xlu0 %612
    %v615 = vmul.f32 %v598, %v613
    %617 = vrot.lane.b32.xlu0 %v615, 32
    %v618 = vpop.permute.xlu0 %617
    %620 = vst.msk [vmem:[#allocation2 + $0x8] sm:$0xff] %vm351, %v618
    %v621 = vpack.c.bf16 %v615, %v615
    %623 = vrot.lane.b32.xlu0 %v621, 32
    %v624 = vpop.permute.xlu0 %623
    %v626 = vsel %vm351, %v624, 0
    %628 = vmatprep.subr.bf16.mxu0 0
    %629 = vmatpush1.bf16.msra.mxu0 0
    %630 = vmatprep.subr.bf16.mxu0 0
    %631 = vmatpush1.bf16.msra.mxu0 0
    %632 = vmatprep.subr.bf16.mxu0 0
    %633 = vmatpush1.bf16.msra.mxu0 0
    %634 = vmatprep.subr.bf16.mxu0 0
    %635 = vmatpush1.bf16.msra.mxu0 0
    %636 = vmatprep.subr.bf16.mxu0 0
    %637 = vmatpush1.bf16.msra.mxu0 0
    %638 = vmatprep.subr.bf16.mxu0 0
    %639 = vmatpush1.bf16.msra.mxu0 0
    %640 = vmatprep.subr.bf16.mxu0 0
    %641 = vmatpush1.bf16.msra.mxu0 %v476
    %642 = vmatprep.subr.bf16.mxu0 0
    %643 = vmatpush1.bf16.msra.mxu0 %v475
    %644 = vmatprep.subr.bf16.mxu0 0
    %645 = vmatpush2.bf16.msra.mxu0 0
    %646 = vmatprep.subr.bf16.mxu0 0
    %647 = vmatpush2.bf16.msra.mxu0 0
    %648 = vmatprep.subr.bf16.mxu0 0
    %649 = vmatpush2.bf16.msra.mxu0 0
    %650 = vmatprep.subr.bf16.mxu0 0
    %651 = vmatpush2.bf16.msra.mxu0 0
    %652 = vmatprep.subr.bf16.mxu0 0
    %653 = vmatpush2.bf16.msra.mxu0 0
    %654 = vmatprep.subr.bf16.mxu0 0
    %655 = vmatpush2.bf16.msra.mxu0 0
    %656 = vmatprep.subr.bf16.mxu0 0
    %657 = vmatpush2.bf16.msra.mxu0 0
    %658 = vmatprep.subr.bf16.mxu0 0
    %659 = vmatpush2.bf16.msra.mxu0 0
    %660 = vmatprep.mubr.bf16.mxu0 0
    %661 = vmatmul.mubr.bf16.gmra.mxu0 %v626
    %v662 = vpop.f32.mrf.mxu0
    %v663 = vadd.f32 0.0, %v662
    %v664 = vpop.f32.mrf.mxu0
    %v665 = vpop.f32.mrf.mxu0
    %v666 = vpop.f32.mrf.mxu0
    %667 = vdwg.mxu0
    %v668 = vadd.f32 %v444, %v663
    %v669 = vtanh.pop %v668
    %v670 = vmul.f32 %v669, %v133
    %v671 = vadd.f32 %v670, %v134
    %v672 = vmul.f32 %v671, %v609
    %674 = vrot.lane.b32.xlu0 %v671, 64
    %v675 = vpop.permute.xlu0 %674
    %v677 = vmul.f32 %v671, %v675
    %679 = vrot.lane.b32.xlu0 %v677, 32
    %v680 = vpop.permute.xlu0 %679
    %v682 = vadd.f32 %v672, %v680
    %v683 = vtanh.pop %v682
    %685 = vrot.lane.b32.xlu0 %v683, 64
    %v686 = vpop.permute.xlu0 %685
    %v688 = vmul.f32 %v671, %v686
    %690 = vrot.lane.b32.xlu0 %v688, 32
    %v691 = vpop.permute.xlu0 %690
    %693 = vst.msk [vmem:[#allocation2 + $0x10] sm:$0xff] %vm351, %v691
    %v694 = vpack.c.bf16 %v688, %v688
    %696 = vrot.lane.b32.xlu0 %v694, 32
    %v697 = vpop.permute.xlu0 %696
    %v699 = vsel %vm351, %v697, 0
    %701 = vmatprep.subr.bf16.mxu0 0
    %702 = vmatpush1.bf16.msra.mxu0 0
    %703 = vmatprep.subr.bf16.mxu0 0
    %704 = vmatpush1.bf16.msra.mxu0 0
    %705 = vmatprep.subr.bf16.mxu0 0
    %706 = vmatpush1.bf16.msra.mxu0 0
    %707 = vmatprep.subr.bf16.mxu0 0
    %708 = vmatpush1.bf16.msra.mxu0 0
    %709 = vmatprep.subr.bf16.mxu0 0
    %710 = vmatpush1.bf16.msra.mxu0 0
    %711 = vmatprep.subr.bf16.mxu0 0
    %712 = vmatpush1.bf16.msra.mxu0 0
    %713 = vmatprep.subr.bf16.mxu0 0
    %714 = vmatpush1.bf16.msra.mxu0 %v476
    %715 = vmatprep.subr.bf16.mxu0 0
    %716 = vmatpush1.bf16.msra.mxu0 %v475
    %717 = vmatprep.subr.bf16.mxu0 0
    %718 = vmatpush2.bf16.msra.mxu0 0
    %719 = vmatprep.subr.bf16.mxu0 0
    %720 = vmatpush2.bf16.msra.mxu0 0
    %721 = vmatprep.subr.bf16.mxu0 0
    %722 = vmatpush2.bf16.msra.mxu0 0
    %723 = vmatprep.subr.bf16.mxu0 0
    %724 = vmatpush2.bf16.msra.mxu0 0
    %725 = vmatprep.subr.bf16.mxu0 0
    %726 = vmatpush2.bf16.msra.mxu0 0
    %727 = vmatprep.subr.bf16.mxu0 0
    %728 = vmatpush2.bf16.msra.mxu0 0
    %729 = vmatprep.subr.bf16.mxu0 0
    %730 = vmatpush2.bf16.msra.mxu0 0
    %731 = vmatprep.subr.bf16.mxu0 0
    %732 = vmatpush2.bf16.msra.mxu0 0
    %733 = vmatprep.mubr.bf16.mxu0 0
    %734 = vmatmul.mubr.bf16.gmra.mxu0 %v699
    %v735 = vpop.f32.mrf.mxu0
    %v736 = vadd.f32 0.0, %v735
    %v737 = vpop.f32.mrf.mxu0
    %v738 = vpop.f32.mrf.mxu0
    %v739 = vpop.f32.mrf.mxu0
    %740 = vdwg.mxu0
    %v741 = vadd.f32 %v445, %v736
    %v742 = vtanh.pop %v741
    %v743 = vmul.f32 %v742, %v133
    %v744 = vadd.f32 %v743, %v134
    %v745 = vmul.f32 %v744, %v682
    %747 = vrot.lane.b32.xlu0 %v744, 64
    %v748 = vpop.permute.xlu0 %747
    %v750 = vmul.f32 %v744, %v748
    %752 = vrot.lane.b32.xlu0 %v750, 32
    %v753 = vpop.permute.xlu0 %752
    %v755 = vadd.f32 %v745, %v753
    %v756 = vtanh.pop %v755
    %758 = vrot.lane.b32.xlu0 %v756, 64
    %v759 = vpop.permute.xlu0 %758
    %v761 = vmul.f32 %v744, %v759
    %763 = vrot.lane.b32.xlu0 %v761, 32
    %v764 = vpop.permute.xlu0 %763
    %766 = vst.msk [vmem:[#allocation2 + $0x18] sm:$0xff] %vm351, %v764
    %v767 = vpack.c.bf16 %v761, %v761
    %769 = vrot.lane.b32.xlu0 %v767, 32
    %v770 = vpop.permute.xlu0 %769
    %v772 = vsel %vm351, %v770, 0
    %774 = vmatprep.subr.bf16.mxu0 0
    %775 = vmatpush1.bf16.msra.mxu0 0
    %776 = vmatprep.subr.bf16.mxu0 0
    %777 = vmatpush1.bf16.msra.mxu0 0
    %778 = vmatprep.subr.bf16.mxu0 0
    %779 = vmatpush1.bf16.msra.mxu0 0
    %780 = vmatprep.subr.bf16.mxu0 0
    %781 = vmatpush1.bf16.msra.mxu0 0
    %782 = vmatprep.subr.bf16.mxu0 0
    %783 = vmatpush1.bf16.msra.mxu0 0
    %784 = vmatprep.subr.bf16.mxu0 0
    %785 = vmatpush1.bf16.msra.mxu0 0
    %786 = vmatprep.subr.bf16.mxu0 0
    %787 = vmatpush1.bf16.msra.mxu0 %v476
    %788 = vmatprep.subr.bf16.mxu0 0
    %789 = vmatpush1.bf16.msra.mxu0 %v475
    %790 = vmatprep.subr.bf16.mxu0 0
    %791 = vmatpush2.bf16.msra.mxu0 0
    %792 = vmatprep.subr.bf16.mxu0 0
    %793 = vmatpush2.bf16.msra.mxu0 0
    %794 = vmatprep.subr.bf16.mxu0 0
    %795 = vmatpush2.bf16.msra.mxu0 0
    %796 = vmatprep.subr.bf16.mxu0 0
    %797 = vmatpush2.bf16.msra.mxu0 0
    %798 = vmatprep.subr.bf16.mxu0 0
    %799 = vmatpush2.bf16.msra.mxu0 0
    %800 = vmatprep.subr.bf16.mxu0 0
    %801 = vmatpush2.bf16.msra.mxu0 0
    %802 = vmatprep.subr.bf16.mxu0 0
    %803 = vmatpush2.bf16.msra.mxu0 0
    %804 = vmatprep.subr.bf16.mxu0 0
    %805 = vmatpush2.bf16.msra.mxu0 0
    %806 = vmatprep.mubr.bf16.mxu0 0
    %807 = vmatmul.mubr.bf16.gmra.mxu0 %v772
    %v808 = vpop.f32.mrf.mxu0
    %v809 = vadd.f32 0.0, %v808
    %v810 = vpop.f32.mrf.mxu0
    %v811 = vpop.f32.mrf.mxu0
    %v812 = vpop.f32.mrf.mxu0
    %813 = vdwg.mxu0
    %v814 = vadd.f32 %v446, %v809
    %v815 = vtanh.pop %v814
    %v816 = vmul.f32 %v815, %v133
    %v817 = vadd.f32 %v816, %v134
    %v818 = vmul.f32 %v817, %v755
    %820 = vrot.lane.b32.xlu0 %v817, 64
    %v821 = vpop.permute.xlu0 %820
    %v823 = vmul.f32 %v817, %v821
    %825 = vrot.lane.b32.xlu0 %v823, 32
    %v826 = vpop.permute.xlu0 %825
    %v828 = vadd.f32 %v818, %v826
    %v829 = vtanh.pop %v828
    %831 = vrot.lane.b32.xlu0 %v829, 64
    %v832 = vpop.permute.xlu0 %831
    %v834 = vmul.f32 %v817, %v832
    %836 = vrot.lane.b32.xlu0 %v834, 32
    %v837 = vpop.permute.xlu0 %836
    %839 = vst.msk [vmem:[#allocation2 + $0x20] sm:$0xff] %vm351, %v837
    %v840 = vpack.c.bf16 %v834, %v834
    %842 = vrot.lane.b32.xlu0 %v840, 32
    %v843 = vpop.permute.xlu0 %842
    %v845 = vsel %vm351, %v843, 0
    %847 = vmatprep.subr.bf16.mxu0 0
    %848 = vmatpush1.bf16.msra.mxu0 0
    %849 = vmatprep.subr.bf16.mxu0 0
    %850 = vmatpush1.bf16.msra.mxu0 0
    %851 = vmatprep.subr.bf16.mxu0 0
    %852 = vmatpush1.bf16.msra.mxu0 0
    %853 = vmatprep.subr.bf16.mxu0 0
    %854 = vmatpush1.bf16.msra.mxu0 0
    %855 = vmatprep.subr.bf16.mxu0 0
    %856 = vmatpush1.bf16.msra.mxu0 0
    %857 = vmatprep.subr.bf16.mxu0 0
    %858 = vmatpush1.bf16.msra.mxu0 0
    %859 = vmatprep.subr.bf16.mxu0 0
    %860 = vmatpush1.bf16.msra.mxu0 %v476
    %861 = vmatprep.subr.bf16.mxu0 0
    %862 = vmatpush1.bf16.msra.mxu0 %v475
    %863 = vmatprep.subr.bf16.mxu0 0
    %864 = vmatpush2.bf16.msra.mxu0 0
    %865 = vmatprep.subr.bf16.mxu0 0
    %866 = vmatpush2.bf16.msra.mxu0 0
    %867 = vmatprep.subr.bf16.mxu0 0
    %868 = vmatpush2.bf16.msra.mxu0 0
    %869 = vmatprep.subr.bf16.mxu0 0
    %870 = vmatpush2.bf16.msra.mxu0 0
    %871 = vmatprep.subr.bf16.mxu0 0
    %872 = vmatpush2.bf16.msra.mxu0 0
    %873 = vmatprep.subr.bf16.mxu0 0
    %874 = vmatpush2.bf16.msra.mxu0 0
    %875 = vmatprep.subr.bf16.mxu0 0
    %876 = vmatpush2.bf16.msra.mxu0 0
    %877 = vmatprep.subr.bf16.mxu0 0
    %878 = vmatpush2.bf16.msra.mxu0 0
    %879 = vmatprep.mubr.bf16.mxu0 0
    %880 = vmatmul.mubr.bf16.gmra.mxu0 %v845
    %v881 = vpop.f32.mrf.mxu0
    %v882 = vadd.f32 0.0, %v881
    %v883 = vpop.f32.mrf.mxu0
    %v884 = vpop.f32.mrf.mxu0
    %v885 = vpop.f32.mrf.mxu0
    %886 = vdwg.mxu0
    %v887 = vadd.f32 %v447, %v882
    %v888 = vtanh.pop %v887
    %v889 = vmul.f32 %v888, %v133
    %v890 = vadd.f32 %v889, %v134
    %v891 = vmul.f32 %v890, %v828
    %893 = vrot.lane.b32.xlu0 %v890, 64
    %v894 = vpop.permute.xlu0 %893
    %v896 = vmul.f32 %v890, %v894
    %898 = vrot.lane.b32.xlu0 %v896, 32
    %v899 = vpop.permute.xlu0 %898
    %v901 = vadd.f32 %v891, %v899
    %v902 = vtanh.pop %v901
    %904 = vrot.lane.b32.xlu0 %v902, 64
    %v905 = vpop.permute.xlu0 %904
    %v907 = vmul.f32 %v890, %v905
    %909 = vrot.lane.b32.xlu0 %v907, 32
    %v910 = vpop.permute.xlu0 %909
    %912 = vst.msk [vmem:[#allocation2 + $0x28] sm:$0xff] %vm351, %v910
    %v913 = vpack.c.bf16 %v907, %v907
    %915 = vrot.lane.b32.xlu0 %v913, 32
    %v916 = vpop.permute.xlu0 %915
    %v918 = vsel %vm351, %v916, 0
    %920 = vmatprep.subr.bf16.mxu0 0
    %921 = vmatpush1.bf16.msra.mxu0 0
    %922 = vmatprep.subr.bf16.mxu0 0
    %923 = vmatpush1.bf16.msra.mxu0 0
    %924 = vmatprep.subr.bf16.mxu0 0
    %925 = vmatpush1.bf16.msra.mxu0 0
    %926 = vmatprep.subr.bf16.mxu0 0
    %927 = vmatpush1.bf16.msra.mxu0 0
    %928 = vmatprep.subr.bf16.mxu0 0
    %929 = vmatpush1.bf16.msra.mxu0 0
    %930 = vmatprep.subr.bf16.mxu0 0
    %931 = vmatpush1.bf16.msra.mxu0 0
    %932 = vmatprep.subr.bf16.mxu0 0
    %933 = vmatpush1.bf16.msra.mxu0 %v476
    %934 = vmatprep.subr.bf16.mxu0 0
    %935 = vmatpush1.bf16.msra.mxu0 %v475
    %936 = vmatprep.subr.bf16.mxu0 0
    %937 = vmatpush2.bf16.msra.mxu0 0
    %938 = vmatprep.subr.bf16.mxu0 0
    %939 = vmatpush2.bf16.msra.mxu0 0
    %940 = vmatprep.subr.bf16.mxu0 0
    %941 = vmatpush2.bf16.msra.mxu0 0
    %942 = vmatprep.subr.bf16.mxu0 0
    %943 = vmatpush2.bf16.msra.mxu0 0
    %944 = vmatprep.subr.bf16.mxu0 0
    %945 = vmatpush2.bf16.msra.mxu0 0
    %946 = vmatprep.subr.bf16.mxu0 0
    %947 = vmatpush2.bf16.msra.mxu0 0
    %948 = vmatprep.subr.bf16.mxu0 0
    %949 = vmatpush2.bf16.msra.mxu0 0
    %950 = vmatprep.subr.bf16.mxu0 0
    %951 = vmatpush2.bf16.msra.mxu0 0
    %952 = vmatprep.mubr.bf16.mxu0 0
    %953 = vmatmul.mubr.bf16.gmra.mxu0 %v918
    %v954 = vpop.f32.mrf.mxu0
    %v955 = vadd.f32 0.0, %v954
    %v956 = vpop.f32.mrf.mxu0
    %v957 = vpop.f32.mrf.mxu0
    %v958 = vpop.f32.mrf.mxu0
    %959 = vdwg.mxu0
    %v960 = vadd.f32 %v448, %v955
    %v961 = vtanh.pop %v960
    %v962 = vmul.f32 %v961, %v133
    %v963 = vadd.f32 %v962, %v134
    %v964 = vmul.f32 %v963, %v901
    %966 = vrot.lane.b32.xlu0 %v963, 64
    %v967 = vpop.permute.xlu0 %966
    %v969 = vmul.f32 %v963, %v967
    %971 = vrot.lane.b32.xlu0 %v969, 32
    %v972 = vpop.permute.xlu0 %971
    %v974 = vadd.f32 %v964, %v972
    %v975 = vtanh.pop %v974
    %977 = vrot.lane.b32.xlu0 %v975, 64
    %v978 = vpop.permute.xlu0 %977
    %v980 = vmul.f32 %v963, %v978
    %982 = vrot.lane.b32.xlu0 %v980, 32
    %v983 = vpop.permute.xlu0 %982
    %985 = vst.msk [vmem:[#allocation2 + $0x30] sm:$0xff] %vm351, %v983
    %v986 = vpack.c.bf16 %v980, %v980
    %988 = vrot.lane.b32.xlu0 %v986, 32
    %v989 = vpop.permute.xlu0 %988
    %v991 = vsel %vm351, %v989, 0
    %993 = vmatprep.subr.bf16.mxu0 0
    %994 = vmatpush1.bf16.msra.mxu0 0
    %995 = vmatprep.subr.bf16.mxu0 0
    %996 = vmatpush1.bf16.msra.mxu0 0
    %997 = vmatprep.subr.bf16.mxu0 0
    %998 = vmatpush1.bf16.msra.mxu0 0
    %999 = vmatprep.subr.bf16.mxu0 0
    %1000 = vmatpush1.bf16.msra.mxu0 0
    %1001 = vmatprep.subr.bf16.mxu0 0
    %1002 = vmatpush1.bf16.msra.mxu0 0
    %1003 = vmatprep.subr.bf16.mxu0 0
    %1004 = vmatpush1.bf16.msra.mxu0 0
    %1005 = vmatprep.subr.bf16.mxu0 0
    %1006 = vmatpush1.bf16.msra.mxu0 %v476
    %1007 = vmatprep.subr.bf16.mxu0 0
    %1008 = vmatpush1.bf16.msra.mxu0 %v475
    %1009 = vmatprep.subr.bf16.mxu0 0
    %1010 = vmatpush2.bf16.msra.mxu0 0
    %1011 = vmatprep.subr.bf16.mxu0 0
    %1012 = vmatpush2.bf16.msra.mxu0 0
    %1013 = vmatprep.subr.bf16.mxu0 0
    %1014 = vmatpush2.bf16.msra.mxu0 0
    %1015 = vmatprep.subr.bf16.mxu0 0
    %1016 = vmatpush2.bf16.msra.mxu0 0
    %1017 = vmatprep.subr.bf16.mxu0 0
    %1018 = vmatpush2.bf16.msra.mxu0 0
    %1019 = vmatprep.subr.bf16.mxu0 0
    %1020 = vmatpush2.bf16.msra.mxu0 0
    %1021 = vmatprep.subr.bf16.mxu0 0
    %1022 = vmatpush2.bf16.msra.mxu0 0
    %1023 = vmatprep.subr.bf16.mxu0 0
    %1024 = vmatpush2.bf16.msra.mxu0 0
    %1025 = vmatprep.mubr.bf16.mxu0 0
    %1026 = vmatmul.mubr.bf16.gmra.mxu0 %v991
    %v1027 = vpop.f32.mrf.mxu0
    %v1028 = vadd.f32 0.0, %v1027
    %v1029 = vpop.f32.mrf.mxu0
    %v1030 = vpop.f32.mrf.mxu0
    %v1031 = vpop.f32.mrf.mxu0
    %1032 = vdwg.mxu0
    %v1033 = vadd.f32 %v449, %v1028
    %v1034 = vtanh.pop %v1033
    %v1035 = vmul.f32 %v1034, %v133
    %v1036 = vadd.f32 %v1035, %v134
    %v1037 = vmul.f32 %v1036, %v974
    %1039 = vrot.lane.b32.xlu0 %v1036, 64
    %v1040 = vpop.permute.xlu0 %1039
    %v1042 = vmul.f32 %v1036, %v1040
    %1044 = vrot.lane.b32.xlu0 %v1042, 32
    %v1045 = vpop.permute.xlu0 %1044
    %v1047 = vadd.f32 %v1037, %v1045
    %v1048 = vtanh.pop %v1047
    %1050 = vrot.lane.b32.xlu0 %v1048, 64
    %v1051 = vpop.permute.xlu0 %1050
    %v1053 = vmul.f32 %v1036, %v1051
    %1055 = vrot.lane.b32.xlu0 %v1053, 32
    %v1056 = vpop.permute.xlu0 %1055
    %1058 = vst.msk [vmem:[#allocation2 + $0x38] sm:$0xff] %vm351, %v1056
    %s1059 = scalar_lea.vmem %s8, 16
    %v1060 = vld [vmem:[%s1059] sm:$0xf]
    %v1061 = vld [vmem:[%s1059 + $0x4] sm:$0xf]
    %v1062 = vld [vmem:[%s1059 + $0x8] sm:$0xf]
    %v1063 = vld [vmem:[%s1059 + $0xc] sm:$0xf]
    %v1068 = vunpack.c.l.b16 %v1060
    %v1069 = vunpack.c.l.b16 %v1061
    %v1070 = vunpack.c.l.b16 %v1062
    %v1071 = vunpack.c.l.b16 %v1063
    %v1072 = vpack.c.b16 %v1069, %v1068
    %v1073 = vpack.c.b16 %v1071, %v1070
    %1076 = vmatprep.subr.bf16.mxu0 0
    %1077 = vmatpush1.bf16.msra.mxu0 0
    %1078 = vmatprep.subr.bf16.mxu0 0
    %1079 = vmatpush1.bf16.msra.mxu0 0
    %1080 = vmatprep.subr.bf16.mxu0 0
    %1081 = vmatpush1.bf16.msra.mxu0 0
    %1082 = vmatprep.subr.bf16.mxu0 0
    %1083 = vmatpush1.bf16.msra.mxu0 0
    %1084 = vmatprep.subr.bf16.mxu0 0
    %1085 = vmatpush1.bf16.msra.mxu0 0
    %1086 = vmatprep.subr.bf16.mxu0 0
    %1087 = vmatpush1.bf16.msra.mxu0 0
    %1088 = vmatprep.subr.bf16.mxu0 0
    %1089 = vmatpush1.bf16.msra.mxu0 %v1073
    %1090 = vmatprep.subr.bf16.mxu0 0
    %1091 = vmatpush1.bf16.msra.mxu0 %v1072
    %1092 = vmatprep.subr.bf16.mxu0 0
    %1093 = vmatpush2.bf16.msra.mxu0 0
    %1094 = vmatprep.subr.bf16.mxu0 0
    %1095 = vmatpush2.bf16.msra.mxu0 0
    %1096 = vmatprep.subr.bf16.mxu0 0
    %1097 = vmatpush2.bf16.msra.mxu0 0
    %1098 = vmatprep.subr.bf16.mxu0 0
    %1099 = vmatpush2.bf16.msra.mxu0 0
    %1100 = vmatprep.subr.bf16.mxu0 0
    %1101 = vmatpush2.bf16.msra.mxu0 0
    %1102 = vmatprep.subr.bf16.mxu0 0
    %1103 = vmatpush2.bf16.msra.mxu0 0
    %1104 = vmatprep.subr.bf16.mxu0 0
    %1105 = vmatpush2.bf16.msra.mxu0 0
    %1106 = vmatprep.subr.bf16.mxu0 0
    %1107 = vmatpush2.bf16.msra.mxu0 0
    %1108 = vmatprep.mubr.bf16.mxu0 0
    %1109 = vmatmul.mubr.bf16.gmra.mxu0 %v480
    %v1110 = vpop.f32.mrf.mxu0
    %v1111 = vadd.f32 0.0, %v1110
    %v1112 = vpop.f32.mrf.mxu0
    %v1113 = vpop.f32.mrf.mxu0
    %v1114 = vpop.f32.mrf.mxu0
    %1115 = vdwg.mxu0
    %v1116 = vadd.f32 %v462, %v1111
    %v1117 = vtanh.pop %v1116
    %v1118 = vmul.f32 %v1117, %v133
    %v1119 = vadd.f32 %v1118, %v134
    %v1120 = vmul.f32 %v1119, 0.0
    %1122 = vrot.lane.b32.xlu0 %v1119, 64
    %v1123 = vpop.permute.xlu0 %1122
    %v1125 = vmul.f32 %v1119, %v1123
    %1127 = vrot.lane.b32.xlu0 %v1125, 32
    %v1128 = vpop.permute.xlu0 %1127
    %v1130 = vadd.f32 %v1120, %v1128
    %v1131 = vtanh.pop %v1130
    %1133 = vrot.lane.b32.xlu0 %v1131, 64
    %v1134 = vpop.permute.xlu0 %1133
    %v1136 = vmul.f32 %v1119, %v1134
    %1138 = vrot.lane.b32.xlu0 %v1136, 64
    %v1139 = vpop.permute.xlu0 %1138
    %vm1141 = vcmask 523520
    %1142 = vst.msk [vmem:[#allocation2 + $0x38] sm:$0xff] %vm1141, %v1139
    %v1143 = vpack.c.bf16 %v1136, %v1136
    %1145 = vrot.lane.b32.xlu0 %v1143, 32
    %v1146 = vpop.permute.xlu0 %1145
    %v1148 = vsel %vm351, %v1146, 0
    %1150 = vmatprep.subr.bf16.mxu0 0
    %1151 = vmatpush1.bf16.msra.mxu0 0
    %1152 = vmatprep.subr.bf16.mxu0 0
    %1153 = vmatpush1.bf16.msra.mxu0 0
    %1154 = vmatprep.subr.bf16.mxu0 0
    %1155 = vmatpush1.bf16.msra.mxu0 0
    %1156 = vmatprep.subr.bf16.mxu0 0
    %1157 = vmatpush1.bf16.msra.mxu0 0
    %1158 = vmatprep.subr.bf16.mxu0 0
    %1159 = vmatpush1.bf16.msra.mxu0 0
    %1160 = vmatprep.subr.bf16.mxu0 0
    %1161 = vmatpush1.bf16.msra.mxu0 0
    %1162 = vmatprep.subr.bf16.mxu0 0
    %1163 = vmatpush1.bf16.msra.mxu0 %v1073
    %1164 = vmatprep.subr.bf16.mxu0 0
    %1165 = vmatpush1.bf16.msra.mxu0 %v1072
    %1166 = vmatprep.subr.bf16.mxu0 0
    %1167 = vmatpush2.bf16.msra.mxu0 0
    %1168 = vmatprep.subr.bf16.mxu0 0
    %1169 = vmatpush2.bf16.msra.mxu0 0
    %1170 = vmatprep.subr.bf16.mxu0 0
    %1171 = vmatpush2.bf16.msra.mxu0 0
    %1172 = vmatprep.subr.bf16.mxu0 0
    %1173 = vmatpush2.bf16.msra.mxu0 0
    %1174 = vmatprep.subr.bf16.mxu0 0
    %1175 = vmatpush2.bf16.msra.mxu0 0
    %1176 = vmatprep.subr.bf16.mxu0 0
    %1177 = vmatpush2.bf16.msra.mxu0 0
    %1178 = vmatprep.subr.bf16.mxu0 0
    %1179 = vmatpush2.bf16.msra.mxu0 0
    %1180 = vmatprep.subr.bf16.mxu0 0
    %1181 = vmatpush2.bf16.msra.mxu0 0
    %1182 = vmatprep.mubr.bf16.mxu0 0
    %1183 = vmatmul.mubr.bf16.gmra.mxu0 %v1148
    %v1184 = vpop.f32.mrf.mxu0
    %v1185 = vadd.f32 0.0, %v1184
    %v1186 = vpop.f32.mrf.mxu0
    %v1187 = vpop.f32.mrf.mxu0
    %v1188 = vpop.f32.mrf.mxu0
    %1189 = vdwg.mxu0
    %v1190 = vadd.f32 %v461, %v1185
    %v1191 = vtanh.pop %v1190
    %v1192 = vmul.f32 %v1191, %v133
    %v1193 = vadd.f32 %v1192, %v134
    %v1194 = vmul.f32 %v1193, %v1130
    %1196 = vrot.lane.b32.xlu0 %v1193, 64
    %v1197 = vpop.permute.xlu0 %1196
    %v1199 = vmul.f32 %v1193, %v1197
    %1201 = vrot.lane.b32.xlu0 %v1199, 32
    %v1202 = vpop.permute.xlu0 %1201
    %v1204 = vadd.f32 %v1194, %v1202
    %v1205 = vtanh.pop %v1204
    %1207 = vrot.lane.b32.xlu0 %v1205, 64
    %v1208 = vpop.permute.xlu0 %1207
    %v1210 = vmul.f32 %v1193, %v1208
    %1212 = vrot.lane.b32.xlu0 %v1210, 64
    %v1213 = vpop.permute.xlu0 %1212
    %1215 = vst.msk [vmem:[#allocation2 + $0x30] sm:$0xff] %vm1141, %v1213
    %v1216 = vpack.c.bf16 %v1210, %v1210
    %1218 = vrot.lane.b32.xlu0 %v1216, 32
    %v1219 = vpop.permute.xlu0 %1218
    %v1221 = vsel %vm351, %v1219, 0
    %1223 = vmatprep.subr.bf16.mxu0 0
    %1224 = vmatpush1.bf16.msra.mxu0 0
    %1225 = vmatprep.subr.bf16.mxu0 0
    %1226 = vmatpush1.bf16.msra.mxu0 0
    %1227 = vmatprep.subr.bf16.mxu0 0
    %1228 = vmatpush1.bf16.msra.mxu0 0
    %1229 = vmatprep.subr.bf16.mxu0 0
    %1230 = vmatpush1.bf16.msra.mxu0 0
    %1231 = vmatprep.subr.bf16.mxu0 0
    %1232 = vmatpush1.bf16.msra.mxu0 0
    %1233 = vmatprep.subr.bf16.mxu0 0
    %1234 = vmatpush1.bf16.msra.mxu0 0
    %1235 = vmatprep.subr.bf16.mxu0 0
    %1236 = vmatpush1.bf16.msra.mxu0 %v1073
    %1237 = vmatprep.subr.bf16.mxu0 0
    %1238 = vmatpush1.bf16.msra.mxu0 %v1072
    %1239 = vmatprep.subr.bf16.mxu0 0
    %1240 = vmatpush2.bf16.msra.mxu0 0
    %1241 = vmatprep.subr.bf16.mxu0 0
    %1242 = vmatpush2.bf16.msra.mxu0 0
    %1243 = vmatprep.subr.bf16.mxu0 0
    %1244 = vmatpush2.bf16.msra.mxu0 0
    %1245 = vmatprep.subr.bf16.mxu0 0
    %1246 = vmatpush2.bf16.msra.mxu0 0
    %1247 = vmatprep.subr.bf16.mxu0 0
    %1248 = vmatpush2.bf16.msra.mxu0 0
    %1249 = vmatprep.subr.bf16.mxu0 0
    %1250 = vmatpush2.bf16.msra.mxu0 0
    %1251 = vmatprep.subr.bf16.mxu0 0
    %1252 = vmatpush2.bf16.msra.mxu0 0
    %1253 = vmatprep.subr.bf16.mxu0 0
    %1254 = vmatpush2.bf16.msra.mxu0 0
    %1255 = vmatprep.mubr.bf16.mxu0 0
    %1256 = vmatmul.mubr.bf16.gmra.mxu0 %v1221
    %v1257 = vpop.f32.mrf.mxu0
    %v1258 = vadd.f32 0.0, %v1257
    %v1259 = vpop.f32.mrf.mxu0
    %v1260 = vpop.f32.mrf.mxu0
    %v1261 = vpop.f32.mrf.mxu0
    %1262 = vdwg.mxu0
    %v1263 = vadd.f32 %v460, %v1258
    %v1264 = vtanh.pop %v1263
    %v1265 = vmul.f32 %v1264, %v133
    %v1266 = vadd.f32 %v1265, %v134
    %v1267 = vmul.f32 %v1266, %v1204
    %1269 = vrot.lane.b32.xlu0 %v1266, 64
    %v1270 = vpop.permute.xlu0 %1269
    %v1272 = vmul.f32 %v1266, %v1270
    %1274 = vrot.lane.b32.xlu0 %v1272, 32
    %v1275 = vpop.permute.xlu0 %1274
    %v1277 = vadd.f32 %v1267, %v1275
    %v1278 = vtanh.pop %v1277
    %1280 = vrot.lane.b32.xlu0 %v1278, 64
    %v1281 = vpop.permute.xlu0 %1280
    %v1283 = vmul.f32 %v1266, %v1281
    %1285 = vrot.lane.b32.xlu0 %v1283, 64
    %v1286 = vpop.permute.xlu0 %1285
    %1288 = vst.msk [vmem:[#allocation2 + $0x28] sm:$0xff] %vm1141, %v1286
    %v1289 = vpack.c.bf16 %v1283, %v1283
    %1291 = vrot.lane.b32.xlu0 %v1289, 32
    %v1292 = vpop.permute.xlu0 %1291
    %v1294 = vsel %vm351, %v1292, 0
    %1296 = vmatprep.subr.bf16.mxu0 0
    %1297 = vmatpush1.bf16.msra.mxu0 0
    %1298 = vmatprep.subr.bf16.mxu0 0
    %1299 = vmatpush1.bf16.msra.mxu0 0
    %1300 = vmatprep.subr.bf16.mxu0 0
    %1301 = vmatpush1.bf16.msra.mxu0 0
    %1302 = vmatprep.subr.bf16.mxu0 0
    %1303 = vmatpush1.bf16.msra.mxu0 0
    %1304 = vmatprep.subr.bf16.mxu0 0
    %1305 = vmatpush1.bf16.msra.mxu0 0
    %1306 = vmatprep.subr.bf16.mxu0 0
    %1307 = vmatpush1.bf16.msra.mxu0 0
    %1308 = vmatprep.subr.bf16.mxu0 0
    %1309 = vmatpush1.bf16.msra.mxu0 %v1073
    %1310 = vmatprep.subr.bf16.mxu0 0
    %1311 = vmatpush1.bf16.msra.mxu0 %v1072
    %1312 = vmatprep.subr.bf16.mxu0 0
    %1313 = vmatpush2.bf16.msra.mxu0 0
    %1314 = vmatprep.subr.bf16.mxu0 0
    %1315 = vmatpush2.bf16.msra.mxu0 0
    %1316 = vmatprep.subr.bf16.mxu0 0
    %1317 = vmatpush2.bf16.msra.mxu0 0
    %1318 = vmatprep.subr.bf16.mxu0 0
    %1319 = vmatpush2.bf16.msra.mxu0 0
    %1320 = vmatprep.subr.bf16.mxu0 0
    %1321 = vmatpush2.bf16.msra.mxu0 0
    %1322 = vmatprep.subr.bf16.mxu0 0
    %1323 = vmatpush2.bf16.msra.mxu0 0
    %1324 = vmatprep.subr.bf16.mxu0 0
    %1325 = vmatpush2.bf16.msra.mxu0 0
    %1326 = vmatprep.subr.bf16.mxu0 0
    %1327 = vmatpush2.bf16.msra.mxu0 0
    %1328 = vmatprep.mubr.bf16.mxu0 0
    %1329 = vmatmul.mubr.bf16.gmra.mxu0 %v1294
    %v1330 = vpop.f32.mrf.mxu0
    %v1331 = vadd.f32 0.0, %v1330
    %v1332 = vpop.f32.mrf.mxu0
    %v1333 = vpop.f32.mrf.mxu0
    %v1334 = vpop.f32.mrf.mxu0
    %1335 = vdwg.mxu0
    %v1336 = vadd.f32 %v459, %v1331
    %v1337 = vtanh.pop %v1336
    %v1338 = vmul.f32 %v1337, %v133
    %v1339 = vadd.f32 %v1338, %v134
    %v1340 = vmul.f32 %v1339, %v1277
    %1342 = vrot.lane.b32.xlu0 %v1339, 64
    %v1343 = vpop.permute.xlu0 %1342
    %v1345 = vmul.f32 %v1339, %v1343
    %1347 = vrot.lane.b32.xlu0 %v1345, 32
    %v1348 = vpop.permute.xlu0 %1347
    %v1350 = vadd.f32 %v1340, %v1348
    %v1351 = vtanh.pop %v1350
    %1353 = vrot.lane.b32.xlu0 %v1351, 64
    %v1354 = vpop.permute.xlu0 %1353
    %v1356 = vmul.f32 %v1339, %v1354
    %1358 = vrot.lane.b32.xlu0 %v1356, 64
    %v1359 = vpop.permute.xlu0 %1358
    %1361 = vst.msk [vmem:[#allocation2 + $0x20] sm:$0xff] %vm1141, %v1359
    %v1362 = vpack.c.bf16 %v1356, %v1356
    %1364 = vrot.lane.b32.xlu0 %v1362, 32
    %v1365 = vpop.permute.xlu0 %1364
    %v1367 = vsel %vm351, %v1365, 0
    %1369 = vmatprep.subr.bf16.mxu0 0
    %1370 = vmatpush1.bf16.msra.mxu0 0
    %1371 = vmatprep.subr.bf16.mxu0 0
    %1372 = vmatpush1.bf16.msra.mxu0 0
    %1373 = vmatprep.subr.bf16.mxu0 0
    %1374 = vmatpush1.bf16.msra.mxu0 0
    %1375 = vmatprep.subr.bf16.mxu0 0
    %1376 = vmatpush1.bf16.msra.mxu0 0
    %1377 = vmatprep.subr.bf16.mxu0 0
    %1378 = vmatpush1.bf16.msra.mxu0 0
    %1379 = vmatprep.subr.bf16.mxu0 0
    %1380 = vmatpush1.bf16.msra.mxu0 0
    %1381 = vmatprep.subr.bf16.mxu0 0
    %1382 = vmatpush1.bf16.msra.mxu0 %v1073
    %1383 = vmatprep.subr.bf16.mxu0 0
    %1384 = vmatpush1.bf16.msra.mxu0 %v1072
    %1385 = vmatprep.subr.bf16.mxu0 0
    %1386 = vmatpush2.bf16.msra.mxu0 0
    %1387 = vmatprep.subr.bf16.mxu0 0
    %1388 = vmatpush2.bf16.msra.mxu0 0
    %1389 = vmatprep.subr.bf16.mxu0 0
    %1390 = vmatpush2.bf16.msra.mxu0 0
    %1391 = vmatprep.subr.bf16.mxu0 0
    %1392 = vmatpush2.bf16.msra.mxu0 0
    %1393 = vmatprep.subr.bf16.mxu0 0
    %1394 = vmatpush2.bf16.msra.mxu0 0
    %1395 = vmatprep.subr.bf16.mxu0 0
    %1396 = vmatpush2.bf16.msra.mxu0 0
    %1397 = vmatprep.subr.bf16.mxu0 0
    %1398 = vmatpush2.bf16.msra.mxu0 0
    %1399 = vmatprep.subr.bf16.mxu0 0
    %1400 = vmatpush2.bf16.msra.mxu0 0
    %1401 = vmatprep.mubr.bf16.mxu0 0
    %1402 = vmatmul.mubr.bf16.gmra.mxu0 %v1367
    %v1403 = vpop.f32.mrf.mxu0
    %v1404 = vadd.f32 0.0, %v1403
    %v1405 = vpop.f32.mrf.mxu0
    %v1406 = vpop.f32.mrf.mxu0
    %v1407 = vpop.f32.mrf.mxu0
    %1408 = vdwg.mxu0
    %v1409 = vadd.f32 %v458, %v1404
    %v1410 = vtanh.pop %v1409
    %v1411 = vmul.f32 %v1410, %v133
    %v1412 = vadd.f32 %v1411, %v134
    %v1413 = vmul.f32 %v1412, %v1350
    %1415 = vrot.lane.b32.xlu0 %v1412, 64
    %v1416 = vpop.permute.xlu0 %1415
    %v1418 = vmul.f32 %v1412, %v1416
    %1420 = vrot.lane.b32.xlu0 %v1418, 32
    %v1421 = vpop.permute.xlu0 %1420
    %v1423 = vadd.f32 %v1413, %v1421
    %v1424 = vtanh.pop %v1423
    %1426 = vrot.lane.b32.xlu0 %v1424, 64
    %v1427 = vpop.permute.xlu0 %1426
    %v1429 = vmul.f32 %v1412, %v1427
    %1431 = vrot.lane.b32.xlu0 %v1429, 64
    %v1432 = vpop.permute.xlu0 %1431
    %1434 = vst.msk [vmem:[#allocation2 + $0x18] sm:$0xff] %vm1141, %v1432
    %v1435 = vpack.c.bf16 %v1429, %v1429
    %1437 = vrot.lane.b32.xlu0 %v1435, 32
    %v1438 = vpop.permute.xlu0 %1437
    %v1440 = vsel %vm351, %v1438, 0
    %1442 = vmatprep.subr.bf16.mxu0 0
    %1443 = vmatpush1.bf16.msra.mxu0 0
    %1444 = vmatprep.subr.bf16.mxu0 0
    %1445 = vmatpush1.bf16.msra.mxu0 0
    %1446 = vmatprep.subr.bf16.mxu0 0
    %1447 = vmatpush1.bf16.msra.mxu0 0
    %1448 = vmatprep.subr.bf16.mxu0 0
    %1449 = vmatpush1.bf16.msra.mxu0 0
    %1450 = vmatprep.subr.bf16.mxu0 0
    %1451 = vmatpush1.bf16.msra.mxu0 0
    %1452 = vmatprep.subr.bf16.mxu0 0
    %1453 = vmatpush1.bf16.msra.mxu0 0
    %1454 = vmatprep.subr.bf16.mxu0 0
    %1455 = vmatpush1.bf16.msra.mxu0 %v1073
    %1456 = vmatprep.subr.bf16.mxu0 0
    %1457 = vmatpush1.bf16.msra.mxu0 %v1072
    %1458 = vmatprep.subr.bf16.mxu0 0
    %1459 = vmatpush2.bf16.msra.mxu0 0
    %1460 = vmatprep.subr.bf16.mxu0 0
    %1461 = vmatpush2.bf16.msra.mxu0 0
    %1462 = vmatprep.subr.bf16.mxu0 0
    %1463 = vmatpush2.bf16.msra.mxu0 0
    %1464 = vmatprep.subr.bf16.mxu0 0
    %1465 = vmatpush2.bf16.msra.mxu0 0
    %1466 = vmatprep.subr.bf16.mxu0 0
    %1467 = vmatpush2.bf16.msra.mxu0 0
    %1468 = vmatprep.subr.bf16.mxu0 0
    %1469 = vmatpush2.bf16.msra.mxu0 0
    %1470 = vmatprep.subr.bf16.mxu0 0
    %1471 = vmatpush2.bf16.msra.mxu0 0
    %1472 = vmatprep.subr.bf16.mxu0 0
    %1473 = vmatpush2.bf16.msra.mxu0 0
    %1474 = vmatprep.mubr.bf16.mxu0 0
    %1475 = vmatmul.mubr.bf16.gmra.mxu0 %v1440
    %v1476 = vpop.f32.mrf.mxu0
    %v1477 = vadd.f32 0.0, %v1476
    %v1478 = vpop.f32.mrf.mxu0
    %v1479 = vpop.f32.mrf.mxu0
    %v1480 = vpop.f32.mrf.mxu0
    %1481 = vdwg.mxu0
    %v1482 = vadd.f32 %v457, %v1477
    %v1483 = vtanh.pop %v1482
    %v1484 = vmul.f32 %v1483, %v133
    %v1485 = vadd.f32 %v1484, %v134
    %v1486 = vmul.f32 %v1485, %v1423
    %1488 = vrot.lane.b32.xlu0 %v1485, 64
    %v1489 = vpop.permute.xlu0 %1488
    %v1491 = vmul.f32 %v1485, %v1489
    %1493 = vrot.lane.b32.xlu0 %v1491, 32
    %v1494 = vpop.permute.xlu0 %1493
    %v1496 = vadd.f32 %v1486, %v1494
    %v1497 = vtanh.pop %v1496
    %1499 = vrot.lane.b32.xlu0 %v1497, 64
    %v1500 = vpop.permute.xlu0 %1499
    %v1502 = vmul.f32 %v1485, %v1500
    %1504 = vrot.lane.b32.xlu0 %v1502, 64
    %v1505 = vpop.permute.xlu0 %1504
    %1507 = vst.msk [vmem:[#allocation2 + $0x10] sm:$0xff] %vm1141, %v1505
    %v1508 = vpack.c.bf16 %v1502, %v1502
    %1510 = vrot.lane.b32.xlu0 %v1508, 32
    %v1511 = vpop.permute.xlu0 %1510
    %v1513 = vsel %vm351, %v1511, 0
    %1515 = vmatprep.subr.bf16.mxu0 0
    %1516 = vmatpush1.bf16.msra.mxu0 0
    %1517 = vmatprep.subr.bf16.mxu0 0
    %1518 = vmatpush1.bf16.msra.mxu0 0
    %1519 = vmatprep.subr.bf16.mxu0 0
    %1520 = vmatpush1.bf16.msra.mxu0 0
    %1521 = vmatprep.subr.bf16.mxu0 0
    %1522 = vmatpush1.bf16.msra.mxu0 0
    %1523 = vmatprep.subr.bf16.mxu0 0
    %1524 = vmatpush1.bf16.msra.mxu0 0
    %1525 = vmatprep.subr.bf16.mxu0 0
    %1526 = vmatpush1.bf16.msra.mxu0 0
    %1527 = vmatprep.subr.bf16.mxu0 0
    %1528 = vmatpush1.bf16.msra.mxu0 %v1073
    %1529 = vmatprep.subr.bf16.mxu0 0
    %1530 = vmatpush1.bf16.msra.mxu0 %v1072
    %1531 = vmatprep.subr.bf16.mxu0 0
    %1532 = vmatpush2.bf16.msra.mxu0 0
    %1533 = vmatprep.subr.bf16.mxu0 0
    %1534 = vmatpush2.bf16.msra.mxu0 0
    %1535 = vmatprep.subr.bf16.mxu0 0
    %1536 = vmatpush2.bf16.msra.mxu0 0
    %1537 = vmatprep.subr.bf16.mxu0 0
    %1538 = vmatpush2.bf16.msra.mxu0 0
    %1539 = vmatprep.subr.bf16.mxu0 0
    %1540 = vmatpush2.bf16.msra.mxu0 0
    %1541 = vmatprep.subr.bf16.mxu0 0
    %1542 = vmatpush2.bf16.msra.mxu0 0
    %1543 = vmatprep.subr.bf16.mxu0 0
    %1544 = vmatpush2.bf16.msra.mxu0 0
    %1545 = vmatprep.subr.bf16.mxu0 0
    %1546 = vmatpush2.bf16.msra.mxu0 0
    %1547 = vmatprep.mubr.bf16.mxu0 0
    %1548 = vmatmul.mubr.bf16.gmra.mxu0 %v1513
    %v1549 = vpop.f32.mrf.mxu0
    %v1550 = vadd.f32 0.0, %v1549
    %v1551 = vpop.f32.mrf.mxu0
    %v1552 = vpop.f32.mrf.mxu0
    %v1553 = vpop.f32.mrf.mxu0
    %1554 = vdwg.mxu0
    %v1555 = vadd.f32 %v456, %v1550
    %v1556 = vtanh.pop %v1555
    %v1557 = vmul.f32 %v1556, %v133
    %v1558 = vadd.f32 %v1557, %v134
    %v1559 = vmul.f32 %v1558, %v1496
    %1561 = vrot.lane.b32.xlu0 %v1558, 64
    %v1562 = vpop.permute.xlu0 %1561
    %v1564 = vmul.f32 %v1558, %v1562
    %1566 = vrot.lane.b32.xlu0 %v1564, 32
    %v1567 = vpop.permute.xlu0 %1566
    %v1569 = vadd.f32 %v1559, %v1567
    %v1570 = vtanh.pop %v1569
    %1572 = vrot.lane.b32.xlu0 %v1570, 64
    %v1573 = vpop.permute.xlu0 %1572
    %v1575 = vmul.f32 %v1558, %v1573
    %1577 = vrot.lane.b32.xlu0 %v1575, 64
    %v1578 = vpop.permute.xlu0 %1577
    %1580 = vst.msk [vmem:[#allocation2 + $0x8] sm:$0xff] %vm1141, %v1578
    %v1581 = vpack.c.bf16 %v1575, %v1575
    %1583 = vrot.lane.b32.xlu0 %v1581, 32
    %v1584 = vpop.permute.xlu0 %1583
    %v1586 = vsel %vm351, %v1584, 0
    %1588 = vmatprep.subr.bf16.mxu0 0
    %1589 = vmatpush1.bf16.msra.mxu0 0
    %1590 = vmatprep.subr.bf16.mxu0 0
    %1591 = vmatpush1.bf16.msra.mxu0 0
    %1592 = vmatprep.subr.bf16.mxu0 0
    %1593 = vmatpush1.bf16.msra.mxu0 0
    %1594 = vmatprep.subr.bf16.mxu0 0
    %1595 = vmatpush1.bf16.msra.mxu0 0
    %1596 = vmatprep.subr.bf16.mxu0 0
    %1597 = vmatpush1.bf16.msra.mxu0 0
    %1598 = vmatprep.subr.bf16.mxu0 0
    %1599 = vmatpush1.bf16.msra.mxu0 0
    %1600 = vmatprep.subr.bf16.mxu0 0
    %1601 = vmatpush1.bf16.msra.mxu0 %v1073
    %1602 = vmatprep.subr.bf16.mxu0 0
    %1603 = vmatpush1.bf16.msra.mxu0 %v1072
    %1604 = vmatprep.subr.bf16.mxu0 0
    %1605 = vmatpush2.bf16.msra.mxu0 0
    %1606 = vmatprep.subr.bf16.mxu0 0
    %1607 = vmatpush2.bf16.msra.mxu0 0
    %1608 = vmatprep.subr.bf16.mxu0 0
    %1609 = vmatpush2.bf16.msra.mxu0 0
    %1610 = vmatprep.subr.bf16.mxu0 0
    %1611 = vmatpush2.bf16.msra.mxu0 0
    %1612 = vmatprep.subr.bf16.mxu0 0
    %1613 = vmatpush2.bf16.msra.mxu0 0
    %1614 = vmatprep.subr.bf16.mxu0 0
    %1615 = vmatpush2.bf16.msra.mxu0 0
    %1616 = vmatprep.subr.bf16.mxu0 0
    %1617 = vmatpush2.bf16.msra.mxu0 0
    %1618 = vmatprep.subr.bf16.mxu0 0
    %1619 = vmatpush2.bf16.msra.mxu0 0
    %1620 = vmatprep.mubr.bf16.mxu0 0
    %1621 = vmatmul.mubr.bf16.gmra.mxu0 %v1586
    %v1622 = vpop.f32.mrf.mxu0
    %v1623 = vadd.f32 0.0, %v1622
    %v1624 = vpop.f32.mrf.mxu0
    %v1625 = vpop.f32.mrf.mxu0
    %v1626 = vpop.f32.mrf.mxu0
    %1627 = vdwg.mxu0
    %v1628 = vadd.f32 %v455, %v1623
    %v1629 = vtanh.pop %v1628
    %v1630 = vmul.f32 %v1629, %v133
    %v1631 = vadd.f32 %v1630, %v134
    %v1632 = vmul.f32 %v1631, %v1569
    %1634 = vrot.lane.b32.xlu0 %v1631, 64
    %v1635 = vpop.permute.xlu0 %1634
    %v1637 = vmul.f32 %v1631, %v1635
    %1639 = vrot.lane.b32.xlu0 %v1637, 32
    %v1640 = vpop.permute.xlu0 %1639
    %v1642 = vadd.f32 %v1632, %v1640
    %v1643 = vtanh.pop %v1642
    %1645 = vrot.lane.b32.xlu0 %v1643, 64
    %v1646 = vpop.permute.xlu0 %1645
    %v1648 = vmul.f32 %v1631, %v1646
    %1650 = vrot.lane.b32.xlu0 %v1648, 64
    %v1651 = vpop.permute.xlu0 %1650
    %1653 = vst.msk [vmem:[#allocation2] sm:$0xff] %vm1141, %v1651
    %v1654 = vld [vmem:[#allocation2] sm:$0xff]
    %v1655 = vld [vmem:[#allocation2 + $0x8] sm:$0xff]
    %v1656 = vld [vmem:[#allocation2 + $0x10] sm:$0xff]
    %v1657 = vld [vmem:[#allocation2 + $0x18] sm:$0xff]
    %v1658 = vld [vmem:[#allocation2 + $0x20] sm:$0xff]
    %v1659 = vld [vmem:[#allocation2 + $0x28] sm:$0xff]
    %v1660 = vld [vmem:[#allocation2 + $0x30] sm:$0xff]
    %v1661 = vld [vmem:[#allocation2 + $0x38] sm:$0xff]
    %v1662 = vpack.c.bf16 %v1655, %v1654
    %v1663 = vpack.c.bf16 %v1657, %v1656
    %v1664 = vpack.c.bf16 %v1659, %v1658
    %v1665 = vpack.c.bf16 %v1661, %v1660
    %v1666 = vld [vmem:[%s9] sm:$0xff]
    %v1667 = vld [vmem:[%s9 + $0x8] sm:$0xff]
    %v1668 = vld [vmem:[%s9 + $0x10] sm:$0xff]
    %v1669 = vld [vmem:[%s9 + $0x18] sm:$0xff]
    %v1670 = vld [vmem:[%s9 + $0x20] sm:$0xff]
    %v1671 = vld [vmem:[%s9 + $0x28] sm:$0xff]
    %v1672 = vld [vmem:[%s9 + $0x30] sm:$0xff]
    %v1673 = vld [vmem:[%s9 + $0x38] sm:$0xff]
    %v1682 = vunpack.c.l.b16 %v1666
    %v1683 = vunpack.c.h.b16 %v1666
    %v1684 = vunpack.c.l.b16 %v1667
    %v1685 = vunpack.c.h.b16 %v1667
    %v1686 = vunpack.c.l.b16 %v1668
    %v1687 = vunpack.c.h.b16 %v1668
    %v1688 = vunpack.c.l.b16 %v1669
    %v1689 = vunpack.c.h.b16 %v1669
    %v1690 = vunpack.c.l.b16 %v1670
    %v1691 = vunpack.c.h.b16 %v1670
    %v1692 = vunpack.c.l.b16 %v1671
    %v1693 = vunpack.c.h.b16 %v1671
    %v1694 = vunpack.c.l.b16 %v1672
    %v1695 = vunpack.c.h.b16 %v1672
    %v1696 = vunpack.c.l.b16 %v1673
    %v1697 = vunpack.c.h.b16 %v1673
    %v1698 = vpack.c.b16 %v1684, %v1682
    %v1699 = vpack.c.b16 %v1685, %v1683
    %v1700 = vpack.c.b16 %v1688, %v1686
    %v1701 = vpack.c.b16 %v1689, %v1687
    %v1702 = vpack.c.b16 %v1692, %v1690
    %v1703 = vpack.c.b16 %v1693, %v1691
    %v1704 = vpack.c.b16 %v1696, %v1694
    %v1705 = vpack.c.b16 %v1697, %v1695
    %vm1714 = vcmask 523264
    %v1716 = vsel %vm1714, %v1662, 0
    %v1719 = vsel %vm1714, %v1663, 0
    %v1722 = vsel %vm1714, %v1664, 0
    %v1725 = vsel %vm1714, %v1665, 0
    %1727 = vmatprep.subr.bf16.mxu0 0
    %1728 = vmatpush1.bf16.msra.mxu0 0
    %1729 = vmatprep.subr.bf16.mxu0 0
    %1730 = vmatpush1.bf16.msra.mxu0 0
    %1731 = vmatprep.subr.bf16.mxu0 0
    %1732 = vmatpush1.bf16.msra.mxu0 0
    %1733 = vmatprep.subr.bf16.mxu0 0
    %1734 = vmatpush1.bf16.msra.mxu0 0
    %1735 = vmatprep.subr.bf16.mxu0 %v1705
    %1736 = vmatpush1.bf16.msra.mxu0 %v1704
    %1737 = vmatprep.subr.bf16.mxu0 %v1703
    %1738 = vmatpush1.bf16.msra.mxu0 %v1702
    %1739 = vmatprep.subr.bf16.mxu0 %v1701
    %1740 = vmatpush1.bf16.msra.mxu0 %v1700
    %1741 = vmatprep.subr.bf16.mxu0 %v1699
    %1742 = vmatpush1.bf16.msra.mxu0 %v1698
    %1743 = vmatprep.subr.bf16.mxu0 0
    %1744 = vmatpush2.bf16.msra.mxu0 0
    %1745 = vmatprep.subr.bf16.mxu0 0
    %1746 = vmatpush2.bf16.msra.mxu0 0
    %1747 = vmatprep.subr.bf16.mxu0 0
    %1748 = vmatpush2.bf16.msra.mxu0 0
    %1749 = vmatprep.subr.bf16.mxu0 0
    %1750 = vmatpush2.bf16.msra.mxu0 0
    %1751 = vmatprep.subr.bf16.mxu0 0
    %1752 = vmatpush2.bf16.msra.mxu0 0
    %1753 = vmatprep.subr.bf16.mxu0 0
    %1754 = vmatpush2.bf16.msra.mxu0 0
    %1755 = vmatprep.subr.bf16.mxu0 0
    %1756 = vmatpush2.bf16.msra.mxu0 0
    %1757 = vmatprep.subr.bf16.mxu0 0
    %1758 = vmatpush2.bf16.msra.mxu0 0
    %1759 = vmatprep.mubr.bf16.mxu0 0
    %1760 = vmatmul.mubr.bf16.gmra.mxu0 %v1716
    %v1761 = vpop.f32.mrf.mxu0
    %v1762 = vadd.f32 0.0, %v1761
    %v1763 = vpop.f32.mrf.mxu0
    %v1764 = vadd.f32 0.0, %v1763
    %v1765 = vpop.f32.mrf.mxu0
    %v1766 = vadd.f32 0.0, %v1765
    %v1767 = vpop.f32.mrf.mxu0
    %v1768 = vadd.f32 0.0, %v1767
    %1769 = vmatprep.mubr.bf16.mxu0 0
    %1770 = vmatmul.mubr.bf16.gmra.mxu0 %v1719
    %v1771 = vpop.f32.mrf.mxu0
    %v1772 = vadd.f32 0.0, %v1771
    %v1773 = vpop.f32.mrf.mxu0
    %v1774 = vadd.f32 0.0, %v1773
    %v1775 = vpop.f32.mrf.mxu0
    %v1776 = vadd.f32 0.0, %v1775
    %v1777 = vpop.f32.mrf.mxu0
    %v1778 = vadd.f32 0.0, %v1777
    %1779 = vmatprep.mubr.bf16.mxu0 0
    %1780 = vmatmul.mubr.bf16.gmra.mxu0 %v1722
    %v1781 = vpop.f32.mrf.mxu0
    %v1782 = vadd.f32 0.0, %v1781
    %v1783 = vpop.f32.mrf.mxu0
    %v1784 = vadd.f32 0.0, %v1783
    %v1785 = vpop.f32.mrf.mxu0
    %v1786 = vadd.f32 0.0, %v1785
    %v1787 = vpop.f32.mrf.mxu0
    %v1788 = vadd.f32 0.0, %v1787
    %1789 = vmatprep.mubr.bf16.mxu0 0
    %1790 = vmatmul.mubr.bf16.gmra.mxu0 %v1725
    %v1791 = vpop.f32.mrf.mxu0
    %v1792 = vadd.f32 0.0, %v1791
    %v1793 = vpop.f32.mrf.mxu0
    %v1794 = vadd.f32 0.0, %v1793
    %v1795 = vpop.f32.mrf.mxu0
    %v1796 = vadd.f32 0.0, %v1795
    %v1797 = vpop.f32.mrf.mxu0
    %v1798 = vadd.f32 0.0, %v1797
    %1799 = vdwg.mxu0
    %v1800 = vld [vmem:[%s11 + $0x2] sm:$0x1]
    %v1801 = vlaneseq
    %v1802 = vshrl.u32 %v1801, 7
    %v1803 = vsub.s32 0, %v1802
    %v1804 = vrot.slane %v1800, %v1803
    %v1805 = vadd.f32 %v1762, %v1804
    %v1806 = vadd.f32 %v1766, %v1804
    %v1807 = vadd.f32 %v1772, %v1804
    %v1808 = vadd.f32 %v1776, %v1804
    %v1809 = vadd.f32 %v1782, %v1804
    %v1810 = vadd.f32 %v1786, %v1804
    %v1811 = vadd.f32 %v1792, %v1804
    %v1812 = vadd.f32 %v1796, %v1804
    %v1813 = vld [vmem:[%s11 + $0x3] sm:$0x1]
    %v1814 = vlaneseq
    %v1815 = vshrl.u32 %v1814, 7
    %v1816 = vsub.s32 0, %v1815
    %v1817 = vrot.slane %v1813, %v1816
    %v1818 = vadd.f32 %v1764, %v1817
    %v1819 = vadd.f32 %v1768, %v1817
    %v1820 = vadd.f32 %v1774, %v1817
    %v1821 = vadd.f32 %v1778, %v1817
    %v1822 = vadd.f32 %v1784, %v1817
    %v1823 = vadd.f32 %v1788, %v1817
    %v1824 = vadd.f32 %v1794, %v1817
    %v1825 = vadd.f32 %v1798, %v1817
    %v1826 = vld [vmem:[#allocation12] sm:$0xf]
    %v1827 = vld [vmem:[#allocation12 + $0x4] sm:$0xf]
    %v1828 = vld [vmem:[#allocation12 + $0x8] sm:$0xf]
    %v1829 = vld [vmem:[#allocation12 + $0xc] sm:$0xf]
    %v1834 = vunpack.c.l.b16 %v1826
    %v1835 = vunpack.c.l.b16 %v1827
    %v1836 = vunpack.c.l.b16 %v1828
    %v1837 = vunpack.c.l.b16 %v1829
    %v1838 = vpack.c.b16 %v1835, %v1834
    %v1839 = vpack.c.b16 %v1837, %v1836
    %1842 = vmatprep.subr.bf16.mxu0 0
    %1843 = vmatpush1.bf16.msra.mxu0 0
    %1844 = vmatprep.subr.bf16.mxu0 0
    %1845 = vmatpush1.bf16.msra.mxu0 0
    %1846 = vmatprep.subr.bf16.mxu0 0
    %1847 = vmatpush1.bf16.msra.mxu0 0
    %1848 = vmatprep.subr.bf16.mxu0 0
    %1849 = vmatpush1.bf16.msra.mxu0 0
    %1850 = vmatprep.subr.bf16.mxu0 0
    %1851 = vmatpush1.bf16.msra.mxu0 0
    %1852 = vmatprep.subr.bf16.mxu0 0
    %1853 = vmatpush1.bf16.msra.mxu0 0
    %1854 = vmatprep.subr.bf16.mxu0 0
    %1855 = vmatpush1.bf16.msra.mxu0 %v1839
    %1856 = vmatprep.subr.bf16.mxu0 0
    %1857 = vmatpush1.bf16.msra.mxu0 %v1838
    %1858 = vmatprep.subr.bf16.mxu0 0
    %1859 = vmatpush2.bf16.msra.mxu0 0
    %1860 = vmatprep.subr.bf16.mxu0 0
    %1861 = vmatpush2.bf16.msra.mxu0 0
    %1862 = vmatprep.subr.bf16.mxu0 0
    %1863 = vmatpush2.bf16.msra.mxu0 0
    %1864 = vmatprep.subr.bf16.mxu0 0
    %1865 = vmatpush2.bf16.msra.mxu0 0
    %1866 = vmatprep.subr.bf16.mxu0 0
    %1867 = vmatpush2.bf16.msra.mxu0 0
    %1868 = vmatprep.subr.bf16.mxu0 0
    %1869 = vmatpush2.bf16.msra.mxu0 0
    %1870 = vmatprep.subr.bf16.mxu0 0
    %1871 = vmatpush2.bf16.msra.mxu0 0
    %1872 = vmatprep.subr.bf16.mxu0 0
    %1873 = vmatpush2.bf16.msra.mxu0 0
    %1874 = vmatprep.mubr.bf16.mxu0 0
    %1875 = vmatmul.mubr.bf16.gmra.mxu0 %v480
    %v1876 = vpop.f32.mrf.mxu0
    %v1877 = vadd.f32 0.0, %v1876
    %v1878 = vpop.f32.mrf.mxu0
    %v1879 = vpop.f32.mrf.mxu0
    %v1880 = vpop.f32.mrf.mxu0
    %1881 = vdwg.mxu0
    %v1882 = vadd.f32 %v1805, %v1877
    %v1883 = vtanh.pop %v1882
    %v1884 = vmul.f32 %v1883, %v133
    %v1885 = vadd.f32 %v1884, %v134
    %v1886 = vmul.f32 %v1885, 0.0
    %1888 = vrot.lane.b32.xlu0 %v1885, 64
    %v1889 = vpop.permute.xlu0 %1888
    %v1891 = vmul.f32 %v1885, %v1889
    %1893 = vrot.lane.b32.xlu0 %v1891, 32
    %v1894 = vpop.permute.xlu0 %1893
    %v1896 = vadd.f32 %v1886, %v1894
    %v1897 = vtanh.pop %v1896
    %1899 = vrot.lane.b32.xlu0 %v1897, 64
    %v1900 = vpop.permute.xlu0 %1899
    %v1902 = vmul.f32 %v1885, %v1900
    %v1903 = vpack.c.bf16 %v1902, %v1902
    %1905 = vrot.lane.b32.xlu0 %v1903, 32
    %v1906 = vpop.permute.xlu0 %1905
    %v1908 = vsel %vm351, %v1906, 0
    %1910 = vmatprep.subr.bf16.mxu0 0
    %1911 = vmatpush1.bf16.msra.mxu0 0
    %1912 = vmatprep.subr.bf16.mxu0 0
    %1913 = vmatpush1.bf16.msra.mxu0 0
    %1914 = vmatprep.subr.bf16.mxu0 0
    %1915 = vmatpush1.bf16.msra.mxu0 0
    %1916 = vmatprep.subr.bf16.mxu0 0
    %1917 = vmatpush1.bf16.msra.mxu0 0
    %1918 = vmatprep.subr.bf16.mxu0 0
    %1919 = vmatpush1.bf16.msra.mxu0 0
    %1920 = vmatprep.subr.bf16.mxu0 0
    %1921 = vmatpush1.bf16.msra.mxu0 0
    %1922 = vmatprep.subr.bf16.mxu0 0
    %1923 = vmatpush1.bf16.msra.mxu0 %v1839
    %1924 = vmatprep.subr.bf16.mxu0 0
    %1925 = vmatpush1.bf16.msra.mxu0 %v1838
    %1926 = vmatprep.subr.bf16.mxu0 0
    %1927 = vmatpush2.bf16.msra.mxu0 0
    %1928 = vmatprep.subr.bf16.mxu0 0
    %1929 = vmatpush2.bf16.msra.mxu0 0
    %1930 = vmatprep.subr.bf16.mxu0 0
    %1931 = vmatpush2.bf16.msra.mxu0 0
    %1932 = vmatprep.subr.bf16.mxu0 0
    %1933 = vmatpush2.bf16.msra.mxu0 0
    %1934 = vmatprep.subr.bf16.mxu0 0
    %1935 = vmatpush2.bf16.msra.mxu0 0
    %1936 = vmatprep.subr.bf16.mxu0 0
    %1937 = vmatpush2.bf16.msra.mxu0 0
    %1938 = vmatprep.subr.bf16.mxu0 0
    %1939 = vmatpush2.bf16.msra.mxu0 0
    %1940 = vmatprep.subr.bf16.mxu0 0
    %1941 = vmatpush2.bf16.msra.mxu0 0
    %1942 = vmatprep.mubr.bf16.mxu0 0
    %1943 = vmatmul.mubr.bf16.gmra.mxu0 %v1908
    %v1944 = vpop.f32.mrf.mxu0
    %v1945 = vadd.f32 0.0, %v1944
    %v1946 = vpop.f32.mrf.mxu0
    %v1947 = vpop.f32.mrf.mxu0
    %v1948 = vpop.f32.mrf.mxu0
    %1949 = vdwg.mxu0
    %v1950 = vadd.f32 %v1806, %v1945
    %v1951 = vtanh.pop %v1950
    %v1952 = vmul.f32 %v1951, %v133
    %v1953 = vadd.f32 %v1952, %v134
    %v1954 = vmul.f32 %v1953, %v1896
    %1956 = vrot.lane.b32.xlu0 %v1953, 64
    %v1957 = vpop.permute.xlu0 %1956
    %v1959 = vmul.f32 %v1953, %v1957
    %1961 = vrot.lane.b32.xlu0 %v1959, 32
    %v1962 = vpop.permute.xlu0 %1961
    %v1964 = vadd.f32 %v1954, %v1962
    %v1965 = vtanh.pop %v1964
    %1967 = vrot.lane.b32.xlu0 %v1965, 64
    %v1968 = vpop.permute.xlu0 %1967
    %v1970 = vmul.f32 %v1953, %v1968
    %v1971 = vpack.c.bf16 %v1970, %v1970
    %1973 = vrot.lane.b32.xlu0 %v1971, 32
    %v1974 = vpop.permute.xlu0 %1973
    %v1976 = vsel %vm351, %v1974, 0
    %1978 = vmatprep.subr.bf16.mxu0 0
    %1979 = vmatpush1.bf16.msra.mxu0 0
    %1980 = vmatprep.subr.bf16.mxu0 0
    %1981 = vmatpush1.bf16.msra.mxu0 0
    %1982 = vmatprep.subr.bf16.mxu0 0
    %1983 = vmatpush1.bf16.msra.mxu0 0
    %1984 = vmatprep.subr.bf16.mxu0 0
    %1985 = vmatpush1.bf16.msra.mxu0 0
    %1986 = vmatprep.subr.bf16.mxu0 0
    %1987 = vmatpush1.bf16.msra.mxu0 0
    %1988 = vmatprep.subr.bf16.mxu0 0
    %1989 = vmatpush1.bf16.msra.mxu0 0
    %1990 = vmatprep.subr.bf16.mxu0 0
    %1991 = vmatpush1.bf16.msra.mxu0 %v1839
    %1992 = vmatprep.subr.bf16.mxu0 0
    %1993 = vmatpush1.bf16.msra.mxu0 %v1838
    %1994 = vmatprep.subr.bf16.mxu0 0
    %1995 = vmatpush2.bf16.msra.mxu0 0
    %1996 = vmatprep.subr.bf16.mxu0 0
    %1997 = vmatpush2.bf16.msra.mxu0 0
    %1998 = vmatprep.subr.bf16.mxu0 0
    %1999 = vmatpush2.bf16.msra.mxu0 0
    %2000 = vmatprep.subr.bf16.mxu0 0
    %2001 = vmatpush2.bf16.msra.mxu0 0
    %2002 = vmatprep.subr.bf16.mxu0 0
    %2003 = vmatpush2.bf16.msra.mxu0 0
    %2004 = vmatprep.subr.bf16.mxu0 0
    %2005 = vmatpush2.bf16.msra.mxu0 0
    %2006 = vmatprep.subr.bf16.mxu0 0
    %2007 = vmatpush2.bf16.msra.mxu0 0
    %2008 = vmatprep.subr.bf16.mxu0 0
    %2009 = vmatpush2.bf16.msra.mxu0 0
    %2010 = vmatprep.mubr.bf16.mxu0 0
    %2011 = vmatmul.mubr.bf16.gmra.mxu0 %v1976
    %v2012 = vpop.f32.mrf.mxu0
    %v2013 = vadd.f32 0.0, %v2012
    %v2014 = vpop.f32.mrf.mxu0
    %v2015 = vpop.f32.mrf.mxu0
    %v2016 = vpop.f32.mrf.mxu0
    %2017 = vdwg.mxu0
    %v2018 = vadd.f32 %v1807, %v2013
    %v2019 = vtanh.pop %v2018
    %v2020 = vmul.f32 %v2019, %v133
    %v2021 = vadd.f32 %v2020, %v134
    %v2022 = vmul.f32 %v2021, %v1964
    %2024 = vrot.lane.b32.xlu0 %v2021, 64
    %v2025 = vpop.permute.xlu0 %2024
    %v2027 = vmul.f32 %v2021, %v2025
    %2029 = vrot.lane.b32.xlu0 %v2027, 32
    %v2030 = vpop.permute.xlu0 %2029
    %v2032 = vadd.f32 %v2022, %v2030
    %v2033 = vtanh.pop %v2032
    %2035 = vrot.lane.b32.xlu0 %v2033, 64
    %v2036 = vpop.permute.xlu0 %2035
    %v2038 = vmul.f32 %v2021, %v2036
    %v2039 = vpack.c.bf16 %v2038, %v2038
    %2041 = vrot.lane.b32.xlu0 %v2039, 32
    %v2042 = vpop.permute.xlu0 %2041
    %v2044 = vsel %vm351, %v2042, 0
    %2046 = vmatprep.subr.bf16.mxu0 0
    %2047 = vmatpush1.bf16.msra.mxu0 0
    %2048 = vmatprep.subr.bf16.mxu0 0
    %2049 = vmatpush1.bf16.msra.mxu0 0
    %2050 = vmatprep.subr.bf16.mxu0 0
    %2051 = vmatpush1.bf16.msra.mxu0 0
    %2052 = vmatprep.subr.bf16.mxu0 0
    %2053 = vmatpush1.bf16.msra.mxu0 0
    %2054 = vmatprep.subr.bf16.mxu0 0
    %2055 = vmatpush1.bf16.msra.mxu0 0
    %2056 = vmatprep.subr.bf16.mxu0 0
    %2057 = vmatpush1.bf16.msra.mxu0 0
    %2058 = vmatprep.subr.bf16.mxu0 0
    %2059 = vmatpush1.bf16.msra.mxu0 %v1839
    %2060 = vmatprep.subr.bf16.mxu0 0
    %2061 = vmatpush1.bf16.msra.mxu0 %v1838
    %2062 = vmatprep.subr.bf16.mxu0 0
    %2063 = vmatpush2.bf16.msra.mxu0 0
    %2064 = vmatprep.subr.bf16.mxu0 0
    %2065 = vmatpush2.bf16.msra.mxu0 0
    %2066 = vmatprep.subr.bf16.mxu0 0
    %2067 = vmatpush2.bf16.msra.mxu0 0
    %2068 = vmatprep.subr.bf16.mxu0 0
    %2069 = vmatpush2.bf16.msra.mxu0 0
    %2070 = vmatprep.subr.bf16.mxu0 0
    %2071 = vmatpush2.bf16.msra.mxu0 0
    %2072 = vmatprep.subr.bf16.mxu0 0
    %2073 = vmatpush2.bf16.msra.mxu0 0
    %2074 = vmatprep.subr.bf16.mxu0 0
    %2075 = vmatpush2.bf16.msra.mxu0 0
    %2076 = vmatprep.subr.bf16.mxu0 0
    %2077 = vmatpush2.bf16.msra.mxu0 0
    %2078 = vmatprep.mubr.bf16.mxu0 0
    %2079 = vmatmul.mubr.bf16.gmra.mxu0 %v2044
    %v2080 = vpop.f32.mrf.mxu0
    %v2081 = vadd.f32 0.0, %v2080
    %v2082 = vpop.f32.mrf.mxu0
    %v2083 = vpop.f32.mrf.mxu0
    %v2084 = vpop.f32.mrf.mxu0
    %2085 = vdwg.mxu0
    %v2086 = vadd.f32 %v1808, %v2081
    %v2087 = vtanh.pop %v2086
    %v2088 = vmul.f32 %v2087, %v133
    %v2089 = vadd.f32 %v2088, %v134
    %v2090 = vmul.f32 %v2089, %v2032
    %2092 = vrot.lane.b32.xlu0 %v2089, 64
    %v2093 = vpop.permute.xlu0 %2092
    %v2095 = vmul.f32 %v2089, %v2093
    %2097 = vrot.lane.b32.xlu0 %v2095, 32
    %v2098 = vpop.permute.xlu0 %2097
    %v2100 = vadd.f32 %v2090, %v2098
    %v2101 = vtanh.pop %v2100
    %2103 = vrot.lane.b32.xlu0 %v2101, 64
    %v2104 = vpop.permute.xlu0 %2103
    %v2106 = vmul.f32 %v2089, %v2104
    %v2107 = vpack.c.bf16 %v2106, %v2106
    %2109 = vrot.lane.b32.xlu0 %v2107, 32
    %v2110 = vpop.permute.xlu0 %2109
    %v2112 = vsel %vm351, %v2110, 0
    %2114 = vmatprep.subr.bf16.mxu0 0
    %2115 = vmatpush1.bf16.msra.mxu0 0
    %2116 = vmatprep.subr.bf16.mxu0 0
    %2117 = vmatpush1.bf16.msra.mxu0 0
    %2118 = vmatprep.subr.bf16.mxu0 0
    %2119 = vmatpush1.bf16.msra.mxu0 0
    %2120 = vmatprep.subr.bf16.mxu0 0
    %2121 = vmatpush1.bf16.msra.mxu0 0
    %2122 = vmatprep.subr.bf16.mxu0 0
    %2123 = vmatpush1.bf16.msra.mxu0 0
    %2124 = vmatprep.subr.bf16.mxu0 0
    %2125 = vmatpush1.bf16.msra.mxu0 0
    %2126 = vmatprep.subr.bf16.mxu0 0
    %2127 = vmatpush1.bf16.msra.mxu0 %v1839
    %2128 = vmatprep.subr.bf16.mxu0 0
    %2129 = vmatpush1.bf16.msra.mxu0 %v1838
    %2130 = vmatprep.subr.bf16.mxu0 0
    %2131 = vmatpush2.bf16.msra.mxu0 0
    %2132 = vmatprep.subr.bf16.mxu0 0
    %2133 = vmatpush2.bf16.msra.mxu0 0
    %2134 = vmatprep.subr.bf16.mxu0 0
    %2135 = vmatpush2.bf16.msra.mxu0 0
    %2136 = vmatprep.subr.bf16.mxu0 0
    %2137 = vmatpush2.bf16.msra.mxu0 0
    %2138 = vmatprep.subr.bf16.mxu0 0
    %2139 = vmatpush2.bf16.msra.mxu0 0
    %2140 = vmatprep.subr.bf16.mxu0 0
    %2141 = vmatpush2.bf16.msra.mxu0 0
    %2142 = vmatprep.subr.bf16.mxu0 0
    %2143 = vmatpush2.bf16.msra.mxu0 0
    %2144 = vmatprep.subr.bf16.mxu0 0
    %2145 = vmatpush2.bf16.msra.mxu0 0
    %2146 = vmatprep.mubr.bf16.mxu0 0
    %2147 = vmatmul.mubr.bf16.gmra.mxu0 %v2112
    %v2148 = vpop.f32.mrf.mxu0
    %v2149 = vadd.f32 0.0, %v2148
    %v2150 = vpop.f32.mrf.mxu0
    %v2151 = vpop.f32.mrf.mxu0
    %v2152 = vpop.f32.mrf.mxu0
    %2153 = vdwg.mxu0
    %v2154 = vadd.f32 %v1809, %v2149
    %v2155 = vtanh.pop %v2154
    %v2156 = vmul.f32 %v2155, %v133
    %v2157 = vadd.f32 %v2156, %v134
    %v2158 = vmul.f32 %v2157, %v2100
    %2160 = vrot.lane.b32.xlu0 %v2157, 64
    %v2161 = vpop.permute.xlu0 %2160
    %v2163 = vmul.f32 %v2157, %v2161
    %2165 = vrot.lane.b32.xlu0 %v2163, 32
    %v2166 = vpop.permute.xlu0 %2165
    %v2168 = vadd.f32 %v2158, %v2166
    %v2169 = vtanh.pop %v2168
    %2171 = vrot.lane.b32.xlu0 %v2169, 64
    %v2172 = vpop.permute.xlu0 %2171
    %v2174 = vmul.f32 %v2157, %v2172
    %v2175 = vpack.c.bf16 %v2174, %v2174
    %2177 = vrot.lane.b32.xlu0 %v2175, 32
    %v2178 = vpop.permute.xlu0 %2177
    %v2180 = vsel %vm351, %v2178, 0
    %2182 = vmatprep.subr.bf16.mxu0 0
    %2183 = vmatpush1.bf16.msra.mxu0 0
    %2184 = vmatprep.subr.bf16.mxu0 0
    %2185 = vmatpush1.bf16.msra.mxu0 0
    %2186 = vmatprep.subr.bf16.mxu0 0
    %2187 = vmatpush1.bf16.msra.mxu0 0
    %2188 = vmatprep.subr.bf16.mxu0 0
    %2189 = vmatpush1.bf16.msra.mxu0 0
    %2190 = vmatprep.subr.bf16.mxu0 0
    %2191 = vmatpush1.bf16.msra.mxu0 0
    %2192 = vmatprep.subr.bf16.mxu0 0
    %2193 = vmatpush1.bf16.msra.mxu0 0
    %2194 = vmatprep.subr.bf16.mxu0 0
    %2195 = vmatpush1.bf16.msra.mxu0 %v1839
    %2196 = vmatprep.subr.bf16.mxu0 0
    %2197 = vmatpush1.bf16.msra.mxu0 %v1838
    %2198 = vmatprep.subr.bf16.mxu0 0
    %2199 = vmatpush2.bf16.msra.mxu0 0
    %2200 = vmatprep.subr.bf16.mxu0 0
    %2201 = vmatpush2.bf16.msra.mxu0 0
    %2202 = vmatprep.subr.bf16.mxu0 0
    %2203 = vmatpush2.bf16.msra.mxu0 0
    %2204 = vmatprep.subr.bf16.mxu0 0
    %2205 = vmatpush2.bf16.msra.mxu0 0
    %2206 = vmatprep.subr.bf16.mxu0 0
    %2207 = vmatpush2.bf16.msra.mxu0 0
    %2208 = vmatprep.subr.bf16.mxu0 0
    %2209 = vmatpush2.bf16.msra.mxu0 0
    %2210 = vmatprep.subr.bf16.mxu0 0
    %2211 = vmatpush2.bf16.msra.mxu0 0
    %2212 = vmatprep.subr.bf16.mxu0 0
    %2213 = vmatpush2.bf16.msra.mxu0 0
    %2214 = vmatprep.mubr.bf16.mxu0 0
    %2215 = vmatmul.mubr.bf16.gmra.mxu0 %v2180
    %v2216 = vpop.f32.mrf.mxu0
    %v2217 = vadd.f32 0.0, %v2216
    %v2218 = vpop.f32.mrf.mxu0
    %v2219 = vpop.f32.mrf.mxu0
    %v2220 = vpop.f32.mrf.mxu0
    %2221 = vdwg.mxu0
    %v2222 = vadd.f32 %v1810, %v2217
    %v2223 = vtanh.pop %v2222
    %v2224 = vmul.f32 %v2223, %v133
    %v2225 = vadd.f32 %v2224, %v134
    %v2226 = vmul.f32 %v2225, %v2168
    %2228 = vrot.lane.b32.xlu0 %v2225, 64
    %v2229 = vpop.permute.xlu0 %2228
    %v2231 = vmul.f32 %v2225, %v2229
    %2233 = vrot.lane.b32.xlu0 %v2231, 32
    %v2234 = vpop.permute.xlu0 %2233
    %v2236 = vadd.f32 %v2226, %v2234
    %v2237 = vtanh.pop %v2236
    %2239 = vrot.lane.b32.xlu0 %v2237, 64
    %v2240 = vpop.permute.xlu0 %2239
    %v2242 = vmul.f32 %v2225, %v2240
    %v2243 = vpack.c.bf16 %v2242, %v2242
    %2245 = vrot.lane.b32.xlu0 %v2243, 32
    %v2246 = vpop.permute.xlu0 %2245
    %v2248 = vsel %vm351, %v2246, 0
    %2250 = vmatprep.subr.bf16.mxu0 0
    %2251 = vmatpush1.bf16.msra.mxu0 0
    %2252 = vmatprep.subr.bf16.mxu0 0
    %2253 = vmatpush1.bf16.msra.mxu0 0
    %2254 = vmatprep.subr.bf16.mxu0 0
    %2255 = vmatpush1.bf16.msra.mxu0 0
    %2256 = vmatprep.subr.bf16.mxu0 0
    %2257 = vmatpush1.bf16.msra.mxu0 0
    %2258 = vmatprep.subr.bf16.mxu0 0
    %2259 = vmatpush1.bf16.msra.mxu0 0
    %2260 = vmatprep.subr.bf16.mxu0 0
    %2261 = vmatpush1.bf16.msra.mxu0 0
    %2262 = vmatprep.subr.bf16.mxu0 0
    %2263 = vmatpush1.bf16.msra.mxu0 %v1839
    %2264 = vmatprep.subr.bf16.mxu0 0
    %2265 = vmatpush1.bf16.msra.mxu0 %v1838
    %2266 = vmatprep.subr.bf16.mxu0 0
    %2267 = vmatpush2.bf16.msra.mxu0 0
    %2268 = vmatprep.subr.bf16.mxu0 0
    %2269 = vmatpush2.bf16.msra.mxu0 0
    %2270 = vmatprep.subr.bf16.mxu0 0
    %2271 = vmatpush2.bf16.msra.mxu0 0
    %2272 = vmatprep.subr.bf16.mxu0 0
    %2273 = vmatpush2.bf16.msra.mxu0 0
    %2274 = vmatprep.subr.bf16.mxu0 0
    %2275 = vmatpush2.bf16.msra.mxu0 0
    %2276 = vmatprep.subr.bf16.mxu0 0
    %2277 = vmatpush2.bf16.msra.mxu0 0
    %2278 = vmatprep.subr.bf16.mxu0 0
    %2279 = vmatpush2.bf16.msra.mxu0 0
    %2280 = vmatprep.subr.bf16.mxu0 0
    %2281 = vmatpush2.bf16.msra.mxu0 0
    %2282 = vmatprep.mubr.bf16.mxu0 0
    %2283 = vmatmul.mubr.bf16.gmra.mxu0 %v2248
    %v2284 = vpop.f32.mrf.mxu0
    %v2285 = vadd.f32 0.0, %v2284
    %v2286 = vpop.f32.mrf.mxu0
    %v2287 = vpop.f32.mrf.mxu0
    %v2288 = vpop.f32.mrf.mxu0
    %2289 = vdwg.mxu0
    %v2290 = vadd.f32 %v1811, %v2285
    %v2291 = vtanh.pop %v2290
    %v2292 = vmul.f32 %v2291, %v133
    %v2293 = vadd.f32 %v2292, %v134
    %v2294 = vmul.f32 %v2293, %v2236
    %2296 = vrot.lane.b32.xlu0 %v2293, 64
    %v2297 = vpop.permute.xlu0 %2296
    %v2299 = vmul.f32 %v2293, %v2297
    %2301 = vrot.lane.b32.xlu0 %v2299, 32
    %v2302 = vpop.permute.xlu0 %2301
    %v2304 = vadd.f32 %v2294, %v2302
    %v2305 = vtanh.pop %v2304
    %2307 = vrot.lane.b32.xlu0 %v2305, 64
    %v2308 = vpop.permute.xlu0 %2307
    %v2310 = vmul.f32 %v2293, %v2308
    %v2311 = vpack.c.bf16 %v2310, %v2310
    %2313 = vrot.lane.b32.xlu0 %v2311, 32
    %v2314 = vpop.permute.xlu0 %2313
    %v2316 = vsel %vm351, %v2314, 0
    %2318 = vmatprep.subr.bf16.mxu0 0
    %2319 = vmatpush1.bf16.msra.mxu0 0
    %2320 = vmatprep.subr.bf16.mxu0 0
    %2321 = vmatpush1.bf16.msra.mxu0 0
    %2322 = vmatprep.subr.bf16.mxu0 0
    %2323 = vmatpush1.bf16.msra.mxu0 0
    %2324 = vmatprep.subr.bf16.mxu0 0
    %2325 = vmatpush1.bf16.msra.mxu0 0
    %2326 = vmatprep.subr.bf16.mxu0 0
    %2327 = vmatpush1.bf16.msra.mxu0 0
    %2328 = vmatprep.subr.bf16.mxu0 0
    %2329 = vmatpush1.bf16.msra.mxu0 0
    %2330 = vmatprep.subr.bf16.mxu0 0
    %2331 = vmatpush1.bf16.msra.mxu0 %v1839
    %2332 = vmatprep.subr.bf16.mxu0 0
    %2333 = vmatpush1.bf16.msra.mxu0 %v1838
    %2334 = vmatprep.subr.bf16.mxu0 0
    %2335 = vmatpush2.bf16.msra.mxu0 0
    %2336 = vmatprep.subr.bf16.mxu0 0
    %2337 = vmatpush2.bf16.msra.mxu0 0
    %2338 = vmatprep.subr.bf16.mxu0 0
    %2339 = vmatpush2.bf16.msra.mxu0 0
    %2340 = vmatprep.subr.bf16.mxu0 0
    %2341 = vmatpush2.bf16.msra.mxu0 0
    %2342 = vmatprep.subr.bf16.mxu0 0
    %2343 = vmatpush2.bf16.msra.mxu0 0
    %2344 = vmatprep.subr.bf16.mxu0 0
    %2345 = vmatpush2.bf16.msra.mxu0 0
    %2346 = vmatprep.subr.bf16.mxu0 0
    %2347 = vmatpush2.bf16.msra.mxu0 0
    %2348 = vmatprep.subr.bf16.mxu0 0
    %2349 = vmatpush2.bf16.msra.mxu0 0
    %2350 = vmatprep.mubr.bf16.mxu0 0
    %2351 = vmatmul.mubr.bf16.gmra.mxu0 %v2316
    %v2352 = vpop.f32.mrf.mxu0
    %v2353 = vadd.f32 0.0, %v2352
    %v2354 = vpop.f32.mrf.mxu0
    %v2355 = vpop.f32.mrf.mxu0
    %v2356 = vpop.f32.mrf.mxu0
    %2357 = vdwg.mxu0
    %v2358 = vadd.f32 %v1812, %v2353
    %v2359 = vtanh.pop %v2358
    %v2360 = vmul.f32 %v2359, %v133
    %v2361 = vadd.f32 %v2360, %v134
    %v2362 = vmul.f32 %v2361, %v2304
    %2364 = vrot.lane.b32.xlu0 %v2361, 64
    %v2365 = vpop.permute.xlu0 %2364
    %v2367 = vmul.f32 %v2361, %v2365
    %2369 = vrot.lane.b32.xlu0 %v2367, 32
    %v2370 = vpop.permute.xlu0 %2369
    %v2372 = vadd.f32 %v2362, %v2370
    %v2373 = vtanh.pop %v2372
    %2375 = vrot.lane.b32.xlu0 %v2373, 64
    %v2376 = vpop.permute.xlu0 %2375
    %v2378 = vmul.f32 %v2361, %v2376
    %s2379 = scalar_lea.vmem [#allocation12], 16
    %v2380 = vld [vmem:[%s2379] sm:$0xf]
    %v2381 = vld [vmem:[%s2379 + $0x4] sm:$0xf]
    %v2382 = vld [vmem:[%s2379 + $0x8] sm:$0xf]
    %v2383 = vld [vmem:[%s2379 + $0xc] sm:$0xf]
    %v2388 = vunpack.c.l.b16 %v2380
    %v2389 = vunpack.c.l.b16 %v2381
    %v2390 = vunpack.c.l.b16 %v2382
    %v2391 = vunpack.c.l.b16 %v2383
    %v2392 = vpack.c.b16 %v2389, %v2388
    %v2393 = vpack.c.b16 %v2391, %v2390
    %2396 = vmatprep.subr.bf16.mxu0 0
    %2397 = vmatpush1.bf16.msra.mxu0 0
    %2398 = vmatprep.subr.bf16.mxu0 0
    %2399 = vmatpush1.bf16.msra.mxu0 0
    %2400 = vmatprep.subr.bf16.mxu0 0
    %2401 = vmatpush1.bf16.msra.mxu0 0
    %2402 = vmatprep.subr.bf16.mxu0 0
    %2403 = vmatpush1.bf16.msra.mxu0 0
    %2404 = vmatprep.subr.bf16.mxu0 0
    %2405 = vmatpush1.bf16.msra.mxu0 0
    %2406 = vmatprep.subr.bf16.mxu0 0
    %2407 = vmatpush1.bf16.msra.mxu0 0
    %2408 = vmatprep.subr.bf16.mxu0 0
    %2409 = vmatpush1.bf16.msra.mxu0 %v2393
    %2410 = vmatprep.subr.bf16.mxu0 0
    %2411 = vmatpush1.bf16.msra.mxu0 %v2392
    %2412 = vmatprep.subr.bf16.mxu0 0
    %2413 = vmatpush2.bf16.msra.mxu0 0
    %2414 = vmatprep.subr.bf16.mxu0 0
    %2415 = vmatpush2.bf16.msra.mxu0 0
    %2416 = vmatprep.subr.bf16.mxu0 0
    %2417 = vmatpush2.bf16.msra.mxu0 0
    %2418 = vmatprep.subr.bf16.mxu0 0
    %2419 = vmatpush2.bf16.msra.mxu0 0
    %2420 = vmatprep.subr.bf16.mxu0 0
    %2421 = vmatpush2.bf16.msra.mxu0 0
    %2422 = vmatprep.subr.bf16.mxu0 0
    %2423 = vmatpush2.bf16.msra.mxu0 0
    %2424 = vmatprep.subr.bf16.mxu0 0
    %2425 = vmatpush2.bf16.msra.mxu0 0
    %2426 = vmatprep.subr.bf16.mxu0 0
    %2427 = vmatpush2.bf16.msra.mxu0 0
    %2428 = vmatprep.mubr.bf16.mxu0 0
    %2429 = vmatmul.mubr.bf16.gmra.mxu0 %v480
    %v2430 = vpop.f32.mrf.mxu0
    %v2431 = vadd.f32 0.0, %v2430
    %v2432 = vpop.f32.mrf.mxu0
    %v2433 = vpop.f32.mrf.mxu0
    %v2434 = vpop.f32.mrf.mxu0
    %2435 = vdwg.mxu0
    %v2436 = vadd.f32 %v1825, %v2431
    %v2437 = vtanh.pop %v2436
    %v2438 = vmul.f32 %v2437, %v133
    %v2439 = vadd.f32 %v2438, %v134
    %v2440 = vmul.f32 %v2439, 0.0
    %2442 = vrot.lane.b32.xlu0 %v2439, 64
    %v2443 = vpop.permute.xlu0 %2442
    %v2445 = vmul.f32 %v2439, %v2443
    %2447 = vrot.lane.b32.xlu0 %v2445, 32
    %v2448 = vpop.permute.xlu0 %2447
    %v2450 = vadd.f32 %v2440, %v2448
    %v2451 = vtanh.pop %v2450
    %2453 = vrot.lane.b32.xlu0 %v2451, 64
    %v2454 = vpop.permute.xlu0 %2453
    %v2456 = vmul.f32 %v2439, %v2454
    %v2457 = vpack.c.bf16 %v2456, %v2456
    %2459 = vrot.lane.b32.xlu0 %v2457, 32
    %v2460 = vpop.permute.xlu0 %2459
    %v2462 = vsel %vm351, %v2460, 0
    %2464 = vmatprep.subr.bf16.mxu0 0
    %2465 = vmatpush1.bf16.msra.mxu0 0
    %2466 = vmatprep.subr.bf16.mxu0 0
    %2467 = vmatpush1.bf16.msra.mxu0 0
    %2468 = vmatprep.subr.bf16.mxu0 0
    %2469 = vmatpush1.bf16.msra.mxu0 0
    %2470 = vmatprep.subr.bf16.mxu0 0
    %2471 = vmatpush1.bf16.msra.mxu0 0
    %2472 = vmatprep.subr.bf16.mxu0 0
    %2473 = vmatpush1.bf16.msra.mxu0 0
    %2474 = vmatprep.subr.bf16.mxu0 0
    %2475 = vmatpush1.bf16.msra.mxu0 0
    %2476 = vmatprep.subr.bf16.mxu0 0
    %2477 = vmatpush1.bf16.msra.mxu0 %v2393
    %2478 = vmatprep.subr.bf16.mxu0 0
    %2479 = vmatpush1.bf16.msra.mxu0 %v2392
    %2480 = vmatprep.subr.bf16.mxu0 0
    %2481 = vmatpush2.bf16.msra.mxu0 0
    %2482 = vmatprep.subr.bf16.mxu0 0
    %2483 = vmatpush2.bf16.msra.mxu0 0
    %2484 = vmatprep.subr.bf16.mxu0 0
    %2485 = vmatpush2.bf16.msra.mxu0 0
    %2486 = vmatprep.subr.bf16.mxu0 0
    %2487 = vmatpush2.bf16.msra.mxu0 0
    %2488 = vmatprep.subr.bf16.mxu0 0
    %2489 = vmatpush2.bf16.msra.mxu0 0
    %2490 = vmatprep.subr.bf16.mxu0 0
    %2491 = vmatpush2.bf16.msra.mxu0 0
    %2492 = vmatprep.subr.bf16.mxu0 0
    %2493 = vmatpush2.bf16.msra.mxu0 0
    %2494 = vmatprep.subr.bf16.mxu0 0
    %2495 = vmatpush2.bf16.msra.mxu0 0
    %2496 = vmatprep.mubr.bf16.mxu0 0
    %2497 = vmatmul.mubr.bf16.gmra.mxu0 %v2462
    %v2498 = vpop.f32.mrf.mxu0
    %v2499 = vadd.f32 0.0, %v2498
    %v2500 = vpop.f32.mrf.mxu0
    %v2501 = vpop.f32.mrf.mxu0
    %v2502 = vpop.f32.mrf.mxu0
    %2503 = vdwg.mxu0
    %v2504 = vadd.f32 %v1824, %v2499
    %v2505 = vtanh.pop %v2504
    %v2506 = vmul.f32 %v2505, %v133
    %v2507 = vadd.f32 %v2506, %v134
    %v2508 = vmul.f32 %v2507, %v2450
    %2510 = vrot.lane.b32.xlu0 %v2507, 64
    %v2511 = vpop.permute.xlu0 %2510
    %v2513 = vmul.f32 %v2507, %v2511
    %2515 = vrot.lane.b32.xlu0 %v2513, 32
    %v2516 = vpop.permute.xlu0 %2515
    %v2518 = vadd.f32 %v2508, %v2516
    %v2519 = vtanh.pop %v2518
    %2521 = vrot.lane.b32.xlu0 %v2519, 64
    %v2522 = vpop.permute.xlu0 %2521
    %v2524 = vmul.f32 %v2507, %v2522
    %v2525 = vpack.c.bf16 %v2524, %v2524
    %2527 = vrot.lane.b32.xlu0 %v2525, 32
    %v2528 = vpop.permute.xlu0 %2527
    %v2530 = vsel %vm351, %v2528, 0
    %2532 = vmatprep.subr.bf16.mxu0 0
    %2533 = vmatpush1.bf16.msra.mxu0 0
    %2534 = vmatprep.subr.bf16.mxu0 0
    %2535 = vmatpush1.bf16.msra.mxu0 0
    %2536 = vmatprep.subr.bf16.mxu0 0
    %2537 = vmatpush1.bf16.msra.mxu0 0
    %2538 = vmatprep.subr.bf16.mxu0 0
    %2539 = vmatpush1.bf16.msra.mxu0 0
    %2540 = vmatprep.subr.bf16.mxu0 0
    %2541 = vmatpush1.bf16.msra.mxu0 0
    %2542 = vmatprep.subr.bf16.mxu0 0
    %2543 = vmatpush1.bf16.msra.mxu0 0
    %2544 = vmatprep.subr.bf16.mxu0 0
    %2545 = vmatpush1.bf16.msra.mxu0 %v2393
    %2546 = vmatprep.subr.bf16.mxu0 0
    %2547 = vmatpush1.bf16.msra.mxu0 %v2392
    %2548 = vmatprep.subr.bf16.mxu0 0
    %2549 = vmatpush2.bf16.msra.mxu0 0
    %2550 = vmatprep.subr.bf16.mxu0 0
    %2551 = vmatpush2.bf16.msra.mxu0 0
    %2552 = vmatprep.subr.bf16.mxu0 0
    %2553 = vmatpush2.bf16.msra.mxu0 0
    %2554 = vmatprep.subr.bf16.mxu0 0
    %2555 = vmatpush2.bf16.msra.mxu0 0
    %2556 = vmatprep.subr.bf16.mxu0 0
    %2557 = vmatpush2.bf16.msra.mxu0 0
    %2558 = vmatprep.subr.bf16.mxu0 0
    %2559 = vmatpush2.bf16.msra.mxu0 0
    %2560 = vmatprep.subr.bf16.mxu0 0
    %2561 = vmatpush2.bf16.msra.mxu0 0
    %2562 = vmatprep.subr.bf16.mxu0 0
    %2563 = vmatpush2.bf16.msra.mxu0 0
    %2564 = vmatprep.mubr.bf16.mxu0 0
    %2565 = vmatmul.mubr.bf16.gmra.mxu0 %v2530
    %v2566 = vpop.f32.mrf.mxu0
    %v2567 = vadd.f32 0.0, %v2566
    %v2568 = vpop.f32.mrf.mxu0
    %v2569 = vpop.f32.mrf.mxu0
    %v2570 = vpop.f32.mrf.mxu0
    %2571 = vdwg.mxu0
    %v2572 = vadd.f32 %v1823, %v2567
    %v2573 = vtanh.pop %v2572
    %v2574 = vmul.f32 %v2573, %v133
    %v2575 = vadd.f32 %v2574, %v134
    %v2576 = vmul.f32 %v2575, %v2518
    %2578 = vrot.lane.b32.xlu0 %v2575, 64
    %v2579 = vpop.permute.xlu0 %2578
    %v2581 = vmul.f32 %v2575, %v2579
    %2583 = vrot.lane.b32.xlu0 %v2581, 32
    %v2584 = vpop.permute.xlu0 %2583
    %v2586 = vadd.f32 %v2576, %v2584
    %v2587 = vtanh.pop %v2586
    %2589 = vrot.lane.b32.xlu0 %v2587, 64
    %v2590 = vpop.permute.xlu0 %2589
    %v2592 = vmul.f32 %v2575, %v2590
    %v2593 = vpack.c.bf16 %v2592, %v2592
    %2595 = vrot.lane.b32.xlu0 %v2593, 32
    %v2596 = vpop.permute.xlu0 %2595
    %v2598 = vsel %vm351, %v2596, 0
    %2600 = vmatprep.subr.bf16.mxu0 0
    %2601 = vmatpush1.bf16.msra.mxu0 0
    %2602 = vmatprep.subr.bf16.mxu0 0
    %2603 = vmatpush1.bf16.msra.mxu0 0
    %2604 = vmatprep.subr.bf16.mxu0 0
    %2605 = vmatpush1.bf16.msra.mxu0 0
    %2606 = vmatprep.subr.bf16.mxu0 0
    %2607 = vmatpush1.bf16.msra.mxu0 0
    %2608 = vmatprep.subr.bf16.mxu0 0
    %2609 = vmatpush1.bf16.msra.mxu0 0
    %2610 = vmatprep.subr.bf16.mxu0 0
    %2611 = vmatpush1.bf16.msra.mxu0 0
    %2612 = vmatprep.subr.bf16.mxu0 0
    %2613 = vmatpush1.bf16.msra.mxu0 %v2393
    %2614 = vmatprep.subr.bf16.mxu0 0
    %2615 = vmatpush1.bf16.msra.mxu0 %v2392
    %2616 = vmatprep.subr.bf16.mxu0 0
    %2617 = vmatpush2.bf16.msra.mxu0 0
    %2618 = vmatprep.subr.bf16.mxu0 0
    %2619 = vmatpush2.bf16.msra.mxu0 0
    %2620 = vmatprep.subr.bf16.mxu0 0
    %2621 = vmatpush2.bf16.msra.mxu0 0
    %2622 = vmatprep.subr.bf16.mxu0 0
    %2623 = vmatpush2.bf16.msra.mxu0 0
    %2624 = vmatprep.subr.bf16.mxu0 0
    %2625 = vmatpush2.bf16.msra.mxu0 0
    %2626 = vmatprep.subr.bf16.mxu0 0
    %2627 = vmatpush2.bf16.msra.mxu0 0
    %2628 = vmatprep.subr.bf16.mxu0 0
    %2629 = vmatpush2.bf16.msra.mxu0 0
    %2630 = vmatprep.subr.bf16.mxu0 0
    %2631 = vmatpush2.bf16.msra.mxu0 0
    %2632 = vmatprep.mubr.bf16.mxu0 0
    %2633 = vmatmul.mubr.bf16.gmra.mxu0 %v2598
    %v2634 = vpop.f32.mrf.mxu0
    %v2635 = vadd.f32 0.0, %v2634
    %v2636 = vpop.f32.mrf.mxu0
    %v2637 = vpop.f32.mrf.mxu0
    %v2638 = vpop.f32.mrf.mxu0
    %2639 = vdwg.mxu0
    %v2640 = vadd.f32 %v1822, %v2635
    %v2641 = vtanh.pop %v2640
    %v2642 = vmul.f32 %v2641, %v133
    %v2643 = vadd.f32 %v2642, %v134
    %v2644 = vmul.f32 %v2643, %v2586
    %2646 = vrot.lane.b32.xlu0 %v2643, 64
    %v2647 = vpop.permute.xlu0 %2646
    %v2649 = vmul.f32 %v2643, %v2647
    %2651 = vrot.lane.b32.xlu0 %v2649, 32
    %v2652 = vpop.permute.xlu0 %2651
    %v2654 = vadd.f32 %v2644, %v2652
    %v2655 = vtanh.pop %v2654
    %2657 = vrot.lane.b32.xlu0 %v2655, 64
    %v2658 = vpop.permute.xlu0 %2657
    %v2660 = vmul.f32 %v2643, %v2658
    %v2661 = vpack.c.bf16 %v2660, %v2660
    %2663 = vrot.lane.b32.xlu0 %v2661, 32
    %v2664 = vpop.permute.xlu0 %2663
    %v2666 = vsel %vm351, %v2664, 0
    %2668 = vmatprep.subr.bf16.mxu0 0
    %2669 = vmatpush1.bf16.msra.mxu0 0
    %2670 = vmatprep.subr.bf16.mxu0 0
    %2671 = vmatpush1.bf16.msra.mxu0 0
    %2672 = vmatprep.subr.bf16.mxu0 0
    %2673 = vmatpush1.bf16.msra.mxu0 0
    %2674 = vmatprep.subr.bf16.mxu0 0
    %2675 = vmatpush1.bf16.msra.mxu0 0
    %2676 = vmatprep.subr.bf16.mxu0 0
    %2677 = vmatpush1.bf16.msra.mxu0 0
    %2678 = vmatprep.subr.bf16.mxu0 0
    %2679 = vmatpush1.bf16.msra.mxu0 0
    %2680 = vmatprep.subr.bf16.mxu0 0
    %2681 = vmatpush1.bf16.msra.mxu0 %v2393
    %2682 = vmatprep.subr.bf16.mxu0 0
    %2683 = vmatpush1.bf16.msra.mxu0 %v2392
    %2684 = vmatprep.subr.bf16.mxu0 0
    %2685 = vmatpush2.bf16.msra.mxu0 0
    %2686 = vmatprep.subr.bf16.mxu0 0
    %2687 = vmatpush2.bf16.msra.mxu0 0
    %2688 = vmatprep.subr.bf16.mxu0 0
    %2689 = vmatpush2.bf16.msra.mxu0 0
    %2690 = vmatprep.subr.bf16.mxu0 0
    %2691 = vmatpush2.bf16.msra.mxu0 0
    %2692 = vmatprep.subr.bf16.mxu0 0
    %2693 = vmatpush2.bf16.msra.mxu0 0
    %2694 = vmatprep.subr.bf16.mxu0 0
    %2695 = vmatpush2.bf16.msra.mxu0 0
    %2696 = vmatprep.subr.bf16.mxu0 0
    %2697 = vmatpush2.bf16.msra.mxu0 0
    %2698 = vmatprep.subr.bf16.mxu0 0
    %2699 = vmatpush2.bf16.msra.mxu0 0
    %2700 = vmatprep.mubr.bf16.mxu0 0
    %2701 = vmatmul.mubr.bf16.gmra.mxu0 %v2666
    %v2702 = vpop.f32.mrf.mxu0
    %v2703 = vadd.f32 0.0, %v2702
    %v2704 = vpop.f32.mrf.mxu0
    %v2705 = vpop.f32.mrf.mxu0
    %v2706 = vpop.f32.mrf.mxu0
    %2707 = vdwg.mxu0
    %v2708 = vadd.f32 %v1821, %v2703
    %v2709 = vtanh.pop %v2708
    %v2710 = vmul.f32 %v2709, %v133
    %v2711 = vadd.f32 %v2710, %v134
    %v2712 = vmul.f32 %v2711, %v2654
    %2714 = vrot.lane.b32.xlu0 %v2711, 64
    %v2715 = vpop.permute.xlu0 %2714
    %v2717 = vmul.f32 %v2711, %v2715
    %2719 = vrot.lane.b32.xlu0 %v2717, 32
    %v2720 = vpop.permute.xlu0 %2719
    %v2722 = vadd.f32 %v2712, %v2720
    %v2723 = vtanh.pop %v2722
    %2725 = vrot.lane.b32.xlu0 %v2723, 64
    %v2726 = vpop.permute.xlu0 %2725
    %v2728 = vmul.f32 %v2711, %v2726
    %v2729 = vpack.c.bf16 %v2728, %v2728
    %2731 = vrot.lane.b32.xlu0 %v2729, 32
    %v2732 = vpop.permute.xlu0 %2731
    %v2734 = vsel %vm351, %v2732, 0
    %2736 = vmatprep.subr.bf16.mxu0 0
    %2737 = vmatpush1.bf16.msra.mxu0 0
    %2738 = vmatprep.subr.bf16.mxu0 0
    %2739 = vmatpush1.bf16.msra.mxu0 0
    %2740 = vmatprep.subr.bf16.mxu0 0
    %2741 = vmatpush1.bf16.msra.mxu0 0
    %2742 = vmatprep.subr.bf16.mxu0 0
    %2743 = vmatpush1.bf16.msra.mxu0 0
    %2744 = vmatprep.subr.bf16.mxu0 0
    %2745 = vmatpush1.bf16.msra.mxu0 0
    %2746 = vmatprep.subr.bf16.mxu0 0
    %2747 = vmatpush1.bf16.msra.mxu0 0
    %2748 = vmatprep.subr.bf16.mxu0 0
    %2749 = vmatpush1.bf16.msra.mxu0 %v2393
    %2750 = vmatprep.subr.bf16.mxu0 0
    %2751 = vmatpush1.bf16.msra.mxu0 %v2392
    %2752 = vmatprep.subr.bf16.mxu0 0
    %2753 = vmatpush2.bf16.msra.mxu0 0
    %2754 = vmatprep.subr.bf16.mxu0 0
    %2755 = vmatpush2.bf16.msra.mxu0 0
    %2756 = vmatprep.subr.bf16.mxu0 0
    %2757 = vmatpush2.bf16.msra.mxu0 0
    %2758 = vmatprep.subr.bf16.mxu0 0
    %2759 = vmatpush2.bf16.msra.mxu0 0
    %2760 = vmatprep.subr.bf16.mxu0 0
    %2761 = vmatpush2.bf16.msra.mxu0 0
    %2762 = vmatprep.subr.bf16.mxu0 0
    %2763 = vmatpush2.bf16.msra.mxu0 0
    %2764 = vmatprep.subr.bf16.mxu0 0
    %2765 = vmatpush2.bf16.msra.mxu0 0
    %2766 = vmatprep.subr.bf16.mxu0 0
    %2767 = vmatpush2.bf16.msra.mxu0 0
    %2768 = vmatprep.mubr.bf16.mxu0 0
    %2769 = vmatmul.mubr.bf16.gmra.mxu0 %v2734
    %v2770 = vpop.f32.mrf.mxu0
    %v2771 = vadd.f32 0.0, %v2770
    %v2772 = vpop.f32.mrf.mxu0
    %v2773 = vpop.f32.mrf.mxu0
    %v2774 = vpop.f32.mrf.mxu0
    %2775 = vdwg.mxu0
    %v2776 = vadd.f32 %v1820, %v2771
    %v2777 = vtanh.pop %v2776
    %v2778 = vmul.f32 %v2777, %v133
    %v2779 = vadd.f32 %v2778, %v134
    %v2780 = vmul.f32 %v2779, %v2722
    %2782 = vrot.lane.b32.xlu0 %v2779, 64
    %v2783 = vpop.permute.xlu0 %2782
    %v2785 = vmul.f32 %v2779, %v2783
    %2787 = vrot.lane.b32.xlu0 %v2785, 32
    %v2788 = vpop.permute.xlu0 %2787
    %v2790 = vadd.f32 %v2780, %v2788
    %v2791 = vtanh.pop %v2790
    %2793 = vrot.lane.b32.xlu0 %v2791, 64
    %v2794 = vpop.permute.xlu0 %2793
    %v2796 = vmul.f32 %v2779, %v2794
    %v2797 = vpack.c.bf16 %v2796, %v2796
    %2799 = vrot.lane.b32.xlu0 %v2797, 32
    %v2800 = vpop.permute.xlu0 %2799
    %v2802 = vsel %vm351, %v2800, 0
    %2804 = vmatprep.subr.bf16.mxu0 0
    %2805 = vmatpush1.bf16.msra.mxu0 0
    %2806 = vmatprep.subr.bf16.mxu0 0
    %2807 = vmatpush1.bf16.msra.mxu0 0
    %2808 = vmatprep.subr.bf16.mxu0 0
    %2809 = vmatpush1.bf16.msra.mxu0 0
    %2810 = vmatprep.subr.bf16.mxu0 0
    %2811 = vmatpush1.bf16.msra.mxu0 0
    %2812 = vmatprep.subr.bf16.mxu0 0
    %2813 = vmatpush1.bf16.msra.mxu0 0
    %2814 = vmatprep.subr.bf16.mxu0 0
    %2815 = vmatpush1.bf16.msra.mxu0 0
    %2816 = vmatprep.subr.bf16.mxu0 0
    %2817 = vmatpush1.bf16.msra.mxu0 %v2393
    %2818 = vmatprep.subr.bf16.mxu0 0
    %2819 = vmatpush1.bf16.msra.mxu0 %v2392
    %2820 = vmatprep.subr.bf16.mxu0 0
    %2821 = vmatpush2.bf16.msra.mxu0 0
    %2822 = vmatprep.subr.bf16.mxu0 0
    %2823 = vmatpush2.bf16.msra.mxu0 0
    %2824 = vmatprep.subr.bf16.mxu0 0
    %2825 = vmatpush2.bf16.msra.mxu0 0
    %2826 = vmatprep.subr.bf16.mxu0 0
    %2827 = vmatpush2.bf16.msra.mxu0 0
    %2828 = vmatprep.subr.bf16.mxu0 0
    %2829 = vmatpush2.bf16.msra.mxu0 0
    %2830 = vmatprep.subr.bf16.mxu0 0
    %2831 = vmatpush2.bf16.msra.mxu0 0
    %2832 = vmatprep.subr.bf16.mxu0 0
    %2833 = vmatpush2.bf16.msra.mxu0 0
    %2834 = vmatprep.subr.bf16.mxu0 0
    %2835 = vmatpush2.bf16.msra.mxu0 0
    %2836 = vmatprep.mubr.bf16.mxu0 0
    %2837 = vmatmul.mubr.bf16.gmra.mxu0 %v2802
    %v2838 = vpop.f32.mrf.mxu0
    %v2839 = vadd.f32 0.0, %v2838
    %v2840 = vpop.f32.mrf.mxu0
    %v2841 = vpop.f32.mrf.mxu0
    %v2842 = vpop.f32.mrf.mxu0
    %2843 = vdwg.mxu0
    %v2844 = vadd.f32 %v1819, %v2839
    %v2845 = vtanh.pop %v2844
    %v2846 = vmul.f32 %v2845, %v133
    %v2847 = vadd.f32 %v2846, %v134
    %v2848 = vmul.f32 %v2847, %v2790
    %2850 = vrot.lane.b32.xlu0 %v2847, 64
    %v2851 = vpop.permute.xlu0 %2850
    %v2853 = vmul.f32 %v2847, %v2851
    %2855 = vrot.lane.b32.xlu0 %v2853, 32
    %v2856 = vpop.permute.xlu0 %2855
    %v2858 = vadd.f32 %v2848, %v2856
    %v2859 = vtanh.pop %v2858
    %2861 = vrot.lane.b32.xlu0 %v2859, 64
    %v2862 = vpop.permute.xlu0 %2861
    %v2864 = vmul.f32 %v2847, %v2862
    %v2865 = vpack.c.bf16 %v2864, %v2864
    %2867 = vrot.lane.b32.xlu0 %v2865, 32
    %v2868 = vpop.permute.xlu0 %2867
    %v2870 = vsel %vm351, %v2868, 0
    %2872 = vmatprep.subr.bf16.mxu0 0
    %2873 = vmatpush1.bf16.msra.mxu0 0
    %2874 = vmatprep.subr.bf16.mxu0 0
    %2875 = vmatpush1.bf16.msra.mxu0 0
    %2876 = vmatprep.subr.bf16.mxu0 0
    %2877 = vmatpush1.bf16.msra.mxu0 0
    %2878 = vmatprep.subr.bf16.mxu0 0
    %2879 = vmatpush1.bf16.msra.mxu0 0
    %2880 = vmatprep.subr.bf16.mxu0 0
    %2881 = vmatpush1.bf16.msra.mxu0 0
    %2882 = vmatprep.subr.bf16.mxu0 0
    %2883 = vmatpush1.bf16.msra.mxu0 0
    %2884 = vmatprep.subr.bf16.mxu0 0
    %2885 = vmatpush1.bf16.msra.mxu0 %v2393
    %2886 = vmatprep.subr.bf16.mxu0 0
    %2887 = vmatpush1.bf16.msra.mxu0 %v2392
    %2888 = vmatprep.subr.bf16.mxu0 0
    %2889 = vmatpush2.bf16.msra.mxu0 0
    %2890 = vmatprep.subr.bf16.mxu0 0
    %2891 = vmatpush2.bf16.msra.mxu0 0
    %2892 = vmatprep.subr.bf16.mxu0 0
    %2893 = vmatpush2.bf16.msra.mxu0 0
    %2894 = vmatprep.subr.bf16.mxu0 0
    %2895 = vmatpush2.bf16.msra.mxu0 0
    %2896 = vmatprep.subr.bf16.mxu0 0
    %2897 = vmatpush2.bf16.msra.mxu0 0
    %2898 = vmatprep.subr.bf16.mxu0 0
    %2899 = vmatpush2.bf16.msra.mxu0 0
    %2900 = vmatprep.subr.bf16.mxu0 0
    %2901 = vmatpush2.bf16.msra.mxu0 0
    %2902 = vmatprep.subr.bf16.mxu0 0
    %2903 = vmatpush2.bf16.msra.mxu0 0
    %2904 = vmatprep.mubr.bf16.mxu0 0
    %2905 = vmatmul.mubr.bf16.gmra.mxu0 %v2870
    %v2906 = vpop.f32.mrf.mxu0
    %v2907 = vadd.f32 0.0, %v2906
    %v2908 = vpop.f32.mrf.mxu0
    %v2909 = vpop.f32.mrf.mxu0
    %v2910 = vpop.f32.mrf.mxu0
    %2911 = vdwg.mxu0
    %v2912 = vadd.f32 %v1818, %v2907
    %v2913 = vtanh.pop %v2912
    %v2914 = vmul.f32 %v2913, %v133
    %v2915 = vadd.f32 %v2914, %v134
    %v2916 = vmul.f32 %v2915, %v2858
    %2918 = vrot.lane.b32.xlu0 %v2915, 64
    %v2919 = vpop.permute.xlu0 %2918
    %v2921 = vmul.f32 %v2915, %v2919
    %2923 = vrot.lane.b32.xlu0 %v2921, 32
    %v2924 = vpop.permute.xlu0 %2923
    %v2926 = vadd.f32 %v2916, %v2924
    %v2927 = vtanh.pop %v2926
    %2929 = vrot.lane.b32.xlu0 %v2927, 64
    %v2930 = vpop.permute.xlu0 %2929
    %v2932 = vmul.f32 %v2915, %v2930
    %v2933 = vld [vmem:[#allocation3] sm:$0xff]
    %2934 = vset.pattern.permute.xlu0 0
    %2935 = vperm.xlu0 %2934, %v2933
    %v2936 = vpop.permute.xlu0 %2935
    %vm2937 = vcmp.eq.s32.totalorder %v2936, %v129
    %v2938 = vsel %vm2937, 1, 0
    %v2939 = vld [vmem:[#allocation6] sm:$0xff]
    %2940 = vset.pattern.permute.xlu0 0
    %2941 = vperm.xlu0 %2940, %v2939
    %v2942 = vpop.permute.xlu0 %2941
    %vm2943 = vcmp.eq.s32.totalorder %v2942, %v129
    %v2944 = vsel %vm2943, 1, 0
    %2945 = vset.pattern.permute.xlu0 1
    %2946 = vperm.xlu0 %2945, %v2933
    %v2947 = vpop.permute.xlu0 %2946
    %vm2948 = vcmp.eq.s32.totalorder %v2947, %v129
    %v2949 = vsel %vm2948, 1, 0
    %v2950 = vadd.s32 %v2938, %v2949
    %2951 = vset.pattern.permute.xlu0 1
    %2952 = vperm.xlu0 %2951, %v2939
    %v2953 = vpop.permute.xlu0 %2952
    %vm2954 = vcmp.eq.s32.totalorder %v2953, %v129
    %v2955 = vsel %vm2954, 1, 0
    %v2956 = vadd.s32 %v2944, %v2955
    %2957 = vset.pattern.permute.xlu0 2
    %2958 = vperm.xlu0 %2957, %v2933
    %v2959 = vpop.permute.xlu0 %2958
    %vm2960 = vcmp.eq.s32.totalorder %v2959, %v129
    %v2961 = vsel %vm2960, 1, 0
    %v2962 = vadd.s32 %v2950, %v2961
    %2963 = vset.pattern.permute.xlu0 2
    %2964 = vperm.xlu0 %2963, %v2939
    %v2965 = vpop.permute.xlu0 %2964
    %vm2966 = vcmp.eq.s32.totalorder %v2965, %v129
    %v2967 = vsel %vm2966, 1, 0
    %v2968 = vadd.s32 %v2956, %v2967
    %2969 = vset.pattern.permute.xlu0 3
    %2970 = vperm.xlu0 %2969, %v2933
    %v2971 = vpop.permute.xlu0 %2970
    %vm2972 = vcmp.eq.s32.totalorder %v2971, %v129
    %v2973 = vsel %vm2972, 1, 0
    %v2974 = vadd.s32 %v2962, %v2973
    %2975 = vset.pattern.permute.xlu0 3
    %2976 = vperm.xlu0 %2975, %v2939
    %v2977 = vpop.permute.xlu0 %2976
    %vm2978 = vcmp.eq.s32.totalorder %v2977, %v129
    %v2979 = vsel %vm2978, 1, 0
    %v2980 = vadd.s32 %v2968, %v2979
    %2981 = vset.pattern.permute.xlu0 4
    %2982 = vperm.xlu0 %2981, %v2933
    %v2983 = vpop.permute.xlu0 %2982
    %vm2984 = vcmp.eq.s32.totalorder %v2983, %v129
    %v2985 = vsel %vm2984, 1, 0
    %v2986 = vadd.s32 %v2974, %v2985
    %2987 = vset.pattern.permute.xlu0 4
    %2988 = vperm.xlu0 %2987, %v2939
    %v2989 = vpop.permute.xlu0 %2988
    %vm2990 = vcmp.eq.s32.totalorder %v2989, %v129
    %v2991 = vsel %vm2990, 1, 0
    %v2992 = vadd.s32 %v2980, %v2991
    %2993 = vset.pattern.permute.xlu0 5
    %2994 = vperm.xlu0 %2993, %v2933
    %v2995 = vpop.permute.xlu0 %2994
    %vm2996 = vcmp.eq.s32.totalorder %v2995, %v129
    %v2997 = vsel %vm2996, 1, 0
    %v2998 = vadd.s32 %v2986, %v2997
    %2999 = vset.pattern.permute.xlu0 5
    %3000 = vperm.xlu0 %2999, %v2939
    %v3001 = vpop.permute.xlu0 %3000
    %vm3002 = vcmp.eq.s32.totalorder %v3001, %v129
    %v3003 = vsel %vm3002, 1, 0
    %v3004 = vadd.s32 %v2992, %v3003
    %3005 = vset.pattern.permute.xlu0 6
    %3006 = vperm.xlu0 %3005, %v2933
    %v3007 = vpop.permute.xlu0 %3006
    %vm3008 = vcmp.eq.s32.totalorder %v3007, %v129
    %v3009 = vsel %vm3008, 1, 0
    %v3010 = vadd.s32 %v2998, %v3009
    %3011 = vset.pattern.permute.xlu0 6
    %3012 = vperm.xlu0 %3011, %v2939
    %v3013 = vpop.permute.xlu0 %3012
    %vm3014 = vcmp.eq.s32.totalorder %v3013, %v129
    %v3015 = vsel %vm3014, 1, 0
    %v3016 = vadd.s32 %v3004, %v3015
    %3017 = vset.pattern.permute.xlu0 7
    %3018 = vperm.xlu0 %3017, %v2933
    %v3019 = vpop.permute.xlu0 %3018
    %vm3020 = vcmp.eq.s32.totalorder %v3019, %v129
    %v3021 = vsel %vm3020, 1, 0
    %v3022 = vadd.s32 %v3010, %v3021
    %3023 = vset.pattern.permute.xlu0 7
    %3024 = vperm.xlu0 %3023, %v2939
    %v3025 = vpop.permute.xlu0 %3024
    %vm3026 = vcmp.eq.s32.totalorder %v3025, %v129
    %v3027 = vsel %vm3026, 1, 0
    %v3028 = vadd.s32 %v3016, %v3027
    %v3029 = vcvt.s32.f32 %v3022
    %v3030 = vld [vmem:[#allocation9] sm:$0xff]
    %v3031 = vld [vmem:[#allocation9 + $0x8] sm:$0xff]
    %v3032 = vld [vmem:[#allocation9 + $0x10] sm:$0xf]
    %vm3033 = vcmask 162816
    %v3035 = vsel %vm3033, %v3029, 0
    %vm3037 = vcmask 1043456
    %v3039 = vsel %vm3037, %v3032, 0
    %3041 = vmatprep.subr.mxu0 0.0
    %3042 = vmatpush1.msra.mxu0 0.0
    %3043 = vmatprep.subr.mxu0 0.0
    %3044 = vmatpush1.msra.mxu0 0.0
    %3045 = vmatprep.subr.mxu0 0.0
    %3046 = vmatpush1.msra.mxu0 0.0
    %3047 = vmatprep.subr.mxu0 0.0
    %3048 = vmatpush1.msra.mxu0 0.0
    %3049 = vmatprep.subr.mxu0 0.0
    %3050 = vmatpush1.msra.mxu0 0.0
    %3051 = vmatprep.subr.mxu0 0.0
    %3052 = vmatpush1.msra.mxu0 0.0
    %3053 = vmatprep.subr.mxu0 0.0
    %3054 = vmatpush1.msra.mxu0 0.0
    %3055 = vmatprep.subr.mxu0 0.0
    %3056 = vmatpush1.msra.mxu0 0.0
    %3057 = vmatprep.subr.mxu0 0.0
    %3058 = vmatpush1.msra.mxu0 0.0
    %3059 = vmatprep.subr.mxu0 0.0
    %3060 = vmatpush1.msra.mxu0 0.0
    %3061 = vmatprep.subr.mxu0 0.0
    %3062 = vmatpush1.msra.mxu0 0.0
    %3063 = vmatprep.subr.mxu0 0.0
    %3064 = vmatpush1.msra.mxu0 0.0
    %3065 = vmatprep.subr.mxu0 0.0
    %3066 = vmatpush1.msra.mxu0 0.0
    %3067 = vmatprep.subr.mxu0 0.0
    %3068 = vmatpush1.msra.mxu0 %v3039
    %3069 = vmatprep.subr.mxu0 0.0
    %3070 = vmatpush1.msra.mxu0 %v3031
    %3071 = vmatprep.subr.mxu0 0.0
    %3072 = vmatpush1.msra.mxu0 %v3030
    %3073 = vmatprep.subr.mxu0 0.0
    %3074 = vmatpush2.msra.mxu0 0.0
    %3075 = vmatprep.subr.mxu0 0.0
    %3076 = vmatpush2.msra.mxu0 0.0
    %3077 = vmatprep.subr.mxu0 0.0
    %3078 = vmatpush2.msra.mxu0 0.0
    %3079 = vmatprep.subr.mxu0 0.0
    %3080 = vmatpush2.msra.mxu0 0.0
    %3081 = vmatprep.subr.mxu0 0.0
    %3082 = vmatpush2.msra.mxu0 0.0
    %3083 = vmatprep.subr.mxu0 0.0
    %3084 = vmatpush2.msra.mxu0 0.0
    %3085 = vmatprep.subr.mxu0 0.0
    %3086 = vmatpush2.msra.mxu0 0.0
    %3087 = vmatprep.subr.mxu0 0.0
    %3088 = vmatpush2.msra.mxu0 0.0
    %3089 = vmatprep.subr.mxu0 0.0
    %3090 = vmatpush2.msra.mxu0 0.0
    %3091 = vmatprep.subr.mxu0 0.0
    %3092 = vmatpush2.msra.mxu0 0.0
    %3093 = vmatprep.subr.mxu0 0.0
    %3094 = vmatpush2.msra.mxu0 0.0
    %3095 = vmatprep.subr.mxu0 0.0
    %3096 = vmatpush2.msra.mxu0 0.0
    %3097 = vmatprep.subr.mxu0 0.0
    %3098 = vmatpush2.msra.mxu0 0.0
    %3099 = vmatprep.subr.mxu0 0.0
    %3100 = vmatpush2.msra.mxu0 0.0
    %3101 = vmatprep.subr.mxu0 0.0
    %3102 = vmatpush2.msra.mxu0 0.0
    %3103 = vmatprep.subr.mxu0 0.0
    %3104 = vmatpush2.msra.mxu0 0.0
    %3105 = vmatprep.mubr.f32.mxu0 0.0
    %3106 = vmatmul.mubr.f32.gmra.mxu0 %v3035
    %v3107 = vpop.f32.mrf.mxu0
    %v3108 = vadd.f32 0.0, %v3107
    %v3109 = vpop.f32.mrf.mxu0
    %3110 = vdwg.mxu0
    %v3111 = vcvt.s32.f32 %v3028
    %v3113 = vsel %vm3033, %v3111, 0
    %3115 = vmatprep.subr.mxu0 0.0
    %3116 = vmatpush1.msra.mxu0 0.0
    %3117 = vmatprep.subr.mxu0 0.0
    %3118 = vmatpush1.msra.mxu0 0.0
    %3119 = vmatprep.subr.mxu0 0.0
    %3120 = vmatpush1.msra.mxu0 0.0
    %3121 = vmatprep.subr.mxu0 0.0
    %3122 = vmatpush1.msra.mxu0 0.0
    %3123 = vmatprep.subr.mxu0 0.0
    %3124 = vmatpush1.msra.mxu0 0.0
    %3125 = vmatprep.subr.mxu0 0.0
    %3126 = vmatpush1.msra.mxu0 0.0
    %3127 = vmatprep.subr.mxu0 0.0
    %3128 = vmatpush1.msra.mxu0 0.0
    %3129 = vmatprep.subr.mxu0 0.0
    %3130 = vmatpush1.msra.mxu0 0.0
    %3131 = vmatprep.subr.mxu0 0.0
    %3132 = vmatpush1.msra.mxu0 0.0
    %3133 = vmatprep.subr.mxu0 0.0
    %3134 = vmatpush1.msra.mxu0 0.0
    %3135 = vmatprep.subr.mxu0 0.0
    %3136 = vmatpush1.msra.mxu0 0.0
    %3137 = vmatprep.subr.mxu0 0.0
    %3138 = vmatpush1.msra.mxu0 0.0
    %3139 = vmatprep.subr.mxu0 0.0
    %3140 = vmatpush1.msra.mxu0 0.0
    %3141 = vmatprep.subr.mxu0 0.0
    %3142 = vmatpush1.msra.mxu0 %v3039
    %3143 = vmatprep.subr.mxu0 0.0
    %3144 = vmatpush1.msra.mxu0 %v3031
    %3145 = vmatprep.subr.mxu0 0.0
    %3146 = vmatpush1.msra.mxu0 %v3030
    %3147 = vmatprep.subr.mxu0 0.0
    %3148 = vmatpush2.msra.mxu0 0.0
    %3149 = vmatprep.subr.mxu0 0.0
    %3150 = vmatpush2.msra.mxu0 0.0
    %3151 = vmatprep.subr.mxu0 0.0
    %3152 = vmatpush2.msra.mxu0 0.0
    %3153 = vmatprep.subr.mxu0 0.0
    %3154 = vmatpush2.msra.mxu0 0.0
    %3155 = vmatprep.subr.mxu0 0.0
    %3156 = vmatpush2.msra.mxu0 0.0
    %3157 = vmatprep.subr.mxu0 0.0
    %3158 = vmatpush2.msra.mxu0 0.0
    %3159 = vmatprep.subr.mxu0 0.0
    %3160 = vmatpush2.msra.mxu0 0.0
    %3161 = vmatprep.subr.mxu0 0.0
    %3162 = vmatpush2.msra.mxu0 0.0
    %3163 = vmatprep.subr.mxu0 0.0
    %3164 = vmatpush2.msra.mxu0 0.0
    %3165 = vmatprep.subr.mxu0 0.0
    %3166 = vmatpush2.msra.mxu0 0.0
    %3167 = vmatprep.subr.mxu0 0.0
    %3168 = vmatpush2.msra.mxu0 0.0
    %3169 = vmatprep.subr.mxu0 0.0
    %3170 = vmatpush2.msra.mxu0 0.0
    %3171 = vmatprep.subr.mxu0 0.0
    %3172 = vmatpush2.msra.mxu0 0.0
    %3173 = vmatprep.subr.mxu0 0.0
    %3174 = vmatpush2.msra.mxu0 0.0
    %3175 = vmatprep.subr.mxu0 0.0
    %3176 = vmatpush2.msra.mxu0 0.0
    %3177 = vmatprep.subr.mxu0 0.0
    %3178 = vmatpush2.msra.mxu0 0.0
    %3179 = vmatprep.mubr.f32.mxu0 0.0
    %3180 = vmatmul.mubr.f32.gmra.mxu0 %v3113
    %v3181 = vpop.f32.mrf.mxu0
    %v3182 = vadd.f32 0.0, %v3181
    %v3183 = vpop.f32.mrf.mxu0
    %3184 = vdwg.mxu0
    %3186 = vrot.lane.b32.xlu0 %v2378, 32
    %v3187 = vpop.permute.xlu0 %3186
    %3190 = vrot.lane.b32.xlu0 %v2932, 64
    %v3191 = vpop.permute.xlu0 %3190
    %3194 = vrot.lane.b32.xlu0 %v3108, 64
    %v3195 = vpop.permute.xlu0 %3194
    %3198 = vrot.lane.b32.xlu0 %v3182, 96
    %v3199 = vpop.permute.xlu0 %3198
    %v3201 = vsel %vm351, %v3187, %v3191
    %v3202 = vsel %vm1714, %v3201, %v3195
    %vm3203 = vcmask 785408
    %v3204 = vsel %vm3203, %v3202, %v3199
    %v3205 = vpack.c.bf16 %v3204, %v3204
    %v3206 = vld [vmem:[%s12] sm:$0xf]
    %v3207 = vld [vmem:[%s12 + $0x4] sm:$0xf]
    %v3208 = vld [vmem:[%s12 + $0x8] sm:$0xf]
    %v3209 = vld [vmem:[%s12 + $0xc] sm:$0xf]
    %v3210 = vld [vmem:[%s12 + $0x10] sm:$0xf]
    %v3211 = vld [vmem:[%s12 + $0x14] sm:$0xf]
    %v3212 = vld [vmem:[%s12 + $0x18] sm:$0xf]
    %v3213 = vld [vmem:[%s12 + $0x1c] sm:$0xf]
    %v3214 = vld [vmem:[%s12 + $0x20] sm:$0xf]
    %v3215 = vld [vmem:[%s12 + $0x24] sm:$0xf]
    %v3216 = vld [vmem:[%s12 + $0x28] sm:$0xf]
    %v3217 = vld [vmem:[%s12 + $0x2c] sm:$0xf]
    %v3218 = vld [vmem:[%s12 + $0x30] sm:$0xf]
    %v3219 = vld [vmem:[%s12 + $0x34] sm:$0xf]
    %v3220 = vld [vmem:[%s12 + $0x38] sm:$0xf]
    %v3221 = vld [vmem:[%s12 + $0x3c] sm:$0xf]
    %v3222 = vld [vmem:[%s13] sm:$0x1]
    %v3224 = vlaneseq
    %v3225 = vshrl.u32 %v3224, 7
    %v3226 = vsub.s32 0, %v3225
    %v3227 = vrot.slane %v3222, %v3226
    %v3245 = vunpack.c.l.b16 %v3206
    %v3246 = vunpack.c.l.b16 %v3207
    %v3247 = vunpack.c.l.b16 %v3208
    %v3248 = vunpack.c.l.b16 %v3209
    %v3249 = vunpack.c.l.b16 %v3210
    %v3250 = vunpack.c.l.b16 %v3211
    %v3251 = vunpack.c.l.b16 %v3212
    %v3252 = vunpack.c.l.b16 %v3213
    %v3253 = vunpack.c.l.b16 %v3214
    %v3254 = vunpack.c.l.b16 %v3215
    %v3255 = vunpack.c.l.b16 %v3216
    %v3256 = vunpack.c.l.b16 %v3217
    %v3257 = vunpack.c.l.b16 %v3218
    %v3258 = vunpack.c.l.b16 %v3219
    %v3259 = vunpack.c.l.b16 %v3220
    %v3260 = vunpack.c.l.b16 %v3221
    %v3261 = vpack.c.b16 %v3246, %v3245
    %v3262 = vpack.c.b16 %v3248, %v3247
    %v3263 = vpack.c.b16 %v3250, %v3249
    %v3264 = vpack.c.b16 %v3252, %v3251
    %v3265 = vpack.c.b16 %v3254, %v3253
    %v3266 = vpack.c.b16 %v3256, %v3255
    %v3267 = vpack.c.b16 %v3258, %v3257
    %v3268 = vpack.c.b16 %v3260, %v3259
    %3277 = vmatprep.subr.bf16.mxu0 0
    %3278 = vmatpush1.bf16.msra.mxu0 %v3268
    %3279 = vmatprep.subr.bf16.mxu0 0
    %3280 = vmatpush1.bf16.msra.mxu0 %v3267
    %3281 = vmatprep.subr.bf16.mxu0 0
    %3282 = vmatpush1.bf16.msra.mxu0 %v3266
    %3283 = vmatprep.subr.bf16.mxu0 0
    %3284 = vmatpush1.bf16.msra.mxu0 %v3265
    %3285 = vmatprep.subr.bf16.mxu0 0
    %3286 = vmatpush1.bf16.msra.mxu0 %v3264
    %3287 = vmatprep.subr.bf16.mxu0 0
    %3288 = vmatpush1.bf16.msra.mxu0 %v3263
    %3289 = vmatprep.subr.bf16.mxu0 0
    %3290 = vmatpush1.bf16.msra.mxu0 %v3262
    %3291 = vmatprep.subr.bf16.mxu0 0
    %3292 = vmatpush1.bf16.msra.mxu0 %v3261
    %3293 = vmatprep.subr.bf16.mxu0 0
    %3294 = vmatpush2.bf16.msra.mxu0 0
    %3295 = vmatprep.subr.bf16.mxu0 0
    %3296 = vmatpush2.bf16.msra.mxu0 0
    %3297 = vmatprep.subr.bf16.mxu0 0
    %3298 = vmatpush2.bf16.msra.mxu0 0
    %3299 = vmatprep.subr.bf16.mxu0 0
    %3300 = vmatpush2.bf16.msra.mxu0 0
    %3301 = vmatprep.subr.bf16.mxu0 0
    %3302 = vmatpush2.bf16.msra.mxu0 0
    %3303 = vmatprep.subr.bf16.mxu0 0
    %3304 = vmatpush2.bf16.msra.mxu0 0
    %3305 = vmatprep.subr.bf16.mxu0 0
    %3306 = vmatpush2.bf16.msra.mxu0 0
    %3307 = vmatprep.subr.bf16.mxu0 0
    %3308 = vmatpush2.bf16.msra.mxu0 0
    %3309 = vmatprep.mubr.bf16.mxu0 0
    %3310 = vmatmul.mubr.bf16.gmra.mxu0 %v3205
    %v3311 = vpop.f32.mrf.mxu0
    %v3312 = vadd.f32 %v3227, %v3311
    %v3313 = vpop.f32.mrf.mxu0
    %v3314 = vpop.f32.mrf.mxu0
    %v3315 = vpop.f32.mrf.mxu0
    %3316 = vdwg.mxu0
    %v3317 = vlaneseq
    %v3318 = vshrl.u32 %v3317, 7
    %v3319 = vld [vmem:[#allocation8] sm:$0x1]
    %v3320 = vlaneseq
    %v3321 = vshrl.u32 %v3320, 7
    %v3322 = vsub.s32 0, %v3321
    %v3323 = vrot.slane %v3319, %v3322
    %vm3324 = vcmp.eq.s32.totalorder %v3323, %v3318
    %v3325 = vsel %vm3324, 1, 0
    %v3326 = vcvt.s32.f32 %v3325
    %vm3327 = vcmask 64512
    %v3329 = vsel %vm3327, %v3326, 0
    %3331 = vmatprep.subr.mxu0 0.0
    %3332 = vmatpush1.msra.mxu0 0.0
    %3333 = vmatprep.subr.mxu0 0.0
    %3334 = vmatpush1.msra.mxu0 0.0
    %3335 = vmatprep.subr.mxu0 0.0
    %3336 = vmatpush1.msra.mxu0 0.0
    %3337 = vmatprep.subr.mxu0 0.0
    %3338 = vmatpush1.msra.mxu0 0.0
    %3339 = vmatprep.subr.mxu0 0.0
    %3340 = vmatpush1.msra.mxu0 0.0
    %3341 = vmatprep.subr.mxu0 0.0
    %3342 = vmatpush1.msra.mxu0 0.0
    %3343 = vmatprep.subr.mxu0 0.0
    %3344 = vmatpush1.msra.mxu0 0.0
    %3345 = vmatprep.subr.mxu0 0.0
    %3346 = vmatpush1.msra.mxu0 0.0
    %3347 = vmatprep.subr.mxu0 0.0
    %3348 = vmatpush1.msra.mxu0 0.0
    %3349 = vmatprep.subr.mxu0 0.0
    %3350 = vmatpush1.msra.mxu0 0.0
    %3351 = vmatprep.subr.mxu0 0.0
    %3352 = vmatpush1.msra.mxu0 0.0
    %3353 = vmatprep.subr.mxu0 0.0
    %3354 = vmatpush1.msra.mxu0 0.0
    %3355 = vmatprep.subr.mxu0 0.0
    %3356 = vmatpush1.msra.mxu0 0.0
    %3357 = vmatprep.subr.mxu0 0.0
    %3358 = vmatpush1.msra.mxu0 0.0
    %3359 = vmatprep.subr.mxu0 0.0
    %3360 = vmatpush1.msra.mxu0 0.0
    %3361 = vmatprep.subr.mxu0 0.0
    %3362 = vmatpush1.msra.mxu0 %v3312
    %3363 = vmatprep.subr.mxu0 0.0
    %3364 = vmatpush2.msra.mxu0 0.0
    %3365 = vmatprep.subr.mxu0 0.0
    %3366 = vmatpush2.msra.mxu0 0.0
    %3367 = vmatprep.subr.mxu0 0.0
    %3368 = vmatpush2.msra.mxu0 0.0
    %3369 = vmatprep.subr.mxu0 0.0
    %3370 = vmatpush2.msra.mxu0 0.0
    %3371 = vmatprep.subr.mxu0 0.0
    %3372 = vmatpush2.msra.mxu0 0.0
    %3373 = vmatprep.subr.mxu0 0.0
    %3374 = vmatpush2.msra.mxu0 0.0
    %3375 = vmatprep.subr.mxu0 0.0
    %3376 = vmatpush2.msra.mxu0 0.0
    %3377 = vmatprep.subr.mxu0 0.0
    %3378 = vmatpush2.msra.mxu0 0.0
    %3379 = vmatprep.subr.mxu0 0.0
    %3380 = vmatpush2.msra.mxu0 0.0
    %3381 = vmatprep.subr.mxu0 0.0
    %3382 = vmatpush2.msra.mxu0 0.0
    %3383 = vmatprep.subr.mxu0 0.0
    %3384 = vmatpush2.msra.mxu0 0.0
    %3385 = vmatprep.subr.mxu0 0.0
    %3386 = vmatpush2.msra.mxu0 0.0
    %3387 = vmatprep.subr.mxu0 0.0
    %3388 = vmatpush2.msra.mxu0 0.0
    %3389 = vmatprep.subr.mxu0 0.0
    %3390 = vmatpush2.msra.mxu0 0.0
    %3391 = vmatprep.subr.mxu0 0.0
    %3392 = vmatpush2.msra.mxu0 0.0
    %3393 = vmatprep.subr.mxu0 0.0
    %3394 = vmatpush2.msra.mxu0 0.0
    %3395 = vmatprep.mubr.f32.mxu0 0.0
    %3396 = vmatmul.mubr.f32.gmra.mxu0 %v3329
    %v3397 = vpop.f32.mrf.mxu0
    %v3398 = vadd.f32 0.0, %v3397
    %v3399 = vpop.f32.mrf.mxu0
    %3400 = vdwg.mxu0
    %3401 = vst.msk [vmem:[#allocation14] sm:$0xff] %vm1714, %v3398
    %v3402 = vld [vmem:[%s4] sm:$0x3]
    %v3404 = vsel %vm3327, %v3402, 0
    %3406 = vmatprep.subr.mxu0 0.0
    %3407 = vmatpush1.msra.mxu0 0.0
    %3408 = vmatprep.subr.mxu0 0.0
    %3409 = vmatpush1.msra.mxu0 0.0
    %3410 = vmatprep.subr.mxu0 0.0
    %3411 = vmatpush1.msra.mxu0 0.0
    %3412 = vmatprep.subr.mxu0 0.0
    %3413 = vmatpush1.msra.mxu0 0.0
    %3414 = vmatprep.subr.mxu0 0.0
    %3415 = vmatpush1.msra.mxu0 0.0
    %3416 = vmatprep.subr.mxu0 0.0
    %3417 = vmatpush1.msra.mxu0 0.0
    %3418 = vmatprep.subr.mxu0 0.0
    %3419 = vmatpush1.msra.mxu0 0.0
    %3420 = vmatprep.subr.mxu0 0.0
    %3421 = vmatpush1.msra.mxu0 0.0
    %3422 = vmatprep.subr.mxu0 0.0
    %3423 = vmatpush1.msra.mxu0 0.0
    %3424 = vmatprep.subr.mxu0 0.0
    %3425 = vmatpush1.msra.mxu0 0.0
    %3426 = vmatprep.subr.mxu0 0.0
    %3427 = vmatpush1.msra.mxu0 0.0
    %3428 = vmatprep.subr.mxu0 0.0
    %3429 = vmatpush1.msra.mxu0 0.0
    %3430 = vmatprep.subr.mxu0 0.0
    %3431 = vmatpush1.msra.mxu0 0.0
    %3432 = vmatprep.subr.mxu0 0.0
    %3433 = vmatpush1.msra.mxu0 0.0
    %3434 = vmatprep.subr.mxu0 0.0
    %3435 = vmatpush1.msra.mxu0 0.0
    %3436 = vmatprep.subr.mxu0 0.0
    %3437 = vmatpush1.msra.mxu0 %v3398
    %3438 = vmatprep.subr.mxu0 0.0
    %3439 = vmatpush2.msra.mxu0 0.0
    %3440 = vmatprep.subr.mxu0 0.0
    %3441 = vmatpush2.msra.mxu0 0.0
    %3442 = vmatprep.subr.mxu0 0.0
    %3443 = vmatpush2.msra.mxu0 0.0
    %3444 = vmatprep.subr.mxu0 0.0
    %3445 = vmatpush2.msra.mxu0 0.0
    %3446 = vmatprep.subr.mxu0 0.0
    %3447 = vmatpush2.msra.mxu0 0.0
    %3448 = vmatprep.subr.mxu0 0.0
    %3449 = vmatpush2.msra.mxu0 0.0
    %3450 = vmatprep.subr.mxu0 0.0
    %3451 = vmatpush2.msra.mxu0 0.0
    %3452 = vmatprep.subr.mxu0 0.0
    %3453 = vmatpush2.msra.mxu0 0.0
    %3454 = vmatprep.subr.mxu0 0.0
    %3455 = vmatpush2.msra.mxu0 0.0
    %3456 = vmatprep.subr.mxu0 0.0
    %3457 = vmatpush2.msra.mxu0 0.0
    %3458 = vmatprep.subr.mxu0 0.0
    %3459 = vmatpush2.msra.mxu0 0.0
    %3460 = vmatprep.subr.mxu0 0.0
    %3461 = vmatpush2.msra.mxu0 0.0
    %3462 = vmatprep.subr.mxu0 0.0
    %3463 = vmatpush2.msra.mxu0 0.0
    %3464 = vmatprep.subr.mxu0 0.0
    %3465 = vmatpush2.msra.mxu0 0.0
    %3466 = vmatprep.subr.mxu0 0.0
    %3467 = vmatpush2.msra.mxu0 0.0
    %3468 = vmatprep.subr.mxu0 0.0
    %3469 = vmatpush2.msra.mxu0 0.0
    %3470 = vmatprep.mubr.f32.mxu0 0.0
    %3471 = vmatmul.mubr.f32.gmra.mxu0 %v3404
    %v3472 = vpop.f32.mrf.mxu0
    %v3473 = vadd.f32 0.0, %v3472
    %v3474 = vpop.f32.mrf.mxu0
    %3475 = vdwg.mxu0
    %vm3476 = vcmask 517120
    %3477 = vst.msk [vmem:[#allocation15] sm:$0x3] %vm3476, %v3473
    // Predicated region
    $region82: #{tpu_custom_call.1} parent=1 // pred_check
      _
    $region83: #{tpu_custom_call.1} parent=1 // pred_check_branch
      %3479 = sbr.rel (0) target = $region85
    $region84: #{tpu_custom_call.1} parent=1 // pred_region
      %s3481 = ssub.s32 128, 128
      %3482 = vsyncadd [#allocation5], %s3481
      %s3484 = sshll.u32 [#allocation14], 4
      %s3485 = int_to_ptr.vmem [resolvable:$true] %s3484
      %3487 = dma.vmem_to_hbm [thread:$0]  %s3485, 128, %s14, [#allocation5]
    $region85: #{tpu_custom_call.1} parent=1 // pred_fallthru
      _
    // Predicated region
    $region86: #{tpu_custom_call.1} parent=1 // pred_check
      _
    $region87: #{tpu_custom_call.1} parent=1 // pred_check_branch
      %3489 = sbr.rel (0) target = $region89
    $region88: #{tpu_custom_call.1} parent=1 // pred_region
      %s3491 = ssub.s32 32, 32
      %3492 = vsyncadd [#allocation16], %s3491
      %s3494 = sshll.u32 [#allocation15], 4
      %s3495 = int_to_ptr.vmem [resolvable:$true] %s3494
      %3497 = dma.vmem_to_hbm [thread:$0]  %s3495, 32, %s15, [#allocation16]
    $region89: #{tpu_custom_call.1} parent=1 // pred_fallthru
      _
    // Predicated region
    $region90: #{tpu_custom_call.1} parent=1 // pred_check
      _
    $region91: #{tpu_custom_call.1} parent=1 // pred_check_branch
      %3499 = sbr.rel (0) target = $region93
    $region92: #{tpu_custom_call.1} parent=1 // pred_region
      %3500 = dma.done [#allocation5], 128
    $region93: #{tpu_custom_call.1} parent=1 // pred_fallthru
      _
    // Predicated region
    $region94: #{tpu_custom_call.1} parent=1 // pred_check
      _
    $region95: #{tpu_custom_call.1} parent=1 // pred_check_branch
      %3502 = sbr.rel (0) target = $region97
    $region96: #{tpu_custom_call.1} parent=1 // pred_region
      %3503 = dma.done [#allocation16], 32
    $region97: #{tpu_custom_call.1} parent=1 // pred_fallthru
      _
    %3504 = vsyncpa [#allocation4], 1
    %3505 = vsyncpa [#allocation7], 1
    %3506 = vsyncpa [#allocation10], 1
    %3507 = vsyncpa [#allocation13], 1
    %3508 = vsyncpa [#allocation5], 1
    %3509 = vsyncpa [#allocation16], 1

</llo_original>
